<compile_context>
chip_gen: v7x
topology: tpu7x:2x2x1
jax: 0.10.0
libtpu: 0.0.40
codegen_flags: <defaults>
</compile_context>

<pallas_src>
import math
import functools

import jax
import jax.numpy as jnp
from jax import lax
from jax.experimental import pallas as pl
from jax.experimental.pallas import tpu as pltpu


def _round_up(a, m):
    return ((a + m - 1) // m) * m


# ---------------------------------------------------------------------------
# Fused (fwd + bwd) LSTM layer kernel
# ---------------------------------------------------------------------------
def _bidir_lstm_layer_kernel(gxf_ref, gxb_ref, whhf_ref, whhb_ref,
                             hf_out_ref, hb_out_ref, cf_last_ref, cb_last_ref,
                             hf_scr, cf_scr, hb_scr, cb_scr,
                             *, hidden_size, chunk, seq_len, unroll,
                             matmul_dtype):
    """One grid step == one chunk of `chunk` time steps for BOTH directions.

    Forward processes chronological times [c*T, (c+1)*T) in order; backward
    processes chronological times [S_pad-(c+1)*T, S_pad-c*T) in reverse order.
    h/c states live in VMEM scratch and carry across grid steps (h in
    matmul_dtype so the MXU feed needs no per-step convert; c in f32).  The
    input projections (x @ w_ih.T) are precomputed outside, so each recurrent
    step is one small (B,H)x(H,4H) MXU matmul per direction + gate math.
    """
    H = hidden_size
    T = chunk
    c_idx = pl.program_id(0)
    n_chunks = pl.num_programs(0)

    @pl.when(c_idx == 0)
    def _():
        # init_hidden(): zero-initialized hidden states for both directions.
        hf_scr[...] = jnp.zeros_like(hf_scr)
        cf_scr[...] = jnp.zeros_like(cf_scr)
        hb_scr[...] = jnp.zeros_like(hb_scr)
        cb_scr[...] = jnp.zeros_like(cb_scr)

    whh_f = whhf_ref[...]                                # (H, 4H), VMEM-resident
    whh_b = whhb_ref[...]

    def gate_math(gates, c_prev):
        # torch LSTMCell gate order: i, f, g, o  (f32 elementwise — v5e safe)
        i_g = jax.nn.sigmoid(gates[:, 0 * H:1 * H])
        f_g = jax.nn.sigmoid(gates[:, 1 * H:2 * H])
        g_g = jnp.tanh(gates[:, 2 * H:3 * H])
        o_g = jax.nn.sigmoid(gates[:, 3 * H:4 * H])
        c_new = f_g * c_prev + i_g * g_g
        h_new = o_g * jnp.tanh(c_new)
        return h_new, c_new

    def body(s, carry):
        # gates = (x @ w_ih.T) [precomputed, bf16 stream] + h @ w_hh.T
        gates_f = gxf_ref[s].astype(jnp.float32) + jnp.dot(
            hf_scr[...], whh_f, preferred_element_type=jnp.float32)
        gates_b = gxb_ref[T - 1 - s].astype(jnp.float32) + jnp.dot(
            hb_scr[...], whh_b, preferred_element_type=jnp.float32)

        hf_new, cf_new = gate_math(gates_f, cf_scr[...])
        hb_new, cb_new = gate_math(gates_b, cb_scr[...])

        hf_scr[...] = hf_new.astype(matmul_dtype)
        cf_scr[...] = cf_new
        hb_scr[...] = hb_new.astype(matmul_dtype)
        cb_scr[...] = cb_new

        # h sequences are emitted in CHRONOLOGICAL order for both directions.
        hf_out_ref[s] = hf_new.astype(hf_out_ref.dtype)
        hb_out_ref[T - 1 - s] = hb_new.astype(hb_out_ref.dtype)

        # apex semantics: both "final" cell states correspond to chrono step
        # S-1 (forward: its last real step; backward: its first real step).
        # Capture them at exactly that step — robust to time-axis padding.
        fwd_chrono = c_idx * T + s
        bwd_chrono = (n_chunks - 1 - c_idx) * T + (T - 1 - s)

        @pl.when(fwd_chrono == seq_len - 1)
        def _():
            cf_last_ref[...] = cf_new.astype(cf_last_ref.dtype)

        @pl.when(bwd_chrono == seq_len - 1)
        def _():
            cb_last_ref[...] = cb_new.astype(cb_last_ref.dtype)

        return carry

    lax.fori_loop(0, T, body, 0, unroll=unroll)


# ---------------------------------------------------------------------------
# VMEM-budget-aware time-chunk selection
# ---------------------------------------------------------------------------
def _vmem_capacity_bytes():
    try:
        return int(pltpu.get_tpu_info().vmem_capacity_bytes)
    except Exception:
        return 64 << 20          # conservative fallback (v7x per-core VMEM)


def _pick_time_chunk(seq_len, batch, hidden, gx_bytes, out_bytes, w_bytes,
                     budget):
    """Largest T such that the pipelined working set fits in `budget` bytes."""
    G = 4 * hidden
    # Streamed per-step blocks: 2 dirs x 2 pipeline buffers x (gx in + h out).
    per_t = 2 * 2 * batch * (G * gx_bytes + hidden * out_bytes)
    # Resident: whh (2 dirs x 2 buffers), h/c scratch, c_last output blocks.
    resident = (2 * 2 * hidden * G * w_bytes
                + 2 * batch * hidden * (w_bytes + 4)
                + 2 * 2 * batch * hidden * out_bytes)
    avail = max(budget - resident, per_t)
    t = max(1, int(avail // per_t))
    t = min(t, seq_len, 64)      # per-grid-step overhead already amortized
    if t >= 4:
        t = (t // 4) * 4         # keep T a multiple of the unroll factor
    return t


def run_bidir_lstm_layer(gx_fwd, gx_bwd, whh_fwd_t, whh_bwd_t, *, seq_len,
                         out_dtype):
    """Run one (fwd, bwd) pair of RNNCell layers over the whole sequence.

    gx_*:    (S, Bp, 4Hp) precomputed input projections (chronological order)
    whh_*_t: (Hp, 4Hp)    pre-transposed, per-gate-padded recurrent weights
    Returns  h_fwd_seq, h_bwd_seq (S,Bp,Hp) in chronological order and the
             final cell states (Bp,Hp) at chrono step S-1 for each direction.
    """
    S_in, B, G = gx_fwd.shape
    assert S_in == seq_len
    H = G // 4
    matmul_dtype = whh_fwd_t.dtype

    gx_bytes = jnp.dtype(gx_fwd.dtype).itemsize
    out_bytes = jnp.dtype(out_dtype).itemsize
    w_bytes = jnp.dtype(matmul_dtype).itemsize

    vmem_limit = int(_vmem_capacity_bytes() * 0.75)
    T = _pick_time_chunk(seq_len, B, H, gx_bytes, out_bytes, w_bytes,
                         budget=vmem_limit - (2 << 20))

    n_chunks = -(-seq_len // T)
    S_pad = n_chunks * T
    if S_pad != seq_len:
        # Zero-pad the chronological END: zero gx keeps the (zero-initialized)
        # backward state exactly zero through the pad, and the forward junk
        # past S-1 is sliced off / never sampled for the final states.
        pad = ((0, S_pad - seq_len), (0, 0), (0, 0))
        gx_fwd = jnp.pad(gx_fwd, pad)
        gx_bwd = jnp.pad(gx_bwd, pad)

    unroll = T if T <= 8 else 4

    kernel = functools.partial(
        _bidir_lstm_layer_kernel,
        hidden_size=H, chunk=T, seq_len=seq_len, unroll=unroll,
        matmul_dtype=matmul_dtype)

    grid_spec = pltpu.PrefetchScalarGridSpec(
        num_scalar_prefetch=0,
        grid=(n_chunks,),
        in_specs=[
            pl.BlockSpec((T, B, G), lambda c: (c, 0, 0)),                 # gx fwd
            pl.BlockSpec((T, B, G), lambda c: (n_chunks - 1 - c, 0, 0)),  # gx bwd
            pl.BlockSpec((H, G), lambda c: (0, 0)),                       # w_hh fwd
            pl.BlockSpec((H, G), lambda c: (0, 0)),                       # w_hh bwd
        ],
        out_specs=[
            pl.BlockSpec((T, B, H), lambda c: (c, 0, 0)),                 # h fwd seq
            pl.BlockSpec((T, B, H), lambda c: (n_chunks - 1 - c, 0, 0)),  # h bwd seq
            pl.BlockSpec((B, H), lambda c: (0, 0)),                       # c fwd last
            pl.BlockSpec((B, H), lambda c: (0, 0)),                       # c bwd last
        ],
        scratch_shapes=[
            pltpu.VMEM((B, H), matmul_dtype),   # h fwd (MXU-feed dtype)
            pltpu.VMEM((B, H), jnp.float32),    # c fwd
            pltpu.VMEM((B, H), matmul_dtype),   # h bwd
            pltpu.VMEM((B, H), jnp.float32),    # c bwd
        ],
    )

    h_f, h_b, c_f_last, c_b_last = pl.pallas_call(
        kernel,
        out_shape=(jax.ShapeDtypeStruct((S_pad, B, H), out_dtype),
                   jax.ShapeDtypeStruct((S_pad, B, H), out_dtype),
                   jax.ShapeDtypeStruct((B, H), out_dtype),
                   jax.ShapeDtypeStruct((B, H), out_dtype)),
        grid_spec=grid_spec,
        compiler_params=pltpu.CompilerParams(
            dimension_semantics=("arbitrary",),       # sequential recurrence
            vmem_limit_bytes=vmem_limit),
    )(gx_fwd, gx_bwd, whh_fwd_t, whh_bwd_t)

    return h_f[:seq_len], h_b[:seq_len], c_f_last, c_b_last


# ---------------------------------------------------------------------------
# bidirectionalRNN.forward (collectHidden=False, dropout=0, bias=False)
# ---------------------------------------------------------------------------
def _pad_gates_and_cols(w, H, H_pad, in_dim, in_pad):
    """(4H, in_dim) -> (4*H_pad, in_pad), zero-padded per gate block."""
    w4 = w.reshape(4, H, in_dim)
    w4 = jnp.pad(w4, ((0, 0), (0, H_pad - H), (0, in_pad - in_dim)))
    return w4.reshape(4 * H_pad, in_pad)


def bidirectional_rnn(x, fwd_params, bwd_params, *, matmul_dtype=jnp.bfloat16):
    """x: (S, B, I).  *_params: list of (w_ih (4H, in), w_hh (4H, H)) per layer.

    matmul_dtype=bf16 (default) feeds the MXU bf16 on every generation while
    keeping gate math / accumulation in f32.  matmul_dtype=f32 reproduces the
    torch reference numerics (hoisted einsums use precision=HIGHEST).
    Note: the returned final cell states are cast to x.dtype on writeback.
    """
    S, B, I = x.shape
    H = fwd_params[0][1].shape[1]                  # w_hh: (4H, H)
    B_pad = _round_up(B, 8)
    H_pad = _round_up(H, 128)
    G = 4 * H_pad
    use_bf16 = jnp.dtype(matmul_dtype) == jnp.dtype(jnp.bfloat16)

    x_p = jnp.pad(x, ((0, 0), (0, B_pad - B), (0, 0)))

    if use_bf16:
        def proj(inp, w_t):                        # bf16 inputs, f32 acc, bf16 store
            return jnp.einsum(
                'sbi,ig->sbg', inp.astype(jnp.bfloat16), w_t.astype(jnp.bfloat16),
                preferred_element_type=jnp.float32).astype(jnp.bfloat16)
    else:
        def proj(inp, w_t):
            return jnp.einsum(
                'sbi,ig->sbg', inp, w_t,
                precision=lax.Precision.HIGHEST,
                preferred_element_type=jnp.float32)

    cur_f = x_p
    cur_b = x_p
    h_last_f, c_last_f, h_last_b, c_last_b = [], [], [], []

    for layer, ((wih_f, whh_f), (wih_b, whh_b)) in enumerate(
            zip(fwd_params, bwd_params)):
        in_dim = wih_f.shape[1]
        in_pad = in_dim if layer == 0 else H_pad   # layer>0 consumes padded h
        wihf_t = _pad_gates_and_cols(wih_f, H, H_pad, in_dim, in_pad).T
        wihb_t = _pad_gates_and_cols(wih_b, H, H_pad, in_dim, in_pad).T
        whhf_t = _pad_gates_and_cols(whh_f, H, H_pad, H, H_pad).T.astype(matmul_dtype)
        whhb_t = _pad_gates_and_cols(whh_b, H, H_pad, H, H_pad).T.astype(matmul_dtype)

        # Hoisted input projection (no recurrence): one big matmul per layer.
        if cur_f is cur_b:
            # Layer 0: both directions consume the same input -> fuse the two
            # projections into a single (S*B, I) x (I, 8H) matmul.
            gx = proj(cur_f, jnp.concatenate([wihf_t, wihb_t], axis=1))
            gx_f, gx_b = gx[..., :G], gx[..., G:]
        else:
            gx_f = proj(cur_f, wihf_t)
            gx_b = proj(cur_b, wihb_t)

        h_f, h_b, c_f_last, c_b_last = run_bidir_lstm_layer(
            gx_f, gx_b, whhf_t, whhb_t, seq_len=S, out_dtype=x.dtype)

        h_last_f.append(h_f[S - 1, :B, :H])        # fwd final hidden (chrono S-1)
        c_last_f.append(c_f_last[:B, :H])
        h_last_b.append(h_b[S - 1, :B, :H])        # bwd "final" hidden (chrono S-1, apex)
        c_last_b.append(c_b_last[:B, :H])
        cur_f, cur_b = h_f, h_b                    # next layer consumes h sequences

    output = jnp.concatenate([cur_f[:, :B, :H], cur_b[:, :B, :H]], axis=-1)
    hiddens = (jnp.concatenate([jnp.stack(h_last_f), jnp.stack(h_last_b)], -1),
               jnp.concatenate([jnp.stack(c_last_f), jnp.stack(c_last_b)], -1))
    return output, hiddens


def init_direction_params(key, num_layers, input_size, hidden_size):
    """RNNCell.reset_parameters: uniform(-1/sqrt(H), 1/sqrt(H)); layer>0 in = H."""
    stdev = 1.0 / math.sqrt(hidden_size)
    params = []
    for layer in range(num_layers):
        in_sz = input_size if layer == 0 else hidden_size
        key, k1, k2 = jax.random.split(key, 3)
        w_ih = jax.random.uniform(k1, (4 * hidden_size, in_sz),
                                  jnp.float32, -stdev, stdev)
        w_hh = jax.random.uniform(k2, (4 * hidden_size, hidden_size),
                                  jnp.float32, -stdev, stdev)
        params.append((w_ih, w_hh))
    return key, params


# ---------------------------------------------------------------------------
# Pure-JAX reference (mirrors the apex module step-by-step) for sanity check
# ---------------------------------------------------------------------------
def _lstm_cell_ref(x_t, h, c, w_ih, w_hh):
    gates = x_t @ w_ih.T + h @ w_hh.T
    H = h.shape[-1]
    i = jax.nn.sigmoid(gates[:, :H])
    f = jax.nn.sigmoid(gates[:, H:2 * H])
    g = jnp.tanh(gates[:, 2 * H:3 * H])
    o = jax.nn.sigmoid(gates[:, 3 * H:])
    c_new = f * c + i * g
    return o * jnp.tanh(c_new), c_new


def _stacked_ref(x, params, reverse):
    S, B, _ = x.shape
    cur = x
    h_last, c_last = [], []
    for (w_ih, w_hh) in params:
        H = w_hh.shape[0] // 4
        h = jnp.zeros((B, H), jnp.float32)
        c = jnp.zeros((B, H), jnp.float32)
        hs = [None] * S
        cs = [None] * S
        order = range(S - 1, -1, -1) if reverse else range(S)
        for t in order:
            h, c = _lstm_cell_ref(cur[t], h, c, w_ih, w_hh)
            hs[t] = h
            cs[t] = c
        h_seq = jnp.stack(hs)
        c_seq = jnp.stack(cs)
        h_last.append(h_seq[-1])
        c_last.append(c_seq[-1])
        cur = h_seq
    return cur, (jnp.stack(h_last), jnp.stack(c_last))


def bidirectional_rnn_ref(x, fwd_params, bwd_params):
    f_out, f_hid = _stacked_ref(x, fwd_params, reverse=False)
    b_out, b_hid = _stacked_ref(x, bwd_params, reverse=True)
    out = jnp.concatenate([f_out, b_out], -1)
    hid = tuple(jnp.concatenate([a, b], -1) for a, b in zip(f_hid, b_hid))
    return out, hid


if __name__ == "__main__":
    SEQ, BSZ, IN, HID, LAYERS = 8, 2, 16, 32, 2

    key = jax.random.PRNGKey(0)
    key, kx = jax.random.split(key)
    x = jax.random.normal(kx, (SEQ, BSZ, IN), dtype=jnp.float32)

    key, fwd_params = init_direction_params(key, LAYERS, IN, HID)
    key, bwd_params = init_direction_params(key, LAYERS, IN, HID)

    # Default fast path: bf16 MXU feeds, f32 gate math / accumulation.
    output, hiddens = jax.jit(bidirectional_rnn)(x, fwd_params, bwd_params)
    jax.block_until_ready((output, hiddens))

    assert output.shape == (SEQ, BSZ, 2 * HID)
    assert hiddens[0].shape == (LAYERS, BSZ, 2 * HID)
    assert hiddens[1].shape == (LAYERS, BSZ, 2 * HID)

    ref_out, ref_hid = bidirectional_rnn_ref(x, fwd_params, bwd_params)

    # bf16-feed path: loose tolerance (inputs/weights rounded to bf16).
    assert float(jnp.max(jnp.abs(output - ref_out))) < 1.5e-1
    assert float(jnp.max(jnp.abs(hiddens[0] - ref_hid[0]))) < 1.5e-1
    assert float(jnp.max(jnp.abs(hiddens[1] - ref_hid[1]))) < 1.5e-1

    # Reference-faithful f32 path: tighter tolerance.
    out32, hid32 = jax.jit(functools.partial(
        bidirectional_rnn, matmul_dtype=jnp.float32))(x, fwd_params, bwd_params)
    jax.block_until_ready((out32, hid32))
    assert float(jnp.max(jnp.abs(out32 - ref_out))) < 5e-2
    assert float(jnp.max(jnp.abs(hid32[0] - ref_hid[0]))) < 5e-2
    assert float(jnp.max(jnp.abs(hid32[1] - ref_hid[1]))) < 5e-2

    print("KERNEL_OK")
</pallas_src>

<mosaic_0001>
module attributes {stable_mosaic.version = 11 : i64} {
  func.func @_bidir_lstm_layer_kernel(%arg0: i32, %arg1: memref<8x8x512xbf16, #tpu.memory_space<vmem>>, %arg2: memref<8x8x512xbf16, #tpu.memory_space<vmem>>, %arg3: memref<128x512xbf16, #tpu.memory_space<vmem>>, %arg4: memref<128x512xbf16, #tpu.memory_space<vmem>>, %arg5: memref<8x8x128xf32, #tpu.memory_space<vmem>>, %arg6: memref<8x8x128xf32, #tpu.memory_space<vmem>>, %arg7: memref<8x128xf32, #tpu.memory_space<vmem>>, %arg8: memref<8x128xf32, #tpu.memory_space<vmem>>, %arg9: memref<8x128xbf16, #tpu.memory_space<vmem>>, %arg10: memref<8x128xf32, #tpu.memory_space<vmem>>, %arg11: memref<8x128xbf16, #tpu.memory_space<vmem>>, %arg12: memref<8x128xf32, #tpu.memory_space<vmem>>) attributes {dimension_semantics = [#tpu.dimension_semantics<arbitrary>], iteration_bounds = array<i64: 1>, scalar_prefetch = 0 : i64, scratch_operands = 4 : i64, tpu.core_type = #tpu.core_type<tc>, window_params = [{transform_indices = @transform_0, window_bounds = array<i64: 8, 8, 512>}, {transform_indices = @transform_1, window_bounds = array<i64: 8, 8, 512>}, {pipeline_mode = #tpu.pipeline_mode<synchronous>, transform_indices = @transform_2, window_bounds = array<i64: 128, 512>}, {pipeline_mode = #tpu.pipeline_mode<synchronous>, transform_indices = @transform_3, window_bounds = array<i64: 128, 512>}, {transform_indices = @transform_4, window_bounds = array<i64: 8, 8, 128>}, {transform_indices = @transform_5, window_bounds = array<i64: 8, 8, 128>}, {pipeline_mode = #tpu.pipeline_mode<synchronous>, transform_indices = @transform_6, window_bounds = array<i64: 8, 128>}, {pipeline_mode = #tpu.pipeline_mode<synchronous>, transform_indices = @transform_7, window_bounds = array<i64: 8, 128>}]} {
    %c0_i32 = arith.constant 0 : i32
    %0 = arith.cmpi eq, %arg0, %c0_i32 : i32
    %1 = arith.extui %0 : i1 to i32
    %c0_i32_0 = arith.constant 0 : i32
    %2 = arith.cmpi ne, %1, %c0_i32_0 : i32
    scf.if %2 {
      %cst_340 = arith.constant 0.000000e+00 : bf16
      %757 = vector.broadcast %cst_340 : bf16 to vector<8x128xbf16>
      %c0_341 = arith.constant 0 : index
      %c0_342 = arith.constant 0 : index
      %758 = vector.load %arg9[%c0_341, %c0_342] : memref<8x128xbf16, #tpu.memory_space<vmem>>, vector<8x128xbf16>
      tpu.vector_store %arg9[%c0_341, %c0_342], %757 {strides = array<i32>} : memref<8x128xbf16, #tpu.memory_space<vmem>>, vector<8x128xbf16>,
      %cst_343 = arith.constant 0.000000e+00 : f32
      %759 = vector.broadcast %cst_343 : f32 to vector<8x128xf32>
      %c0_344 = arith.constant 0 : index
      %c0_345 = arith.constant 0 : index
      %760 = vector.load %arg10[%c0_344, %c0_345] : memref<8x128xf32, #tpu.memory_space<vmem>>, vector<8x128xf32>
      tpu.vector_store %arg10[%c0_344, %c0_345], %759 {strides = array<i32>} : memref<8x128xf32, #tpu.memory_space<vmem>>, vector<8x128xf32>,
      %cst_346 = arith.constant 0.000000e+00 : bf16
      %761 = vector.broadcast %cst_346 : bf16 to vector<8x128xbf16>
      %c0_347 = arith.constant 0 : index
      %c0_348 = arith.constant 0 : index
      %762 = vector.load %arg11[%c0_347, %c0_348] : memref<8x128xbf16, #tpu.memory_space<vmem>>, vector<8x128xbf16>
      tpu.vector_store %arg11[%c0_347, %c0_348], %761 {strides = array<i32>} : memref<8x128xbf16, #tpu.memory_space<vmem>>, vector<8x128xbf16>,
      %cst_349 = arith.constant 0.000000e+00 : f32
      %763 = vector.broadcast %cst_349 : f32 to vector<8x128xf32>
      %c0_350 = arith.constant 0 : index
      %c0_351 = arith.constant 0 : index
      %764 = vector.load %arg12[%c0_350, %c0_351] : memref<8x128xf32, #tpu.memory_space<vmem>>, vector<8x128xf32>
      tpu.vector_store %arg12[%c0_350, %c0_351], %763 {strides = array<i32>} : memref<8x128xf32, #tpu.memory_space<vmem>>, vector<8x128xf32>,
    } else {
    }
    %c0 = arith.constant 0 : index
    %c0_1 = arith.constant 0 : index
    %3 = vector.load %arg3[%c0, %c0_1] : memref<128x512xbf16, #tpu.memory_space<vmem>>, vector<128x512xbf16>
    %c0_2 = arith.constant 0 : index
    %c0_3 = arith.constant 0 : index
    %4 = vector.load %arg4[%c0_2, %c0_3] : memref<128x512xbf16, #tpu.memory_space<vmem>>, vector<128x512xbf16>
    %c0_i32_4 = arith.constant 0 : i32
    %5 = arith.index_cast %c0_i32_4 : i32 to index
    %c0_5 = arith.constant 0 : index
    %c0_6 = arith.constant 0 : index
    %6 = vector.load %arg1[%5, %c0_5, %c0_6] : memref<8x8x512xbf16, #tpu.memory_space<vmem>>, vector<1x8x512xbf16>
    %7 = vector.shape_cast %6 : vector<1x8x512xbf16> to vector<8x512xbf16>
    %8 = arith.extf %7 : vector<8x512xbf16> to vector<8x512xf32>
    %c0_7 = arith.constant 0 : index
    %c0_8 = arith.constant 0 : index
    %9 = vector.load %arg9[%c0_7, %c0_8] : memref<8x128xbf16, #tpu.memory_space<vmem>>, vector<8x128xbf16>
    %cst = arith.constant dense<0.000000e+00> : vector<8x512xf32>
    %10 = tpu.matmul %9, %3, %cst {dimension_numbers = #tpu.dot_dimension_numbers<[1], [0], [0], [1], [0, 0, 1, 1], [], []>} : vector<8x128xbf16>, vector<128x512xbf16>, vector<8x512xf32> -> vector<8x512xf32>
    %11 = arith.addf %8, %10 : vector<8x512xf32>
    %c7_i32 = arith.constant 7 : i32
    %12 = arith.subi %c7_i32, %c0_i32_4 : i32
    %13 = arith.index_cast %12 : i32 to index
    %c0_9 = arith.constant 0 : index
    %c0_10 = arith.constant 0 : index
    %14 = vector.load %arg2[%13, %c0_9, %c0_10] : memref<8x8x512xbf16, #tpu.memory_space<vmem>>, vector<1x8x512xbf16>
    %15 = vector.shape_cast %14 : vector<1x8x512xbf16> to vector<8x512xbf16>
    %16 = arith.extf %15 : vector<8x512xbf16> to vector<8x512xf32>
    %c0_11 = arith.constant 0 : index
    %c0_12 = arith.constant 0 : index
    %17 = vector.load %arg11[%c0_11, %c0_12] : memref<8x128xbf16, #tpu.memory_space<vmem>>, vector<8x128xbf16>
    %cst_13 = arith.constant dense<0.000000e+00> : vector<8x512xf32>
    %18 = tpu.matmul %17, %4, %cst_13 {dimension_numbers = #tpu.dot_dimension_numbers<[1], [0], [0], [1], [0, 0, 1, 1], [], []>} : vector<8x128xbf16>, vector<128x512xbf16>, vector<8x512xf32> -> vector<8x512xf32>
    %19 = arith.addf %16, %18 : vector<8x512xf32>
    %c0_14 = arith.constant 0 : index
    %c0_15 = arith.constant 0 : index
    %20 = vector.load %arg10[%c0_14, %c0_15] : memref<8x128xf32, #tpu.memory_space<vmem>>, vector<8x128xf32>
    %21 = vector.extract_strided_slice %11 {offsets = [0, 0], sizes = [8, 128], strides = [1, 1]} : vector<8x512xf32> to vector<8x128xf32>
    %22 = arith.negf %21 : vector<8x128xf32>
    %23 = math.exp %22 : vector<8x128xf32>
    %cst_16 = arith.constant 1.000000e+00 : f32
    %24 = vector.broadcast %cst_16 : f32 to vector<8x128xf32>
    %25 = arith.addf %24, %23 : vector<8x128xf32>
    %26 = arith.divf %24, %25 : vector<8x128xf32>
    %27 = vector.extract_strided_slice %11 {offsets = [0, 128], sizes = [8, 128], strides = [1, 1]} : vector<8x512xf32> to vector<8x128xf32>
    %28 = arith.negf %27 : vector<8x128xf32>
    %29 = math.exp %28 : vector<8x128xf32>
    %cst_17 = arith.constant 1.000000e+00 : f32
    %30 = vector.broadcast %cst_17 : f32 to vector<8x128xf32>
    %31 = arith.addf %30, %29 : vector<8x128xf32>
    %32 = arith.divf %30, %31 : vector<8x128xf32>
    %33 = vector.extract_strided_slice %11 {offsets = [0, 256], sizes = [8, 128], strides = [1, 1]} : vector<8x512xf32> to vector<8x128xf32>
    %34 = math.tanh %33 : vector<8x128xf32>
    %35 = vector.extract_strided_slice %11 {offsets = [0, 384], sizes = [8, 128], strides = [1, 1]} : vector<8x512xf32> to vector<8x128xf32>
    %36 = arith.negf %35 : vector<8x128xf32>
    %37 = math.exp %36 : vector<8x128xf32>
    %cst_18 = arith.constant 1.000000e+00 : f32
    %38 = vector.broadcast %cst_18 : f32 to vector<8x128xf32>
    %39 = arith.addf %38, %37 : vector<8x128xf32>
    %40 = arith.divf %38, %39 : vector<8x128xf32>
    %41 = arith.mulf %32, %20 : vector<8x128xf32>
    %42 = arith.mulf %26, %34 : vector<8x128xf32>
    %43 = arith.addf %41, %42 : vector<8x128xf32>
    %44 = math.tanh %43 : vector<8x128xf32>
    %45 = arith.mulf %40, %44 : vector<8x128xf32>
    %c0_19 = arith.constant 0 : index
    %c0_20 = arith.constant 0 : index
    %46 = vector.load %arg12[%c0_19, %c0_20] : memref<8x128xf32, #tpu.memory_space<vmem>>, vector<8x128xf32>
    %47 = vector.extract_strided_slice %19 {offsets = [0, 0], sizes = [8, 128], strides = [1, 1]} : vector<8x512xf32> to vector<8x128xf32>
    %48 = arith.negf %47 : vector<8x128xf32>
    %49 = math.exp %48 : vector<8x128xf32>
    %cst_21 = arith.constant 1.000000e+00 : f32
    %50 = vector.broadcast %cst_21 : f32 to vector<8x128xf32>
    %51 = arith.addf %50, %49 : vector<8x128xf32>
    %52 = arith.divf %50, %51 : vector<8x128xf32>
    %53 = vector.extract_strided_slice %19 {offsets = [0, 128], sizes = [8, 128], strides = [1, 1]} : vector<8x512xf32> to vector<8x128xf32>
    %54 = arith.negf %53 : vector<8x128xf32>
    %55 = math.exp %54 : vector<8x128xf32>
    %cst_22 = arith.constant 1.000000e+00 : f32
    %56 = vector.broadcast %cst_22 : f32 to vector<8x128xf32>
    %57 = arith.addf %56, %55 : vector<8x128xf32>
    %58 = arith.divf %56, %57 : vector<8x128xf32>
    %59 = vector.extract_strided_slice %19 {offsets = [0, 256], sizes = [8, 128], strides = [1, 1]} : vector<8x512xf32> to vector<8x128xf32>
    %60 = math.tanh %59 : vector<8x128xf32>
    %61 = vector.extract_strided_slice %19 {offsets = [0, 384], sizes = [8, 128], strides = [1, 1]} : vector<8x512xf32> to vector<8x128xf32>
    %62 = arith.negf %61 : vector<8x128xf32>
    %63 = math.exp %62 : vector<8x128xf32>
    %cst_23 = arith.constant 1.000000e+00 : f32
    %64 = vector.broadcast %cst_23 : f32 to vector<8x128xf32>
    %65 = arith.addf %64, %63 : vector<8x128xf32>
    %66 = arith.divf %64, %65 : vector<8x128xf32>
    %67 = arith.mulf %58, %46 : vector<8x128xf32>
    %68 = arith.mulf %52, %60 : vector<8x128xf32>
    %69 = arith.addf %67, %68 : vector<8x128xf32>
    %70 = math.tanh %69 : vector<8x128xf32>
    %71 = arith.mulf %66, %70 : vector<8x128xf32>
    %72 = arith.truncf %45 : vector<8x128xf32> to vector<8x128xbf16>
    %c0_24 = arith.constant 0 : index
    %c0_25 = arith.constant 0 : index
    %73 = vector.load %arg9[%c0_24, %c0_25] : memref<8x128xbf16, #tpu.memory_space<vmem>>, vector<8x128xbf16>
    tpu.vector_store %arg9[%c0_24, %c0_25], %72 {strides = array<i32>} : memref<8x128xbf16, #tpu.memory_space<vmem>>, vector<8x128xbf16>,
    %c0_26 = arith.constant 0 : index
    %c0_27 = arith.constant 0 : index
    %74 = vector.load %arg10[%c0_26, %c0_27] : memref<8x128xf32, #tpu.memory_space<vmem>>, vector<8x128xf32>
    tpu.vector_store %arg10[%c0_26, %c0_27], %43 {strides = array<i32>} : memref<8x128xf32, #tpu.memory_space<vmem>>, vector<8x128xf32>,
    %75 = arith.truncf %71 : vector<8x128xf32> to vector<8x128xbf16>
    %c0_28 = arith.constant 0 : index
    %c0_29 = arith.constant 0 : index
    %76 = vector.load %arg11[%c0_28, %c0_29] : memref<8x128xbf16, #tpu.memory_space<vmem>>, vector<8x128xbf16>
    tpu.vector_store %arg11[%c0_28, %c0_29], %75 {strides = array<i32>} : memref<8x128xbf16, #tpu.memory_space<vmem>>, vector<8x128xbf16>,
    %c0_30 = arith.constant 0 : index
    %c0_31 = arith.constant 0 : index
    %77 = vector.load %arg12[%c0_30, %c0_31] : memref<8x128xf32, #tpu.memory_space<vmem>>, vector<8x128xf32>
    tpu.vector_store %arg12[%c0_30, %c0_31], %69 {strides = array<i32>} : memref<8x128xf32, #tpu.memory_space<vmem>>, vector<8x128xf32>,
    %78 = arith.index_cast %c0_i32_4 : i32 to index
    %c0_32 = arith.constant 0 : index
    %c0_33 = arith.constant 0 : index
    %79 = vector.load %arg5[%78, %c0_32, %c0_33] : memref<8x8x128xf32, #tpu.memory_space<vmem>>, vector<1x8x128xf32>
    %80 = vector.shape_cast %79 : vector<1x8x128xf32> to vector<8x128xf32>
    %81 = vector.shape_cast %45 : vector<8x128xf32> to vector<1x8x128xf32>
    tpu.vector_store %arg5[%78, %c0_32, %c0_33], %81 {strides = array<i32>} : memref<8x8x128xf32, #tpu.memory_space<vmem>>, vector<1x8x128xf32>,
    %c7_i32_34 = arith.constant 7 : i32
    %82 = arith.subi %c7_i32_34, %c0_i32_4 : i32
    %83 = arith.index_cast %82 : i32 to index
    %c0_35 = arith.constant 0 : index
    %c0_36 = arith.constant 0 : index
    %84 = vector.load %arg6[%83, %c0_35, %c0_36] : memref<8x8x128xf32, #tpu.memory_space<vmem>>, vector<1x8x128xf32>
    %85 = vector.shape_cast %84 : vector<1x8x128xf32> to vector<8x128xf32>
    %86 = vector.shape_cast %71 : vector<8x128xf32> to vector<1x8x128xf32>
    tpu.vector_store %arg6[%83, %c0_35, %c0_36], %86 {strides = array<i32>} : memref<8x8x128xf32, #tpu.memory_space<vmem>>, vector<1x8x128xf32>,
    %c8_i32 = arith.constant 8 : i32
    %87 = arith.muli %arg0, %c8_i32 : i32
    %88 = arith.addi %87, %c0_i32_4 : i32
    %c0_i32_37 = arith.constant 0 : i32
    %89 = arith.subi %c0_i32_37, %arg0 : i32
    %c8_i32_38 = arith.constant 8 : i32
    %90 = arith.muli %89, %c8_i32_38 : i32
    %c7_i32_39 = arith.constant 7 : i32
    %91 = arith.subi %c7_i32_39, %c0_i32_4 : i32
    %92 = arith.addi %90, %91 : i32
    %c7_i32_40 = arith.constant 7 : i32
    %93 = arith.cmpi eq, %88, %c7_i32_40 : i32
    %94 = arith.extui %93 : i1 to i32
    %c0_i32_41 = arith.constant 0 : i32
    %95 = arith.cmpi ne, %94, %c0_i32_41 : i32
    scf.if %95 {
      %c0_340 = arith.constant 0 : index
      %c0_341 = arith.constant 0 : index
      %757 = vector.load %arg7[%c0_340, %c0_341] : memref<8x128xf32, #tpu.memory_space<vmem>>, vector<8x128xf32>
      tpu.vector_store %arg7[%c0_340, %c0_341], %43 {strides = array<i32>} : memref<8x128xf32, #tpu.memory_space<vmem>>, vector<8x128xf32>,
    } else {
    }
    %c7_i32_42 = arith.constant 7 : i32
    %96 = arith.cmpi eq, %92, %c7_i32_42 : i32
    %97 = arith.extui %96 : i1 to i32
    %c0_i32_43 = arith.constant 0 : i32
    %98 = arith.cmpi ne, %97, %c0_i32_43 : i32
    scf.if %98 {
      %c0_340 = arith.constant 0 : index
      %c0_341 = arith.constant 0 : index
      %757 = vector.load %arg8[%c0_340, %c0_341] : memref<8x128xf32, #tpu.memory_space<vmem>>, vector<8x128xf32>
      tpu.vector_store %arg8[%c0_340, %c0_341], %69 {strides = array<i32>} : memref<8x128xf32, #tpu.memory_space<vmem>>, vector<8x128xf32>,
    } else {
    }
    %c1_i32 = arith.constant 1 : i32
    %99 = arith.index_cast %c1_i32 : i32 to index
    %c0_44 = arith.constant 0 : index
    %c0_45 = arith.constant 0 : index
    %100 = vector.load %arg1[%99, %c0_44, %c0_45] : memref<8x8x512xbf16, #tpu.memory_space<vmem>>, vector<1x8x512xbf16>
    %101 = vector.shape_cast %100 : vector<1x8x512xbf16> to vector<8x512xbf16>
    %102 = arith.extf %101 : vector<8x512xbf16> to vector<8x512xf32>
    %c0_46 = arith.constant 0 : index
    %c0_47 = arith.constant 0 : index
    %103 = vector.load %arg9[%c0_46, %c0_47] : memref<8x128xbf16, #tpu.memory_space<vmem>>, vector<8x128xbf16>
    %cst_48 = arith.constant dense<0.000000e+00> : vector<8x512xf32>
    %104 = tpu.matmul %103, %3, %cst_48 {dimension_numbers = #tpu.dot_dimension_numbers<[1], [0], [0], [1], [0, 0, 1, 1], [], []>} : vector<8x128xbf16>, vector<128x512xbf16>, vector<8x512xf32> -> vector<8x512xf32>
    %105 = arith.addf %102, %104 : vector<8x512xf32>
    %c7_i32_49 = arith.constant 7 : i32
    %106 = arith.subi %c7_i32_49, %c1_i32 : i32
    %107 = arith.index_cast %106 : i32 to index
    %c0_50 = arith.constant 0 : index
    %c0_51 = arith.constant 0 : index
    %108 = vector.load %arg2[%107, %c0_50, %c0_51] : memref<8x8x512xbf16, #tpu.memory_space<vmem>>, vector<1x8x512xbf16>
    %109 = vector.shape_cast %108 : vector<1x8x512xbf16> to vector<8x512xbf16>
    %110 = arith.extf %109 : vector<8x512xbf16> to vector<8x512xf32>
    %c0_52 = arith.constant 0 : index
    %c0_53 = arith.constant 0 : index
    %111 = vector.load %arg11[%c0_52, %c0_53] : memref<8x128xbf16, #tpu.memory_space<vmem>>, vector<8x128xbf16>
    %cst_54 = arith.constant dense<0.000000e+00> : vector<8x512xf32>
    %112 = tpu.matmul %111, %4, %cst_54 {dimension_numbers = #tpu.dot_dimension_numbers<[1], [0], [0], [1], [0, 0, 1, 1], [], []>} : vector<8x128xbf16>, vector<128x512xbf16>, vector<8x512xf32> -> vector<8x512xf32>
    %113 = arith.addf %110, %112 : vector<8x512xf32>
    %c0_55 = arith.constant 0 : index
    %c0_56 = arith.constant 0 : index
    %114 = vector.load %arg10[%c0_55, %c0_56] : memref<8x128xf32, #tpu.memory_space<vmem>>, vector<8x128xf32>
    %115 = vector.extract_strided_slice %105 {offsets = [0, 0], sizes = [8, 128], strides = [1, 1]} : vector<8x512xf32> to vector<8x128xf32>
    %116 = arith.negf %115 : vector<8x128xf32>
    %117 = math.exp %116 : vector<8x128xf32>
    %cst_57 = arith.constant 1.000000e+00 : f32
    %118 = vector.broadcast %cst_57 : f32 to vector<8x128xf32>
    %119 = arith.addf %118, %117 : vector<8x128xf32>
    %120 = arith.divf %118, %119 : vector<8x128xf32>
    %121 = vector.extract_strided_slice %105 {offsets = [0, 128], sizes = [8, 128], strides = [1, 1]} : vector<8x512xf32> to vector<8x128xf32>
    %122 = arith.negf %121 : vector<8x128xf32>
    %123 = math.exp %122 : vector<8x128xf32>
    %cst_58 = arith.constant 1.000000e+00 : f32
    %124 = vector.broadcast %cst_58 : f32 to vector<8x128xf32>
    %125 = arith.addf %124, %123 : vector<8x128xf32>
    %126 = arith.divf %124, %125 : vector<8x128xf32>
    %127 = vector.extract_strided_slice %105 {offsets = [0, 256], sizes = [8, 128], strides = [1, 1]} : vector<8x512xf32> to vector<8x128xf32>
    %128 = math.tanh %127 : vector<8x128xf32>
    %129 = vector.extract_strided_slice %105 {offsets = [0, 384], sizes = [8, 128], strides = [1, 1]} : vector<8x512xf32> to vector<8x128xf32>
    %130 = arith.negf %129 : vector<8x128xf32>
    %131 = math.exp %130 : vector<8x128xf32>
    %cst_59 = arith.constant 1.000000e+00 : f32
    %132 = vector.broadcast %cst_59 : f32 to vector<8x128xf32>
    %133 = arith.addf %132, %131 : vector<8x128xf32>
    %134 = arith.divf %132, %133 : vector<8x128xf32>
    %135 = arith.mulf %126, %114 : vector<8x128xf32>
    %136 = arith.mulf %120, %128 : vector<8x128xf32>
    %137 = arith.addf %135, %136 : vector<8x128xf32>
    %138 = math.tanh %137 : vector<8x128xf32>
    %139 = arith.mulf %134, %138 : vector<8x128xf32>
    %c0_60 = arith.constant 0 : index
    %c0_61 = arith.constant 0 : index
    %140 = vector.load %arg12[%c0_60, %c0_61] : memref<8x128xf32, #tpu.memory_space<vmem>>, vector<8x128xf32>
    %141 = vector.extract_strided_slice %113 {offsets = [0, 0], sizes = [8, 128], strides = [1, 1]} : vector<8x512xf32> to vector<8x128xf32>
    %142 = arith.negf %141 : vector<8x128xf32>
    %143 = math.exp %142 : vector<8x128xf32>
    %cst_62 = arith.constant 1.000000e+00 : f32
    %144 = vector.broadcast %cst_62 : f32 to vector<8x128xf32>
    %145 = arith.addf %144, %143 : vector<8x128xf32>
    %146 = arith.divf %144, %145 : vector<8x128xf32>
    %147 = vector.extract_strided_slice %113 {offsets = [0, 128], sizes = [8, 128], strides = [1, 1]} : vector<8x512xf32> to vector<8x128xf32>
    %148 = arith.negf %147 : vector<8x128xf32>
    %149 = math.exp %148 : vector<8x128xf32>
    %cst_63 = arith.constant 1.000000e+00 : f32
    %150 = vector.broadcast %cst_63 : f32 to vector<8x128xf32>
    %151 = arith.addf %150, %149 : vector<8x128xf32>
    %152 = arith.divf %150, %151 : vector<8x128xf32>
    %153 = vector.extract_strided_slice %113 {offsets = [0, 256], sizes = [8, 128], strides = [1, 1]} : vector<8x512xf32> to vector<8x128xf32>
    %154 = math.tanh %153 : vector<8x128xf32>
    %155 = vector.extract_strided_slice %113 {offsets = [0, 384], sizes = [8, 128], strides = [1, 1]} : vector<8x512xf32> to vector<8x128xf32>
    %156 = arith.negf %155 : vector<8x128xf32>
    %157 = math.exp %156 : vector<8x128xf32>
    %cst_64 = arith.constant 1.000000e+00 : f32
    %158 = vector.broadcast %cst_64 : f32 to vector<8x128xf32>
    %159 = arith.addf %158, %157 : vector<8x128xf32>
    %160 = arith.divf %158, %159 : vector<8x128xf32>
    %161 = arith.mulf %152, %140 : vector<8x128xf32>
    %162 = arith.mulf %146, %154 : vector<8x128xf32>
    %163 = arith.addf %161, %162 : vector<8x128xf32>
    %164 = math.tanh %163 : vector<8x128xf32>
    %165 = arith.mulf %160, %164 : vector<8x128xf32>
    %166 = arith.truncf %139 : vector<8x128xf32> to vector<8x128xbf16>
    %c0_65 = arith.constant 0 : index
    %c0_66 = arith.constant 0 : index
    %167 = vector.load %arg9[%c0_65, %c0_66] : memref<8x128xbf16, #tpu.memory_space<vmem>>, vector<8x128xbf16>
    tpu.vector_store %arg9[%c0_65, %c0_66], %166 {strides = array<i32>} : memref<8x128xbf16, #tpu.memory_space<vmem>>, vector<8x128xbf16>,
    %c0_67 = arith.constant 0 : index
    %c0_68 = arith.constant 0 : index
    %168 = vector.load %arg10[%c0_67, %c0_68] : memref<8x128xf32, #tpu.memory_space<vmem>>, vector<8x128xf32>
    tpu.vector_store %arg10[%c0_67, %c0_68], %137 {strides = array<i32>} : memref<8x128xf32, #tpu.memory_space<vmem>>, vector<8x128xf32>,
    %169 = arith.truncf %165 : vector<8x128xf32> to vector<8x128xbf16>
    %c0_69 = arith.constant 0 : index
    %c0_70 = arith.constant 0 : index
    %170 = vector.load %arg11[%c0_69, %c0_70] : memref<8x128xbf16, #tpu.memory_space<vmem>>, vector<8x128xbf16>
    tpu.vector_store %arg11[%c0_69, %c0_70], %169 {strides = array<i32>} : memref<8x128xbf16, #tpu.memory_space<vmem>>, vector<8x128xbf16>,
    %c0_71 = arith.constant 0 : index
    %c0_72 = arith.constant 0 : index
    %171 = vector.load %arg12[%c0_71, %c0_72] : memref<8x128xf32, #tpu.memory_space<vmem>>, vector<8x128xf32>
    tpu.vector_store %arg12[%c0_71, %c0_72], %163 {strides = array<i32>} : memref<8x128xf32, #tpu.memory_space<vmem>>, vector<8x128xf32>,
    %172 = arith.index_cast %c1_i32 : i32 to index
    %c0_73 = arith.constant 0 : index
    %c0_74 = arith.constant 0 : index
    %173 = vector.load %arg5[%172, %c0_73, %c0_74] : memref<8x8x128xf32, #tpu.memory_space<vmem>>, vector<1x8x128xf32>
    %174 = vector.shape_cast %173 : vector<1x8x128xf32> to vector<8x128xf32>
    %175 = vector.shape_cast %139 : vector<8x128xf32> to vector<1x8x128xf32>
    tpu.vector_store %arg5[%172, %c0_73, %c0_74], %175 {strides = array<i32>} : memref<8x8x128xf32, #tpu.memory_space<vmem>>, vector<1x8x128xf32>,
    %c7_i32_75 = arith.constant 7 : i32
    %176 = arith.subi %c7_i32_75, %c1_i32 : i32
    %177 = arith.index_cast %176 : i32 to index
    %c0_76 = arith.constant 0 : index
    %c0_77 = arith.constant 0 : index
    %178 = vector.load %arg6[%177, %c0_76, %c0_77] : memref<8x8x128xf32, #tpu.memory_space<vmem>>, vector<1x8x128xf32>
    %179 = vector.shape_cast %178 : vector<1x8x128xf32> to vector<8x128xf32>
    %180 = vector.shape_cast %165 : vector<8x128xf32> to vector<1x8x128xf32>
    tpu.vector_store %arg6[%177, %c0_76, %c0_77], %180 {strides = array<i32>} : memref<8x8x128xf32, #tpu.memory_space<vmem>>, vector<1x8x128xf32>,
    %c8_i32_78 = arith.constant 8 : i32
    %181 = arith.muli %arg0, %c8_i32_78 : i32
    %182 = arith.addi %181, %c1_i32 : i32
    %c0_i32_79 = arith.constant 0 : i32
    %183 = arith.subi %c0_i32_79, %arg0 : i32
    %c8_i32_80 = arith.constant 8 : i32
    %184 = arith.muli %183, %c8_i32_80 : i32
    %c7_i32_81 = arith.constant 7 : i32
    %185 = arith.subi %c7_i32_81, %c1_i32 : i32
    %186 = arith.addi %184, %185 : i32
    %c7_i32_82 = arith.constant 7 : i32
    %187 = arith.cmpi eq, %182, %c7_i32_82 : i32
    %188 = arith.extui %187 : i1 to i32
    %c0_i32_83 = arith.constant 0 : i32
    %189 = arith.cmpi ne, %188, %c0_i32_83 : i32
    scf.if %189 {
      %c0_340 = arith.constant 0 : index
      %c0_341 = arith.constant 0 : index
      %757 = vector.load %arg7[%c0_340, %c0_341] : memref<8x128xf32, #tpu.memory_space<vmem>>, vector<8x128xf32>
      tpu.vector_store %arg7[%c0_340, %c0_341], %137 {strides = array<i32>} : memref<8x128xf32, #tpu.memory_space<vmem>>, vector<8x128xf32>,
    } else {
    }
    %c7_i32_84 = arith.constant 7 : i32
    %190 = arith.cmpi eq, %186, %c7_i32_84 : i32
    %191 = arith.extui %190 : i1 to i32
    %c0_i32_85 = arith.constant 0 : i32
    %192 = arith.cmpi ne, %191, %c0_i32_85 : i32
    scf.if %192 {
      %c0_340 = arith.constant 0 : index
      %c0_341 = arith.constant 0 : index
      %757 = vector.load %arg8[%c0_340, %c0_341] : memref<8x128xf32, #tpu.memory_space<vmem>>, vector<8x128xf32>
      tpu.vector_store %arg8[%c0_340, %c0_341], %163 {strides = array<i32>} : memref<8x128xf32, #tpu.memory_space<vmem>>, vector<8x128xf32>,
    } else {
    }
    %c2_i32 = arith.constant 2 : i32
    %193 = arith.index_cast %c2_i32 : i32 to index
    %c0_86 = arith.constant 0 : index
    %c0_87 = arith.constant 0 : index
    %194 = vector.load %arg1[%193, %c0_86, %c0_87] : memref<8x8x512xbf16, #tpu.memory_space<vmem>>, vector<1x8x512xbf16>
    %195 = vector.shape_cast %194 : vector<1x8x512xbf16> to vector<8x512xbf16>
    %196 = arith.extf %195 : vector<8x512xbf16> to vector<8x512xf32>
    %c0_88 = arith.constant 0 : index
    %c0_89 = arith.constant 0 : index
    %197 = vector.load %arg9[%c0_88, %c0_89] : memref<8x128xbf16, #tpu.memory_space<vmem>>, vector<8x128xbf16>
    %cst_90 = arith.constant dense<0.000000e+00> : vector<8x512xf32>
    %198 = tpu.matmul %197, %3, %cst_90 {dimension_numbers = #tpu.dot_dimension_numbers<[1], [0], [0], [1], [0, 0, 1, 1], [], []>} : vector<8x128xbf16>, vector<128x512xbf16>, vector<8x512xf32> -> vector<8x512xf32>
    %199 = arith.addf %196, %198 : vector<8x512xf32>
    %c7_i32_91 = arith.constant 7 : i32
    %200 = arith.subi %c7_i32_91, %c2_i32 : i32
    %201 = arith.index_cast %200 : i32 to index
    %c0_92 = arith.constant 0 : index
    %c0_93 = arith.constant 0 : index
    %202 = vector.load %arg2[%201, %c0_92, %c0_93] : memref<8x8x512xbf16, #tpu.memory_space<vmem>>, vector<1x8x512xbf16>
    %203 = vector.shape_cast %202 : vector<1x8x512xbf16> to vector<8x512xbf16>
    %204 = arith.extf %203 : vector<8x512xbf16> to vector<8x512xf32>
    %c0_94 = arith.constant 0 : index
    %c0_95 = arith.constant 0 : index
    %205 = vector.load %arg11[%c0_94, %c0_95] : memref<8x128xbf16, #tpu.memory_space<vmem>>, vector<8x128xbf16>
    %cst_96 = arith.constant dense<0.000000e+00> : vector<8x512xf32>
    %206 = tpu.matmul %205, %4, %cst_96 {dimension_numbers = #tpu.dot_dimension_numbers<[1], [0], [0], [1], [0, 0, 1, 1], [], []>} : vector<8x128xbf16>, vector<128x512xbf16>, vector<8x512xf32> -> vector<8x512xf32>
    %207 = arith.addf %204, %206 : vector<8x512xf32>
    %c0_97 = arith.constant 0 : index
    %c0_98 = arith.constant 0 : index
    %208 = vector.load %arg10[%c0_97, %c0_98] : memref<8x128xf32, #tpu.memory_space<vmem>>, vector<8x128xf32>
    %209 = vector.extract_strided_slice %199 {offsets = [0, 0], sizes = [8, 128], strides = [1, 1]} : vector<8x512xf32> to vector<8x128xf32>
    %210 = arith.negf %209 : vector<8x128xf32>
    %211 = math.exp %210 : vector<8x128xf32>
    %cst_99 = arith.constant 1.000000e+00 : f32
    %212 = vector.broadcast %cst_99 : f32 to vector<8x128xf32>
    %213 = arith.addf %212, %211 : vector<8x128xf32>
    %214 = arith.divf %212, %213 : vector<8x128xf32>
    %215 = vector.extract_strided_slice %199 {offsets = [0, 128], sizes = [8, 128], strides = [1, 1]} : vector<8x512xf32> to vector<8x128xf32>
    %216 = arith.negf %215 : vector<8x128xf32>
    %217 = math.exp %216 : vector<8x128xf32>
    %cst_100 = arith.constant 1.000000e+00 : f32
    %218 = vector.broadcast %cst_100 : f32 to vector<8x128xf32>
    %219 = arith.addf %218, %217 : vector<8x128xf32>
    %220 = arith.divf %218, %219 : vector<8x128xf32>
    %221 = vector.extract_strided_slice %199 {offsets = [0, 256], sizes = [8, 128], strides = [1, 1]} : vector<8x512xf32> to vector<8x128xf32>
    %222 = math.tanh %221 : vector<8x128xf32>
    %223 = vector.extract_strided_slice %199 {offsets = [0, 384], sizes = [8, 128], strides = [1, 1]} : vector<8x512xf32> to vector<8x128xf32>
    %224 = arith.negf %223 : vector<8x128xf32>
    %225 = math.exp %224 : vector<8x128xf32>
    %cst_101 = arith.constant 1.000000e+00 : f32
    %226 = vector.broadcast %cst_101 : f32 to vector<8x128xf32>
    %227 = arith.addf %226, %225 : vector<8x128xf32>
    %228 = arith.divf %226, %227 : vector<8x128xf32>
    %229 = arith.mulf %220, %208 : vector<8x128xf32>
    %230 = arith.mulf %214, %222 : vector<8x128xf32>
    %231 = arith.addf %229, %230 : vector<8x128xf32>
    %232 = math.tanh %231 : vector<8x128xf32>
    %233 = arith.mulf %228, %232 : vector<8x128xf32>
    %c0_102 = arith.constant 0 : index
    %c0_103 = arith.constant 0 : index
    %234 = vector.load %arg12[%c0_102, %c0_103] : memref<8x128xf32, #tpu.memory_space<vmem>>, vector<8x128xf32>
    %235 = vector.extract_strided_slice %207 {offsets = [0, 0], sizes = [8, 128], strides = [1, 1]} : vector<8x512xf32> to vector<8x128xf32>
    %236 = arith.negf %235 : vector<8x128xf32>
    %237 = math.exp %236 : vector<8x128xf32>
    %cst_104 = arith.constant 1.000000e+00 : f32
    %238 = vector.broadcast %cst_104 : f32 to vector<8x128xf32>
    %239 = arith.addf %238, %237 : vector<8x128xf32>
    %240 = arith.divf %238, %239 : vector<8x128xf32>
    %241 = vector.extract_strided_slice %207 {offsets = [0, 128], sizes = [8, 128], strides = [1, 1]} : vector<8x512xf32> to vector<8x128xf32>
    %242 = arith.negf %241 : vector<8x128xf32>
    %243 = math.exp %242 : vector<8x128xf32>
    %cst_105 = arith.constant 1.000000e+00 : f32
    %244 = vector.broadcast %cst_105 : f32 to vector<8x128xf32>
    %245 = arith.addf %244, %243 : vector<8x128xf32>
    %246 = arith.divf %244, %245 : vector<8x128xf32>
    %247 = vector.extract_strided_slice %207 {offsets = [0, 256], sizes = [8, 128], strides = [1, 1]} : vector<8x512xf32> to vector<8x128xf32>
    %248 = math.tanh %247 : vector<8x128xf32>
    %249 = vector.extract_strided_slice %207 {offsets = [0, 384], sizes = [8, 128], strides = [1, 1]} : vector<8x512xf32> to vector<8x128xf32>
    %250 = arith.negf %249 : vector<8x128xf32>
    %251 = math.exp %250 : vector<8x128xf32>
    %cst_106 = arith.constant 1.000000e+00 : f32
    %252 = vector.broadcast %cst_106 : f32 to vector<8x128xf32>
    %253 = arith.addf %252, %251 : vector<8x128xf32>
    %254 = arith.divf %252, %253 : vector<8x128xf32>
    %255 = arith.mulf %246, %234 : vector<8x128xf32>
    %256 = arith.mulf %240, %248 : vector<8x128xf32>
    %257 = arith.addf %255, %256 : vector<8x128xf32>
    %258 = math.tanh %257 : vector<8x128xf32>
    %259 = arith.mulf %254, %258 : vector<8x128xf32>
    %260 = arith.truncf %233 : vector<8x128xf32> to vector<8x128xbf16>
    %c0_107 = arith.constant 0 : index
    %c0_108 = arith.constant 0 : index
    %261 = vector.load %arg9[%c0_107, %c0_108] : memref<8x128xbf16, #tpu.memory_space<vmem>>, vector<8x128xbf16>
    tpu.vector_store %arg9[%c0_107, %c0_108], %260 {strides = array<i32>} : memref<8x128xbf16, #tpu.memory_space<vmem>>, vector<8x128xbf16>,
    %c0_109 = arith.constant 0 : index
    %c0_110 = arith.constant 0 : index
    %262 = vector.load %arg10[%c0_109, %c0_110] : memref<8x128xf32, #tpu.memory_space<vmem>>, vector<8x128xf32>
    tpu.vector_store %arg10[%c0_109, %c0_110], %231 {strides = array<i32>} : memref<8x128xf32, #tpu.memory_space<vmem>>, vector<8x128xf32>,
    %263 = arith.truncf %259 : vector<8x128xf32> to vector<8x128xbf16>
    %c0_111 = arith.constant 0 : index
    %c0_112 = arith.constant 0 : index
    %264 = vector.load %arg11[%c0_111, %c0_112] : memref<8x128xbf16, #tpu.memory_space<vmem>>, vector<8x128xbf16>
    tpu.vector_store %arg11[%c0_111, %c0_112], %263 {strides = array<i32>} : memref<8x128xbf16, #tpu.memory_space<vmem>>, vector<8x128xbf16>,
    %c0_113 = arith.constant 0 : index
    %c0_114 = arith.constant 0 : index
    %265 = vector.load %arg12[%c0_113, %c0_114] : memref<8x128xf32, #tpu.memory_space<vmem>>, vector<8x128xf32>
    tpu.vector_store %arg12[%c0_113, %c0_114], %257 {strides = array<i32>} : memref<8x128xf32, #tpu.memory_space<vmem>>, vector<8x128xf32>,
    %266 = arith.index_cast %c2_i32 : i32 to index
    %c0_115 = arith.constant 0 : index
    %c0_116 = arith.constant 0 : index
    %267 = vector.load %arg5[%266, %c0_115, %c0_116] : memref<8x8x128xf32, #tpu.memory_space<vmem>>, vector<1x8x128xf32>
    %268 = vector.shape_cast %267 : vector<1x8x128xf32> to vector<8x128xf32>
    %269 = vector.shape_cast %233 : vector<8x128xf32> to vector<1x8x128xf32>
    tpu.vector_store %arg5[%266, %c0_115, %c0_116], %269 {strides = array<i32>} : memref<8x8x128xf32, #tpu.memory_space<vmem>>, vector<1x8x128xf32>,
    %c7_i32_117 = arith.constant 7 : i32
    %270 = arith.subi %c7_i32_117, %c2_i32 : i32
    %271 = arith.index_cast %270 : i32 to index
    %c0_118 = arith.constant 0 : index
    %c0_119 = arith.constant 0 : index
    %272 = vector.load %arg6[%271, %c0_118, %c0_119] : memref<8x8x128xf32, #tpu.memory_space<vmem>>, vector<1x8x128xf32>
    %273 = vector.shape_cast %272 : vector<1x8x128xf32> to vector<8x128xf32>
    %274 = vector.shape_cast %259 : vector<8x128xf32> to vector<1x8x128xf32>
    tpu.vector_store %arg6[%271, %c0_118, %c0_119], %274 {strides = array<i32>} : memref<8x8x128xf32, #tpu.memory_space<vmem>>, vector<1x8x128xf32>,
    %c8_i32_120 = arith.constant 8 : i32
    %275 = arith.muli %arg0, %c8_i32_120 : i32
    %276 = arith.addi %275, %c2_i32 : i32
    %c0_i32_121 = arith.constant 0 : i32
    %277 = arith.subi %c0_i32_121, %arg0 : i32
    %c8_i32_122 = arith.constant 8 : i32
    %278 = arith.muli %277, %c8_i32_122 : i32
    %c7_i32_123 = arith.constant 7 : i32
    %279 = arith.subi %c7_i32_123, %c2_i32 : i32
    %280 = arith.addi %278, %279 : i32
    %c7_i32_124 = arith.constant 7 : i32
    %281 = arith.cmpi eq, %276, %c7_i32_124 : i32
    %282 = arith.extui %281 : i1 to i32
    %c0_i32_125 = arith.constant 0 : i32
    %283 = arith.cmpi ne, %282, %c0_i32_125 : i32
    scf.if %283 {
      %c0_340 = arith.constant 0 : index
      %c0_341 = arith.constant 0 : index
      %757 = vector.load %arg7[%c0_340, %c0_341] : memref<8x128xf32, #tpu.memory_space<vmem>>, vector<8x128xf32>
      tpu.vector_store %arg7[%c0_340, %c0_341], %231 {strides = array<i32>} : memref<8x128xf32, #tpu.memory_space<vmem>>, vector<8x128xf32>,
    } else {
    }
    %c7_i32_126 = arith.constant 7 : i32
    %284 = arith.cmpi eq, %280, %c7_i32_126 : i32
    %285 = arith.extui %284 : i1 to i32
    %c0_i32_127 = arith.constant 0 : i32
    %286 = arith.cmpi ne, %285, %c0_i32_127 : i32
    scf.if %286 {
      %c0_340 = arith.constant 0 : index
      %c0_341 = arith.constant 0 : index
      %757 = vector.load %arg8[%c0_340, %c0_341] : memref<8x128xf32, #tpu.memory_space<vmem>>, vector<8x128xf32>
      tpu.vector_store %arg8[%c0_340, %c0_341], %257 {strides = array<i32>} : memref<8x128xf32, #tpu.memory_space<vmem>>, vector<8x128xf32>,
    } else {
    }
    %c3_i32 = arith.constant 3 : i32
    %287 = arith.index_cast %c3_i32 : i32 to index
    %c0_128 = arith.constant 0 : index
    %c0_129 = arith.constant 0 : index
    %288 = vector.load %arg1[%287, %c0_128, %c0_129] : memref<8x8x512xbf16, #tpu.memory_space<vmem>>, vector<1x8x512xbf16>
    %289 = vector.shape_cast %288 : vector<1x8x512xbf16> to vector<8x512xbf16>
    %290 = arith.extf %289 : vector<8x512xbf16> to vector<8x512xf32>
    %c0_130 = arith.constant 0 : index
    %c0_131 = arith.constant 0 : index
    %291 = vector.load %arg9[%c0_130, %c0_131] : memref<8x128xbf16, #tpu.memory_space<vmem>>, vector<8x128xbf16>
    %cst_132 = arith.constant dense<0.000000e+00> : vector<8x512xf32>
    %292 = tpu.matmul %291, %3, %cst_132 {dimension_numbers = #tpu.dot_dimension_numbers<[1], [0], [0], [1], [0, 0, 1, 1], [], []>} : vector<8x128xbf16>, vector<128x512xbf16>, vector<8x512xf32> -> vector<8x512xf32>
    %293 = arith.addf %290, %292 : vector<8x512xf32>
    %c7_i32_133 = arith.constant 7 : i32
    %294 = arith.subi %c7_i32_133, %c3_i32 : i32
    %295 = arith.index_cast %294 : i32 to index
    %c0_134 = arith.constant 0 : index
    %c0_135 = arith.constant 0 : index
    %296 = vector.load %arg2[%295, %c0_134, %c0_135] : memref<8x8x512xbf16, #tpu.memory_space<vmem>>, vector<1x8x512xbf16>
    %297 = vector.shape_cast %296 : vector<1x8x512xbf16> to vector<8x512xbf16>
    %298 = arith.extf %297 : vector<8x512xbf16> to vector<8x512xf32>
    %c0_136 = arith.constant 0 : index
    %c0_137 = arith.constant 0 : index
    %299 = vector.load %arg11[%c0_136, %c0_137] : memref<8x128xbf16, #tpu.memory_space<vmem>>, vector<8x128xbf16>
    %cst_138 = arith.constant dense<0.000000e+00> : vector<8x512xf32>
    %300 = tpu.matmul %299, %4, %cst_138 {dimension_numbers = #tpu.dot_dimension_numbers<[1], [0], [0], [1], [0, 0, 1, 1], [], []>} : vector<8x128xbf16>, vector<128x512xbf16>, vector<8x512xf32> -> vector<8x512xf32>
    %301 = arith.addf %298, %300 : vector<8x512xf32>
    %c0_139 = arith.constant 0 : index
    %c0_140 = arith.constant 0 : index
    %302 = vector.load %arg10[%c0_139, %c0_140] : memref<8x128xf32, #tpu.memory_space<vmem>>, vector<8x128xf32>
    %303 = vector.extract_strided_slice %293 {offsets = [0, 0], sizes = [8, 128], strides = [1, 1]} : vector<8x512xf32> to vector<8x128xf32>
    %304 = arith.negf %303 : vector<8x128xf32>
    %305 = math.exp %304 : vector<8x128xf32>
    %cst_141 = arith.constant 1.000000e+00 : f32
    %306 = vector.broadcast %cst_141 : f32 to vector<8x128xf32>
    %307 = arith.addf %306, %305 : vector<8x128xf32>
    %308 = arith.divf %306, %307 : vector<8x128xf32>
    %309 = vector.extract_strided_slice %293 {offsets = [0, 128], sizes = [8, 128], strides = [1, 1]} : vector<8x512xf32> to vector<8x128xf32>
    %310 = arith.negf %309 : vector<8x128xf32>
    %311 = math.exp %310 : vector<8x128xf32>
    %cst_142 = arith.constant 1.000000e+00 : f32
    %312 = vector.broadcast %cst_142 : f32 to vector<8x128xf32>
    %313 = arith.addf %312, %311 : vector<8x128xf32>
    %314 = arith.divf %312, %313 : vector<8x128xf32>
    %315 = vector.extract_strided_slice %293 {offsets = [0, 256], sizes = [8, 128], strides = [1, 1]} : vector<8x512xf32> to vector<8x128xf32>
    %316 = math.tanh %315 : vector<8x128xf32>
    %317 = vector.extract_strided_slice %293 {offsets = [0, 384], sizes = [8, 128], strides = [1, 1]} : vector<8x512xf32> to vector<8x128xf32>
    %318 = arith.negf %317 : vector<8x128xf32>
    %319 = math.exp %318 : vector<8x128xf32>
    %cst_143 = arith.constant 1.000000e+00 : f32
    %320 = vector.broadcast %cst_143 : f32 to vector<8x128xf32>
    %321 = arith.addf %320, %319 : vector<8x128xf32>
    %322 = arith.divf %320, %321 : vector<8x128xf32>
    %323 = arith.mulf %314, %302 : vector<8x128xf32>
    %324 = arith.mulf %308, %316 : vector<8x128xf32>
    %325 = arith.addf %323, %324 : vector<8x128xf32>
    %326 = math.tanh %325 : vector<8x128xf32>
    %327 = arith.mulf %322, %326 : vector<8x128xf32>
    %c0_144 = arith.constant 0 : index
    %c0_145 = arith.constant 0 : index
    %328 = vector.load %arg12[%c0_144, %c0_145] : memref<8x128xf32, #tpu.memory_space<vmem>>, vector<8x128xf32>
    %329 = vector.extract_strided_slice %301 {offsets = [0, 0], sizes = [8, 128], strides = [1, 1]} : vector<8x512xf32> to vector<8x128xf32>
    %330 = arith.negf %329 : vector<8x128xf32>
    %331 = math.exp %330 : vector<8x128xf32>
    %cst_146 = arith.constant 1.000000e+00 : f32
    %332 = vector.broadcast %cst_146 : f32 to vector<8x128xf32>
    %333 = arith.addf %332, %331 : vector<8x128xf32>
    %334 = arith.divf %332, %333 : vector<8x128xf32>
    %335 = vector.extract_strided_slice %301 {offsets = [0, 128], sizes = [8, 128], strides = [1, 1]} : vector<8x512xf32> to vector<8x128xf32>
    %336 = arith.negf %335 : vector<8x128xf32>
    %337 = math.exp %336 : vector<8x128xf32>
    %cst_147 = arith.constant 1.000000e+00 : f32
    %338 = vector.broadcast %cst_147 : f32 to vector<8x128xf32>
    %339 = arith.addf %338, %337 : vector<8x128xf32>
    %340 = arith.divf %338, %339 : vector<8x128xf32>
    %341 = vector.extract_strided_slice %301 {offsets = [0, 256], sizes = [8, 128], strides = [1, 1]} : vector<8x512xf32> to vector<8x128xf32>
    %342 = math.tanh %341 : vector<8x128xf32>
    %343 = vector.extract_strided_slice %301 {offsets = [0, 384], sizes = [8, 128], strides = [1, 1]} : vector<8x512xf32> to vector<8x128xf32>
    %344 = arith.negf %343 : vector<8x128xf32>
    %345 = math.exp %344 : vector<8x128xf32>
    %cst_148 = arith.constant 1.000000e+00 : f32
    %346 = vector.broadcast %cst_148 : f32 to vector<8x128xf32>
    %347 = arith.addf %346, %345 : vector<8x128xf32>
    %348 = arith.divf %346, %347 : vector<8x128xf32>
    %349 = arith.mulf %340, %328 : vector<8x128xf32>
    %350 = arith.mulf %334, %342 : vector<8x128xf32>
    %351 = arith.addf %349, %350 : vector<8x128xf32>
    %352 = math.tanh %351 : vector<8x128xf32>
    %353 = arith.mulf %348, %352 : vector<8x128xf32>
    %354 = arith.truncf %327 : vector<8x128xf32> to vector<8x128xbf16>
    %c0_149 = arith.constant 0 : index
    %c0_150 = arith.constant 0 : index
    %355 = vector.load %arg9[%c0_149, %c0_150] : memref<8x128xbf16, #tpu.memory_space<vmem>>, vector<8x128xbf16>
    tpu.vector_store %arg9[%c0_149, %c0_150], %354 {strides = array<i32>} : memref<8x128xbf16, #tpu.memory_space<vmem>>, vector<8x128xbf16>,
    %c0_151 = arith.constant 0 : index
    %c0_152 = arith.constant 0 : index
    %356 = vector.load %arg10[%c0_151, %c0_152] : memref<8x128xf32, #tpu.memory_space<vmem>>, vector<8x128xf32>
    tpu.vector_store %arg10[%c0_151, %c0_152], %325 {strides = array<i32>} : memref<8x128xf32, #tpu.memory_space<vmem>>, vector<8x128xf32>,
    %357 = arith.truncf %353 : vector<8x128xf32> to vector<8x128xbf16>
    %c0_153 = arith.constant 0 : index
    %c0_154 = arith.constant 0 : index
    %358 = vector.load %arg11[%c0_153, %c0_154] : memref<8x128xbf16, #tpu.memory_space<vmem>>, vector<8x128xbf16>
    tpu.vector_store %arg11[%c0_153, %c0_154], %357 {strides = array<i32>} : memref<8x128xbf16, #tpu.memory_space<vmem>>, vector<8x128xbf16>,
    %c0_155 = arith.constant 0 : index
    %c0_156 = arith.constant 0 : index
    %359 = vector.load %arg12[%c0_155, %c0_156] : memref<8x128xf32, #tpu.memory_space<vmem>>, vector<8x128xf32>
    tpu.vector_store %arg12[%c0_155, %c0_156], %351 {strides = array<i32>} : memref<8x128xf32, #tpu.memory_space<vmem>>, vector<8x128xf32>,
    %360 = arith.index_cast %c3_i32 : i32 to index
    %c0_157 = arith.constant 0 : index
    %c0_158 = arith.constant 0 : index
    %361 = vector.load %arg5[%360, %c0_157, %c0_158] : memref<8x8x128xf32, #tpu.memory_space<vmem>>, vector<1x8x128xf32>
    %362 = vector.shape_cast %361 : vector<1x8x128xf32> to vector<8x128xf32>
    %363 = vector.shape_cast %327 : vector<8x128xf32> to vector<1x8x128xf32>
    tpu.vector_store %arg5[%360, %c0_157, %c0_158], %363 {strides = array<i32>} : memref<8x8x128xf32, #tpu.memory_space<vmem>>, vector<1x8x128xf32>,
    %c7_i32_159 = arith.constant 7 : i32
    %364 = arith.subi %c7_i32_159, %c3_i32 : i32
    %365 = arith.index_cast %364 : i32 to index
    %c0_160 = arith.constant 0 : index
    %c0_161 = arith.constant 0 : index
    %366 = vector.load %arg6[%365, %c0_160, %c0_161] : memref<8x8x128xf32, #tpu.memory_space<vmem>>, vector<1x8x128xf32>
    %367 = vector.shape_cast %366 : vector<1x8x128xf32> to vector<8x128xf32>
    %368 = vector.shape_cast %353 : vector<8x128xf32> to vector<1x8x128xf32>
    tpu.vector_store %arg6[%365, %c0_160, %c0_161], %368 {strides = array<i32>} : memref<8x8x128xf32, #tpu.memory_space<vmem>>, vector<1x8x128xf32>,
    %c8_i32_162 = arith.constant 8 : i32
    %369 = arith.muli %arg0, %c8_i32_162 : i32
    %370 = arith.addi %369, %c3_i32 : i32
    %c0_i32_163 = arith.constant 0 : i32
    %371 = arith.subi %c0_i32_163, %arg0 : i32
    %c8_i32_164 = arith.constant 8 : i32
    %372 = arith.muli %371, %c8_i32_164 : i32
    %c7_i32_165 = arith.constant 7 : i32
    %373 = arith.subi %c7_i32_165, %c3_i32 : i32
    %374 = arith.addi %372, %373 : i32
    %c7_i32_166 = arith.constant 7 : i32
    %375 = arith.cmpi eq, %370, %c7_i32_166 : i32
    %376 = arith.extui %375 : i1 to i32
    %c0_i32_167 = arith.constant 0 : i32
    %377 = arith.cmpi ne, %376, %c0_i32_167 : i32
    scf.if %377 {
      %c0_340 = arith.constant 0 : index
      %c0_341 = arith.constant 0 : index
      %757 = vector.load %arg7[%c0_340, %c0_341] : memref<8x128xf32, #tpu.memory_space<vmem>>, vector<8x128xf32>
      tpu.vector_store %arg7[%c0_340, %c0_341], %325 {strides = array<i32>} : memref<8x128xf32, #tpu.memory_space<vmem>>, vector<8x128xf32>,
    } else {
    }
    %c7_i32_168 = arith.constant 7 : i32
    %378 = arith.cmpi eq, %374, %c7_i32_168 : i32
    %379 = arith.extui %378 : i1 to i32
    %c0_i32_169 = arith.constant 0 : i32
    %380 = arith.cmpi ne, %379, %c0_i32_169 : i32
    scf.if %380 {
      %c0_340 = arith.constant 0 : index
      %c0_341 = arith.constant 0 : index
      %757 = vector.load %arg8[%c0_340, %c0_341] : memref<8x128xf32, #tpu.memory_space<vmem>>, vector<8x128xf32>
      tpu.vector_store %arg8[%c0_340, %c0_341], %351 {strides = array<i32>} : memref<8x128xf32, #tpu.memory_space<vmem>>, vector<8x128xf32>,
    } else {
    }
    %c4_i32 = arith.constant 4 : i32
    %381 = arith.index_cast %c4_i32 : i32 to index
    %c0_170 = arith.constant 0 : index
    %c0_171 = arith.constant 0 : index
    %382 = vector.load %arg1[%381, %c0_170, %c0_171] : memref<8x8x512xbf16, #tpu.memory_space<vmem>>, vector<1x8x512xbf16>
    %383 = vector.shape_cast %382 : vector<1x8x512xbf16> to vector<8x512xbf16>
    %384 = arith.extf %383 : vector<8x512xbf16> to vector<8x512xf32>
    %c0_172 = arith.constant 0 : index
    %c0_173 = arith.constant 0 : index
    %385 = vector.load %arg9[%c0_172, %c0_173] : memref<8x128xbf16, #tpu.memory_space<vmem>>, vector<8x128xbf16>
    %cst_174 = arith.constant dense<0.000000e+00> : vector<8x512xf32>
    %386 = tpu.matmul %385, %3, %cst_174 {dimension_numbers = #tpu.dot_dimension_numbers<[1], [0], [0], [1], [0, 0, 1, 1], [], []>} : vector<8x128xbf16>, vector<128x512xbf16>, vector<8x512xf32> -> vector<8x512xf32>
    %387 = arith.addf %384, %386 : vector<8x512xf32>
    %c7_i32_175 = arith.constant 7 : i32
    %388 = arith.subi %c7_i32_175, %c4_i32 : i32
    %389 = arith.index_cast %388 : i32 to index
    %c0_176 = arith.constant 0 : index
    %c0_177 = arith.constant 0 : index
    %390 = vector.load %arg2[%389, %c0_176, %c0_177] : memref<8x8x512xbf16, #tpu.memory_space<vmem>>, vector<1x8x512xbf16>
    %391 = vector.shape_cast %390 : vector<1x8x512xbf16> to vector<8x512xbf16>
    %392 = arith.extf %391 : vector<8x512xbf16> to vector<8x512xf32>
    %c0_178 = arith.constant 0 : index
    %c0_179 = arith.constant 0 : index
    %393 = vector.load %arg11[%c0_178, %c0_179] : memref<8x128xbf16, #tpu.memory_space<vmem>>, vector<8x128xbf16>
    %cst_180 = arith.constant dense<0.000000e+00> : vector<8x512xf32>
    %394 = tpu.matmul %393, %4, %cst_180 {dimension_numbers = #tpu.dot_dimension_numbers<[1], [0], [0], [1], [0, 0, 1, 1], [], []>} : vector<8x128xbf16>, vector<128x512xbf16>, vector<8x512xf32> -> vector<8x512xf32>
    %395 = arith.addf %392, %394 : vector<8x512xf32>
    %c0_181 = arith.constant 0 : index
    %c0_182 = arith.constant 0 : index
    %396 = vector.load %arg10[%c0_181, %c0_182] : memref<8x128xf32, #tpu.memory_space<vmem>>, vector<8x128xf32>
    %397 = vector.extract_strided_slice %387 {offsets = [0, 0], sizes = [8, 128], strides = [1, 1]} : vector<8x512xf32> to vector<8x128xf32>
    %398 = arith.negf %397 : vector<8x128xf32>
    %399 = math.exp %398 : vector<8x128xf32>
    %cst_183 = arith.constant 1.000000e+00 : f32
    %400 = vector.broadcast %cst_183 : f32 to vector<8x128xf32>
    %401 = arith.addf %400, %399 : vector<8x128xf32>
    %402 = arith.divf %400, %401 : vector<8x128xf32>
    %403 = vector.extract_strided_slice %387 {offsets = [0, 128], sizes = [8, 128], strides = [1, 1]} : vector<8x512xf32> to vector<8x128xf32>
    %404 = arith.negf %403 : vector<8x128xf32>
    %405 = math.exp %404 : vector<8x128xf32>
    %cst_184 = arith.constant 1.000000e+00 : f32
    %406 = vector.broadcast %cst_184 : f32 to vector<8x128xf32>
    %407 = arith.addf %406, %405 : vector<8x128xf32>
    %408 = arith.divf %406, %407 : vector<8x128xf32>
    %409 = vector.extract_strided_slice %387 {offsets = [0, 256], sizes = [8, 128], strides = [1, 1]} : vector<8x512xf32> to vector<8x128xf32>
    %410 = math.tanh %409 : vector<8x128xf32>
    %411 = vector.extract_strided_slice %387 {offsets = [0, 384], sizes = [8, 128], strides = [1, 1]} : vector<8x512xf32> to vector<8x128xf32>
    %412 = arith.negf %411 : vector<8x128xf32>
    %413 = math.exp %412 : vector<8x128xf32>
    %cst_185 = arith.constant 1.000000e+00 : f32
    %414 = vector.broadcast %cst_185 : f32 to vector<8x128xf32>
    %415 = arith.addf %414, %413 : vector<8x128xf32>
    %416 = arith.divf %414, %415 : vector<8x128xf32>
    %417 = arith.mulf %408, %396 : vector<8x128xf32>
    %418 = arith.mulf %402, %410 : vector<8x128xf32>
    %419 = arith.addf %417, %418 : vector<8x128xf32>
    %420 = math.tanh %419 : vector<8x128xf32>
    %421 = arith.mulf %416, %420 : vector<8x128xf32>
    %c0_186 = arith.constant 0 : index
    %c0_187 = arith.constant 0 : index
    %422 = vector.load %arg12[%c0_186, %c0_187] : memref<8x128xf32, #tpu.memory_space<vmem>>, vector<8x128xf32>
    %423 = vector.extract_strided_slice %395 {offsets = [0, 0], sizes = [8, 128], strides = [1, 1]} : vector<8x512xf32> to vector<8x128xf32>
    %424 = arith.negf %423 : vector<8x128xf32>
    %425 = math.exp %424 : vector<8x128xf32>
    %cst_188 = arith.constant 1.000000e+00 : f32
    %426 = vector.broadcast %cst_188 : f32 to vector<8x128xf32>
    %427 = arith.addf %426, %425 : vector<8x128xf32>
    %428 = arith.divf %426, %427 : vector<8x128xf32>
    %429 = vector.extract_strided_slice %395 {offsets = [0, 128], sizes = [8, 128], strides = [1, 1]} : vector<8x512xf32> to vector<8x128xf32>
    %430 = arith.negf %429 : vector<8x128xf32>
    %431 = math.exp %430 : vector<8x128xf32>
    %cst_189 = arith.constant 1.000000e+00 : f32
    %432 = vector.broadcast %cst_189 : f32 to vector<8x128xf32>
    %433 = arith.addf %432, %431 : vector<8x128xf32>
    %434 = arith.divf %432, %433 : vector<8x128xf32>
    %435 = vector.extract_strided_slice %395 {offsets = [0, 256], sizes = [8, 128], strides = [1, 1]} : vector<8x512xf32> to vector<8x128xf32>
    %436 = math.tanh %435 : vector<8x128xf32>
    %437 = vector.extract_strided_slice %395 {offsets = [0, 384], sizes = [8, 128], strides = [1, 1]} : vector<8x512xf32> to vector<8x128xf32>
    %438 = arith.negf %437 : vector<8x128xf32>
    %439 = math.exp %438 : vector<8x128xf32>
    %cst_190 = arith.constant 1.000000e+00 : f32
    %440 = vector.broadcast %cst_190 : f32 to vector<8x128xf32>
    %441 = arith.addf %440, %439 : vector<8x128xf32>
    %442 = arith.divf %440, %441 : vector<8x128xf32>
    %443 = arith.mulf %434, %422 : vector<8x128xf32>
    %444 = arith.mulf %428, %436 : vector<8x128xf32>
    %445 = arith.addf %443, %444 : vector<8x128xf32>
    %446 = math.tanh %445 : vector<8x128xf32>
    %447 = arith.mulf %442, %446 : vector<8x128xf32>
    %448 = arith.truncf %421 : vector<8x128xf32> to vector<8x128xbf16>
    %c0_191 = arith.constant 0 : index
    %c0_192 = arith.constant 0 : index
    %449 = vector.load %arg9[%c0_191, %c0_192] : memref<8x128xbf16, #tpu.memory_space<vmem>>, vector<8x128xbf16>
    tpu.vector_store %arg9[%c0_191, %c0_192], %448 {strides = array<i32>} : memref<8x128xbf16, #tpu.memory_space<vmem>>, vector<8x128xbf16>,
    %c0_193 = arith.constant 0 : index
    %c0_194 = arith.constant 0 : index
    %450 = vector.load %arg10[%c0_193, %c0_194] : memref<8x128xf32, #tpu.memory_space<vmem>>, vector<8x128xf32>
    tpu.vector_store %arg10[%c0_193, %c0_194], %419 {strides = array<i32>} : memref<8x128xf32, #tpu.memory_space<vmem>>, vector<8x128xf32>,
    %451 = arith.truncf %447 : vector<8x128xf32> to vector<8x128xbf16>
    %c0_195 = arith.constant 0 : index
    %c0_196 = arith.constant 0 : index
    %452 = vector.load %arg11[%c0_195, %c0_196] : memref<8x128xbf16, #tpu.memory_space<vmem>>, vector<8x128xbf16>
    tpu.vector_store %arg11[%c0_195, %c0_196], %451 {strides = array<i32>} : memref<8x128xbf16, #tpu.memory_space<vmem>>, vector<8x128xbf16>,
    %c0_197 = arith.constant 0 : index
    %c0_198 = arith.constant 0 : index
    %453 = vector.load %arg12[%c0_197, %c0_198] : memref<8x128xf32, #tpu.memory_space<vmem>>, vector<8x128xf32>
    tpu.vector_store %arg12[%c0_197, %c0_198], %445 {strides = array<i32>} : memref<8x128xf32, #tpu.memory_space<vmem>>, vector<8x128xf32>,
    %454 = arith.index_cast %c4_i32 : i32 to index
    %c0_199 = arith.constant 0 : index
    %c0_200 = arith.constant 0 : index
    %455 = vector.load %arg5[%454, %c0_199, %c0_200] : memref<8x8x128xf32, #tpu.memory_space<vmem>>, vector<1x8x128xf32>
    %456 = vector.shape_cast %455 : vector<1x8x128xf32> to vector<8x128xf32>
    %457 = vector.shape_cast %421 : vector<8x128xf32> to vector<1x8x128xf32>
    tpu.vector_store %arg5[%454, %c0_199, %c0_200], %457 {strides = array<i32>} : memref<8x8x128xf32, #tpu.memory_space<vmem>>, vector<1x8x128xf32>,
    %c7_i32_201 = arith.constant 7 : i32
    %458 = arith.subi %c7_i32_201, %c4_i32 : i32
    %459 = arith.index_cast %458 : i32 to index
    %c0_202 = arith.constant 0 : index
    %c0_203 = arith.constant 0 : index
    %460 = vector.load %arg6[%459, %c0_202, %c0_203] : memref<8x8x128xf32, #tpu.memory_space<vmem>>, vector<1x8x128xf32>
    %461 = vector.shape_cast %460 : vector<1x8x128xf32> to vector<8x128xf32>
    %462 = vector.shape_cast %447 : vector<8x128xf32> to vector<1x8x128xf32>
    tpu.vector_store %arg6[%459, %c0_202, %c0_203], %462 {strides = array<i32>} : memref<8x8x128xf32, #tpu.memory_space<vmem>>, vector<1x8x128xf32>,
    %c8_i32_204 = arith.constant 8 : i32
    %463 = arith.muli %arg0, %c8_i32_204 : i32
    %464 = arith.addi %463, %c4_i32 : i32
    %c0_i32_205 = arith.constant 0 : i32
    %465 = arith.subi %c0_i32_205, %arg0 : i32
    %c8_i32_206 = arith.constant 8 : i32
    %466 = arith.muli %465, %c8_i32_206 : i32
    %c7_i32_207 = arith.constant 7 : i32
    %467 = arith.subi %c7_i32_207, %c4_i32 : i32
    %468 = arith.addi %466, %467 : i32
    %c7_i32_208 = arith.constant 7 : i32
    %469 = arith.cmpi eq, %464, %c7_i32_208 : i32
    %470 = arith.extui %469 : i1 to i32
    %c0_i32_209 = arith.constant 0 : i32
    %471 = arith.cmpi ne, %470, %c0_i32_209 : i32
    scf.if %471 {
      %c0_340 = arith.constant 0 : index
      %c0_341 = arith.constant 0 : index
      %757 = vector.load %arg7[%c0_340, %c0_341] : memref<8x128xf32, #tpu.memory_space<vmem>>, vector<8x128xf32>
      tpu.vector_store %arg7[%c0_340, %c0_341], %419 {strides = array<i32>} : memref<8x128xf32, #tpu.memory_space<vmem>>, vector<8x128xf32>,
    } else {
    }
    %c7_i32_210 = arith.constant 7 : i32
    %472 = arith.cmpi eq, %468, %c7_i32_210 : i32
    %473 = arith.extui %472 : i1 to i32
    %c0_i32_211 = arith.constant 0 : i32
    %474 = arith.cmpi ne, %473, %c0_i32_211 : i32
    scf.if %474 {
      %c0_340 = arith.constant 0 : index
      %c0_341 = arith.constant 0 : index
      %757 = vector.load %arg8[%c0_340, %c0_341] : memref<8x128xf32, #tpu.memory_space<vmem>>, vector<8x128xf32>
      tpu.vector_store %arg8[%c0_340, %c0_341], %445 {strides = array<i32>} : memref<8x128xf32, #tpu.memory_space<vmem>>, vector<8x128xf32>,
    } else {
    }
    %c5_i32 = arith.constant 5 : i32
    %475 = arith.index_cast %c5_i32 : i32 to index
    %c0_212 = arith.constant 0 : index
    %c0_213 = arith.constant 0 : index
    %476 = vector.load %arg1[%475, %c0_212, %c0_213] : memref<8x8x512xbf16, #tpu.memory_space<vmem>>, vector<1x8x512xbf16>
    %477 = vector.shape_cast %476 : vector<1x8x512xbf16> to vector<8x512xbf16>
    %478 = arith.extf %477 : vector<8x512xbf16> to vector<8x512xf32>
    %c0_214 = arith.constant 0 : index
    %c0_215 = arith.constant 0 : index
    %479 = vector.load %arg9[%c0_214, %c0_215] : memref<8x128xbf16, #tpu.memory_space<vmem>>, vector<8x128xbf16>
    %cst_216 = arith.constant dense<0.000000e+00> : vector<8x512xf32>
    %480 = tpu.matmul %479, %3, %cst_216 {dimension_numbers = #tpu.dot_dimension_numbers<[1], [0], [0], [1], [0, 0, 1, 1], [], []>} : vector<8x128xbf16>, vector<128x512xbf16>, vector<8x512xf32> -> vector<8x512xf32>
    %481 = arith.addf %478, %480 : vector<8x512xf32>
    %c7_i32_217 = arith.constant 7 : i32
    %482 = arith.subi %c7_i32_217, %c5_i32 : i32
    %483 = arith.index_cast %482 : i32 to index
    %c0_218 = arith.constant 0 : index
    %c0_219 = arith.constant 0 : index
    %484 = vector.load %arg2[%483, %c0_218, %c0_219] : memref<8x8x512xbf16, #tpu.memory_space<vmem>>, vector<1x8x512xbf16>
    %485 = vector.shape_cast %484 : vector<1x8x512xbf16> to vector<8x512xbf16>
    %486 = arith.extf %485 : vector<8x512xbf16> to vector<8x512xf32>
    %c0_220 = arith.constant 0 : index
    %c0_221 = arith.constant 0 : index
    %487 = vector.load %arg11[%c0_220, %c0_221] : memref<8x128xbf16, #tpu.memory_space<vmem>>, vector<8x128xbf16>
    %cst_222 = arith.constant dense<0.000000e+00> : vector<8x512xf32>
    %488 = tpu.matmul %487, %4, %cst_222 {dimension_numbers = #tpu.dot_dimension_numbers<[1], [0], [0], [1], [0, 0, 1, 1], [], []>} : vector<8x128xbf16>, vector<128x512xbf16>, vector<8x512xf32> -> vector<8x512xf32>
    %489 = arith.addf %486, %488 : vector<8x512xf32>
    %c0_223 = arith.constant 0 : index
    %c0_224 = arith.constant 0 : index
    %490 = vector.load %arg10[%c0_223, %c0_224] : memref<8x128xf32, #tpu.memory_space<vmem>>, vector<8x128xf32>
    %491 = vector.extract_strided_slice %481 {offsets = [0, 0], sizes = [8, 128], strides = [1, 1]} : vector<8x512xf32> to vector<8x128xf32>
    %492 = arith.negf %491 : vector<8x128xf32>
    %493 = math.exp %492 : vector<8x128xf32>
    %cst_225 = arith.constant 1.000000e+00 : f32
    %494 = vector.broadcast %cst_225 : f32 to vector<8x128xf32>
    %495 = arith.addf %494, %493 : vector<8x128xf32>
    %496 = arith.divf %494, %495 : vector<8x128xf32>
    %497 = vector.extract_strided_slice %481 {offsets = [0, 128], sizes = [8, 128], strides = [1, 1]} : vector<8x512xf32> to vector<8x128xf32>
    %498 = arith.negf %497 : vector<8x128xf32>
    %499 = math.exp %498 : vector<8x128xf32>
    %cst_226 = arith.constant 1.000000e+00 : f32
    %500 = vector.broadcast %cst_226 : f32 to vector<8x128xf32>
    %501 = arith.addf %500, %499 : vector<8x128xf32>
    %502 = arith.divf %500, %501 : vector<8x128xf32>
    %503 = vector.extract_strided_slice %481 {offsets = [0, 256], sizes = [8, 128], strides = [1, 1]} : vector<8x512xf32> to vector<8x128xf32>
    %504 = math.tanh %503 : vector<8x128xf32>
    %505 = vector.extract_strided_slice %481 {offsets = [0, 384], sizes = [8, 128], strides = [1, 1]} : vector<8x512xf32> to vector<8x128xf32>
    %506 = arith.negf %505 : vector<8x128xf32>
    %507 = math.exp %506 : vector<8x128xf32>
    %cst_227 = arith.constant 1.000000e+00 : f32
    %508 = vector.broadcast %cst_227 : f32 to vector<8x128xf32>
    %509 = arith.addf %508, %507 : vector<8x128xf32>
    %510 = arith.divf %508, %509 : vector<8x128xf32>
    %511 = arith.mulf %502, %490 : vector<8x128xf32>
    %512 = arith.mulf %496, %504 : vector<8x128xf32>
    %513 = arith.addf %511, %512 : vector<8x128xf32>
    %514 = math.tanh %513 : vector<8x128xf32>
    %515 = arith.mulf %510, %514 : vector<8x128xf32>
    %c0_228 = arith.constant 0 : index
    %c0_229 = arith.constant 0 : index
    %516 = vector.load %arg12[%c0_228, %c0_229] : memref<8x128xf32, #tpu.memory_space<vmem>>, vector<8x128xf32>
    %517 = vector.extract_strided_slice %489 {offsets = [0, 0], sizes = [8, 128], strides = [1, 1]} : vector<8x512xf32> to vector<8x128xf32>
    %518 = arith.negf %517 : vector<8x128xf32>
    %519 = math.exp %518 : vector<8x128xf32>
    %cst_230 = arith.constant 1.000000e+00 : f32
    %520 = vector.broadcast %cst_230 : f32 to vector<8x128xf32>
    %521 = arith.addf %520, %519 : vector<8x128xf32>
    %522 = arith.divf %520, %521 : vector<8x128xf32>
    %523 = vector.extract_strided_slice %489 {offsets = [0, 128], sizes = [8, 128], strides = [1, 1]} : vector<8x512xf32> to vector<8x128xf32>
    %524 = arith.negf %523 : vector<8x128xf32>
    %525 = math.exp %524 : vector<8x128xf32>
    %cst_231 = arith.constant 1.000000e+00 : f32
    %526 = vector.broadcast %cst_231 : f32 to vector<8x128xf32>
    %527 = arith.addf %526, %525 : vector<8x128xf32>
    %528 = arith.divf %526, %527 : vector<8x128xf32>
    %529 = vector.extract_strided_slice %489 {offsets = [0, 256], sizes = [8, 128], strides = [1, 1]} : vector<8x512xf32> to vector<8x128xf32>
    %530 = math.tanh %529 : vector<8x128xf32>
    %531 = vector.extract_strided_slice %489 {offsets = [0, 384], sizes = [8, 128], strides = [1, 1]} : vector<8x512xf32> to vector<8x128xf32>
    %532 = arith.negf %531 : vector<8x128xf32>
    %533 = math.exp %532 : vector<8x128xf32>
    %cst_232 = arith.constant 1.000000e+00 : f32
    %534 = vector.broadcast %cst_232 : f32 to vector<8x128xf32>
    %535 = arith.addf %534, %533 : vector<8x128xf32>
    %536 = arith.divf %534, %535 : vector<8x128xf32>
    %537 = arith.mulf %528, %516 : vector<8x128xf32>
    %538 = arith.mulf %522, %530 : vector<8x128xf32>
    %539 = arith.addf %537, %538 : vector<8x128xf32>
    %540 = math.tanh %539 : vector<8x128xf32>
    %541 = arith.mulf %536, %540 : vector<8x128xf32>
    %542 = arith.truncf %515 : vector<8x128xf32> to vector<8x128xbf16>
    %c0_233 = arith.constant 0 : index
    %c0_234 = arith.constant 0 : index
    %543 = vector.load %arg9[%c0_233, %c0_234] : memref<8x128xbf16, #tpu.memory_space<vmem>>, vector<8x128xbf16>
    tpu.vector_store %arg9[%c0_233, %c0_234], %542 {strides = array<i32>} : memref<8x128xbf16, #tpu.memory_space<vmem>>, vector<8x128xbf16>,
    %c0_235 = arith.constant 0 : index
    %c0_236 = arith.constant 0 : index
    %544 = vector.load %arg10[%c0_235, %c0_236] : memref<8x128xf32, #tpu.memory_space<vmem>>, vector<8x128xf32>
    tpu.vector_store %arg10[%c0_235, %c0_236], %513 {strides = array<i32>} : memref<8x128xf32, #tpu.memory_space<vmem>>, vector<8x128xf32>,
    %545 = arith.truncf %541 : vector<8x128xf32> to vector<8x128xbf16>
    %c0_237 = arith.constant 0 : index
    %c0_238 = arith.constant 0 : index
    %546 = vector.load %arg11[%c0_237, %c0_238] : memref<8x128xbf16, #tpu.memory_space<vmem>>, vector<8x128xbf16>
    tpu.vector_store %arg11[%c0_237, %c0_238], %545 {strides = array<i32>} : memref<8x128xbf16, #tpu.memory_space<vmem>>, vector<8x128xbf16>,
    %c0_239 = arith.constant 0 : index
    %c0_240 = arith.constant 0 : index
    %547 = vector.load %arg12[%c0_239, %c0_240] : memref<8x128xf32, #tpu.memory_space<vmem>>, vector<8x128xf32>
    tpu.vector_store %arg12[%c0_239, %c0_240], %539 {strides = array<i32>} : memref<8x128xf32, #tpu.memory_space<vmem>>, vector<8x128xf32>,
    %548 = arith.index_cast %c5_i32 : i32 to index
    %c0_241 = arith.constant 0 : index
    %c0_242 = arith.constant 0 : index
    %549 = vector.load %arg5[%548, %c0_241, %c0_242] : memref<8x8x128xf32, #tpu.memory_space<vmem>>, vector<1x8x128xf32>
    %550 = vector.shape_cast %549 : vector<1x8x128xf32> to vector<8x128xf32>
    %551 = vector.shape_cast %515 : vector<8x128xf32> to vector<1x8x128xf32>
    tpu.vector_store %arg5[%548, %c0_241, %c0_242], %551 {strides = array<i32>} : memref<8x8x128xf32, #tpu.memory_space<vmem>>, vector<1x8x128xf32>,
    %c7_i32_243 = arith.constant 7 : i32
    %552 = arith.subi %c7_i32_243, %c5_i32 : i32
    %553 = arith.index_cast %552 : i32 to index
    %c0_244 = arith.constant 0 : index
    %c0_245 = arith.constant 0 : index
    %554 = vector.load %arg6[%553, %c0_244, %c0_245] : memref<8x8x128xf32, #tpu.memory_space<vmem>>, vector<1x8x128xf32>
    %555 = vector.shape_cast %554 : vector<1x8x128xf32> to vector<8x128xf32>
    %556 = vector.shape_cast %541 : vector<8x128xf32> to vector<1x8x128xf32>
    tpu.vector_store %arg6[%553, %c0_244, %c0_245], %556 {strides = array<i32>} : memref<8x8x128xf32, #tpu.memory_space<vmem>>, vector<1x8x128xf32>,
    %c8_i32_246 = arith.constant 8 : i32
    %557 = arith.muli %arg0, %c8_i32_246 : i32
    %558 = arith.addi %557, %c5_i32 : i32
    %c0_i32_247 = arith.constant 0 : i32
    %559 = arith.subi %c0_i32_247, %arg0 : i32
    %c8_i32_248 = arith.constant 8 : i32
    %560 = arith.muli %559, %c8_i32_248 : i32
    %c7_i32_249 = arith.constant 7 : i32
    %561 = arith.subi %c7_i32_249, %c5_i32 : i32
    %562 = arith.addi %560, %561 : i32
    %c7_i32_250 = arith.constant 7 : i32
    %563 = arith.cmpi eq, %558, %c7_i32_250 : i32
    %564 = arith.extui %563 : i1 to i32
    %c0_i32_251 = arith.constant 0 : i32
    %565 = arith.cmpi ne, %564, %c0_i32_251 : i32
    scf.if %565 {
      %c0_340 = arith.constant 0 : index
      %c0_341 = arith.constant 0 : index
      %757 = vector.load %arg7[%c0_340, %c0_341] : memref<8x128xf32, #tpu.memory_space<vmem>>, vector<8x128xf32>
      tpu.vector_store %arg7[%c0_340, %c0_341], %513 {strides = array<i32>} : memref<8x128xf32, #tpu.memory_space<vmem>>, vector<8x128xf32>,
    } else {
    }
    %c7_i32_252 = arith.constant 7 : i32
    %566 = arith.cmpi eq, %562, %c7_i32_252 : i32
    %567 = arith.extui %566 : i1 to i32
    %c0_i32_253 = arith.constant 0 : i32
    %568 = arith.cmpi ne, %567, %c0_i32_253 : i32
    scf.if %568 {
      %c0_340 = arith.constant 0 : index
      %c0_341 = arith.constant 0 : index
      %757 = vector.load %arg8[%c0_340, %c0_341] : memref<8x128xf32, #tpu.memory_space<vmem>>, vector<8x128xf32>
      tpu.vector_store %arg8[%c0_340, %c0_341], %539 {strides = array<i32>} : memref<8x128xf32, #tpu.memory_space<vmem>>, vector<8x128xf32>,
    } else {
    }
    %c6_i32 = arith.constant 6 : i32
    %569 = arith.index_cast %c6_i32 : i32 to index
    %c0_254 = arith.constant 0 : index
    %c0_255 = arith.constant 0 : index
    %570 = vector.load %arg1[%569, %c0_254, %c0_255] : memref<8x8x512xbf16, #tpu.memory_space<vmem>>, vector<1x8x512xbf16>
    %571 = vector.shape_cast %570 : vector<1x8x512xbf16> to vector<8x512xbf16>
    %572 = arith.extf %571 : vector<8x512xbf16> to vector<8x512xf32>
    %c0_256 = arith.constant 0 : index
    %c0_257 = arith.constant 0 : index
    %573 = vector.load %arg9[%c0_256, %c0_257] : memref<8x128xbf16, #tpu.memory_space<vmem>>, vector<8x128xbf16>
    %cst_258 = arith.constant dense<0.000000e+00> : vector<8x512xf32>
    %574 = tpu.matmul %573, %3, %cst_258 {dimension_numbers = #tpu.dot_dimension_numbers<[1], [0], [0], [1], [0, 0, 1, 1], [], []>} : vector<8x128xbf16>, vector<128x512xbf16>, vector<8x512xf32> -> vector<8x512xf32>
    %575 = arith.addf %572, %574 : vector<8x512xf32>
    %c7_i32_259 = arith.constant 7 : i32
    %576 = arith.subi %c7_i32_259, %c6_i32 : i32
    %577 = arith.index_cast %576 : i32 to index
    %c0_260 = arith.constant 0 : index
    %c0_261 = arith.constant 0 : index
    %578 = vector.load %arg2[%577, %c0_260, %c0_261] : memref<8x8x512xbf16, #tpu.memory_space<vmem>>, vector<1x8x512xbf16>
    %579 = vector.shape_cast %578 : vector<1x8x512xbf16> to vector<8x512xbf16>
    %580 = arith.extf %579 : vector<8x512xbf16> to vector<8x512xf32>
    %c0_262 = arith.constant 0 : index
    %c0_263 = arith.constant 0 : index
    %581 = vector.load %arg11[%c0_262, %c0_263] : memref<8x128xbf16, #tpu.memory_space<vmem>>, vector<8x128xbf16>
    %cst_264 = arith.constant dense<0.000000e+00> : vector<8x512xf32>
    %582 = tpu.matmul %581, %4, %cst_264 {dimension_numbers = #tpu.dot_dimension_numbers<[1], [0], [0], [1], [0, 0, 1, 1], [], []>} : vector<8x128xbf16>, vector<128x512xbf16>, vector<8x512xf32> -> vector<8x512xf32>
    %583 = arith.addf %580, %582 : vector<8x512xf32>
    %c0_265 = arith.constant 0 : index
    %c0_266 = arith.constant 0 : index
    %584 = vector.load %arg10[%c0_265, %c0_266] : memref<8x128xf32, #tpu.memory_space<vmem>>, vector<8x128xf32>
    %585 = vector.extract_strided_slice %575 {offsets = [0, 0], sizes = [8, 128], strides = [1, 1]} : vector<8x512xf32> to vector<8x128xf32>
    %586 = arith.negf %585 : vector<8x128xf32>
    %587 = math.exp %586 : vector<8x128xf32>
    %cst_267 = arith.constant 1.000000e+00 : f32
    %588 = vector.broadcast %cst_267 : f32 to vector<8x128xf32>
    %589 = arith.addf %588, %587 : vector<8x128xf32>
    %590 = arith.divf %588, %589 : vector<8x128xf32>
    %591 = vector.extract_strided_slice %575 {offsets = [0, 128], sizes = [8, 128], strides = [1, 1]} : vector<8x512xf32> to vector<8x128xf32>
    %592 = arith.negf %591 : vector<8x128xf32>
    %593 = math.exp %592 : vector<8x128xf32>
    %cst_268 = arith.constant 1.000000e+00 : f32
    %594 = vector.broadcast %cst_268 : f32 to vector<8x128xf32>
    %595 = arith.addf %594, %593 : vector<8x128xf32>
    %596 = arith.divf %594, %595 : vector<8x128xf32>
    %597 = vector.extract_strided_slice %575 {offsets = [0, 256], sizes = [8, 128], strides = [1, 1]} : vector<8x512xf32> to vector<8x128xf32>
    %598 = math.tanh %597 : vector<8x128xf32>
    %599 = vector.extract_strided_slice %575 {offsets = [0, 384], sizes = [8, 128], strides = [1, 1]} : vector<8x512xf32> to vector<8x128xf32>
    %600 = arith.negf %599 : vector<8x128xf32>
    %601 = math.exp %600 : vector<8x128xf32>
    %cst_269 = arith.constant 1.000000e+00 : f32
    %602 = vector.broadcast %cst_269 : f32 to vector<8x128xf32>
    %603 = arith.addf %602, %601 : vector<8x128xf32>
    %604 = arith.divf %602, %603 : vector<8x128xf32>
    %605 = arith.mulf %596, %584 : vector<8x128xf32>
    %606 = arith.mulf %590, %598 : vector<8x128xf32>
    %607 = arith.addf %605, %606 : vector<8x128xf32>
    %608 = math.tanh %607 : vector<8x128xf32>
    %609 = arith.mulf %604, %608 : vector<8x128xf32>
    %c0_270 = arith.constant 0 : index
    %c0_271 = arith.constant 0 : index
    %610 = vector.load %arg12[%c0_270, %c0_271] : memref<8x128xf32, #tpu.memory_space<vmem>>, vector<8x128xf32>
    %611 = vector.extract_strided_slice %583 {offsets = [0, 0], sizes = [8, 128], strides = [1, 1]} : vector<8x512xf32> to vector<8x128xf32>
    %612 = arith.negf %611 : vector<8x128xf32>
    %613 = math.exp %612 : vector<8x128xf32>
    %cst_272 = arith.constant 1.000000e+00 : f32
    %614 = vector.broadcast %cst_272 : f32 to vector<8x128xf32>
    %615 = arith.addf %614, %613 : vector<8x128xf32>
    %616 = arith.divf %614, %615 : vector<8x128xf32>
    %617 = vector.extract_strided_slice %583 {offsets = [0, 128], sizes = [8, 128], strides = [1, 1]} : vector<8x512xf32> to vector<8x128xf32>
    %618 = arith.negf %617 : vector<8x128xf32>
    %619 = math.exp %618 : vector<8x128xf32>
    %cst_273 = arith.constant 1.000000e+00 : f32
    %620 = vector.broadcast %cst_273 : f32 to vector<8x128xf32>
    %621 = arith.addf %620, %619 : vector<8x128xf32>
    %622 = arith.divf %620, %621 : vector<8x128xf32>
    %623 = vector.extract_strided_slice %583 {offsets = [0, 256], sizes = [8, 128], strides = [1, 1]} : vector<8x512xf32> to vector<8x128xf32>
    %624 = math.tanh %623 : vector<8x128xf32>
    %625 = vector.extract_strided_slice %583 {offsets = [0, 384], sizes = [8, 128], strides = [1, 1]} : vector<8x512xf32> to vector<8x128xf32>
    %626 = arith.negf %625 : vector<8x128xf32>
    %627 = math.exp %626 : vector<8x128xf32>
    %cst_274 = arith.constant 1.000000e+00 : f32
    %628 = vector.broadcast %cst_274 : f32 to vector<8x128xf32>
    %629 = arith.addf %628, %627 : vector<8x128xf32>
    %630 = arith.divf %628, %629 : vector<8x128xf32>
    %631 = arith.mulf %622, %610 : vector<8x128xf32>
    %632 = arith.mulf %616, %624 : vector<8x128xf32>
    %633 = arith.addf %631, %632 : vector<8x128xf32>
    %634 = math.tanh %633 : vector<8x128xf32>
    %635 = arith.mulf %630, %634 : vector<8x128xf32>
    %636 = arith.truncf %609 : vector<8x128xf32> to vector<8x128xbf16>
    %c0_275 = arith.constant 0 : index
    %c0_276 = arith.constant 0 : index
    %637 = vector.load %arg9[%c0_275, %c0_276] : memref<8x128xbf16, #tpu.memory_space<vmem>>, vector<8x128xbf16>
    tpu.vector_store %arg9[%c0_275, %c0_276], %636 {strides = array<i32>} : memref<8x128xbf16, #tpu.memory_space<vmem>>, vector<8x128xbf16>,
    %c0_277 = arith.constant 0 : index
    %c0_278 = arith.constant 0 : index
    %638 = vector.load %arg10[%c0_277, %c0_278] : memref<8x128xf32, #tpu.memory_space<vmem>>, vector<8x128xf32>
    tpu.vector_store %arg10[%c0_277, %c0_278], %607 {strides = array<i32>} : memref<8x128xf32, #tpu.memory_space<vmem>>, vector<8x128xf32>,
    %639 = arith.truncf %635 : vector<8x128xf32> to vector<8x128xbf16>
    %c0_279 = arith.constant 0 : index
    %c0_280 = arith.constant 0 : index
    %640 = vector.load %arg11[%c0_279, %c0_280] : memref<8x128xbf16, #tpu.memory_space<vmem>>, vector<8x128xbf16>
    tpu.vector_store %arg11[%c0_279, %c0_280], %639 {strides = array<i32>} : memref<8x128xbf16, #tpu.memory_space<vmem>>, vector<8x128xbf16>,
    %c0_281 = arith.constant 0 : index
    %c0_282 = arith.constant 0 : index
    %641 = vector.load %arg12[%c0_281, %c0_282] : memref<8x128xf32, #tpu.memory_space<vmem>>, vector<8x128xf32>
    tpu.vector_store %arg12[%c0_281, %c0_282], %633 {strides = array<i32>} : memref<8x128xf32, #tpu.memory_space<vmem>>, vector<8x128xf32>,
    %642 = arith.index_cast %c6_i32 : i32 to index
    %c0_283 = arith.constant 0 : index
    %c0_284 = arith.constant 0 : index
    %643 = vector.load %arg5[%642, %c0_283, %c0_284] : memref<8x8x128xf32, #tpu.memory_space<vmem>>, vector<1x8x128xf32>
    %644 = vector.shape_cast %643 : vector<1x8x128xf32> to vector<8x128xf32>
    %645 = vector.shape_cast %609 : vector<8x128xf32> to vector<1x8x128xf32>
    tpu.vector_store %arg5[%642, %c0_283, %c0_284], %645 {strides = array<i32>} : memref<8x8x128xf32, #tpu.memory_space<vmem>>, vector<1x8x128xf32>,
    %c7_i32_285 = arith.constant 7 : i32
    %646 = arith.subi %c7_i32_285, %c6_i32 : i32
    %647 = arith.index_cast %646 : i32 to index
    %c0_286 = arith.constant 0 : index
    %c0_287 = arith.constant 0 : index
    %648 = vector.load %arg6[%647, %c0_286, %c0_287] : memref<8x8x128xf32, #tpu.memory_space<vmem>>, vector<1x8x128xf32>
    %649 = vector.shape_cast %648 : vector<1x8x128xf32> to vector<8x128xf32>
    %650 = vector.shape_cast %635 : vector<8x128xf32> to vector<1x8x128xf32>
    tpu.vector_store %arg6[%647, %c0_286, %c0_287], %650 {strides = array<i32>} : memref<8x8x128xf32, #tpu.memory_space<vmem>>, vector<1x8x128xf32>,
    %c8_i32_288 = arith.constant 8 : i32
    %651 = arith.muli %arg0, %c8_i32_288 : i32
    %652 = arith.addi %651, %c6_i32 : i32
    %c0_i32_289 = arith.constant 0 : i32
    %653 = arith.subi %c0_i32_289, %arg0 : i32
    %c8_i32_290 = arith.constant 8 : i32
    %654 = arith.muli %653, %c8_i32_290 : i32
    %c7_i32_291 = arith.constant 7 : i32
    %655 = arith.subi %c7_i32_291, %c6_i32 : i32
    %656 = arith.addi %654, %655 : i32
    %c7_i32_292 = arith.constant 7 : i32
    %657 = arith.cmpi eq, %652, %c7_i32_292 : i32
    %658 = arith.extui %657 : i1 to i32
    %c0_i32_293 = arith.constant 0 : i32
    %659 = arith.cmpi ne, %658, %c0_i32_293 : i32
    scf.if %659 {
      %c0_340 = arith.constant 0 : index
      %c0_341 = arith.constant 0 : index
      %757 = vector.load %arg7[%c0_340, %c0_341] : memref<8x128xf32, #tpu.memory_space<vmem>>, vector<8x128xf32>
      tpu.vector_store %arg7[%c0_340, %c0_341], %607 {strides = array<i32>} : memref<8x128xf32, #tpu.memory_space<vmem>>, vector<8x128xf32>,
    } else {
    }
    %c7_i32_294 = arith.constant 7 : i32
    %660 = arith.cmpi eq, %656, %c7_i32_294 : i32
    %661 = arith.extui %660 : i1 to i32
    %c0_i32_295 = arith.constant 0 : i32
    %662 = arith.cmpi ne, %661, %c0_i32_295 : i32
    scf.if %662 {
      %c0_340 = arith.constant 0 : index
      %c0_341 = arith.constant 0 : index
      %757 = vector.load %arg8[%c0_340, %c0_341] : memref<8x128xf32, #tpu.memory_space<vmem>>, vector<8x128xf32>
      tpu.vector_store %arg8[%c0_340, %c0_341], %633 {strides = array<i32>} : memref<8x128xf32, #tpu.memory_space<vmem>>, vector<8x128xf32>,
    } else {
    }
    %c7_i32_296 = arith.constant 7 : i32
    %663 = arith.index_cast %c7_i32_296 : i32 to index
    %c0_297 = arith.constant 0 : index
    %c0_298 = arith.constant 0 : index
    %664 = vector.load %arg1[%663, %c0_297, %c0_298] : memref<8x8x512xbf16, #tpu.memory_space<vmem>>, vector<1x8x512xbf16>
    %665 = vector.shape_cast %664 : vector<1x8x512xbf16> to vector<8x512xbf16>
    %666 = arith.extf %665 : vector<8x512xbf16> to vector<8x512xf32>
    %c0_299 = arith.constant 0 : index
    %c0_300 = arith.constant 0 : index
    %667 = vector.load %arg9[%c0_299, %c0_300] : memref<8x128xbf16, #tpu.memory_space<vmem>>, vector<8x128xbf16>
    %cst_301 = arith.constant dense<0.000000e+00> : vector<8x512xf32>
    %668 = tpu.matmul %667, %3, %cst_301 {dimension_numbers = #tpu.dot_dimension_numbers<[1], [0], [0], [1], [0, 0, 1, 1], [], []>} : vector<8x128xbf16>, vector<128x512xbf16>, vector<8x512xf32> -> vector<8x512xf32>
    %669 = arith.addf %666, %668 : vector<8x512xf32>
    %c7_i32_302 = arith.constant 7 : i32
    %670 = arith.subi %c7_i32_302, %c7_i32_296 : i32
    %671 = arith.index_cast %670 : i32 to index
    %c0_303 = arith.constant 0 : index
    %c0_304 = arith.constant 0 : index
    %672 = vector.load %arg2[%671, %c0_303, %c0_304] : memref<8x8x512xbf16, #tpu.memory_space<vmem>>, vector<1x8x512xbf16>
    %673 = vector.shape_cast %672 : vector<1x8x512xbf16> to vector<8x512xbf16>
    %674 = arith.extf %673 : vector<8x512xbf16> to vector<8x512xf32>
    %c0_305 = arith.constant 0 : index
    %c0_306 = arith.constant 0 : index
    %675 = vector.load %arg11[%c0_305, %c0_306] : memref<8x128xbf16, #tpu.memory_space<vmem>>, vector<8x128xbf16>
    %cst_307 = arith.constant dense<0.000000e+00> : vector<8x512xf32>
    %676 = tpu.matmul %675, %4, %cst_307 {dimension_numbers = #tpu.dot_dimension_numbers<[1], [0], [0], [1], [0, 0, 1, 1], [], []>} : vector<8x128xbf16>, vector<128x512xbf16>, vector<8x512xf32> -> vector<8x512xf32>
    %677 = arith.addf %674, %676 : vector<8x512xf32>
    %c0_308 = arith.constant 0 : index
    %c0_309 = arith.constant 0 : index
    %678 = vector.load %arg10[%c0_308, %c0_309] : memref<8x128xf32, #tpu.memory_space<vmem>>, vector<8x128xf32>
    %679 = vector.extract_strided_slice %669 {offsets = [0, 0], sizes = [8, 128], strides = [1, 1]} : vector<8x512xf32> to vector<8x128xf32>
    %680 = arith.negf %679 : vector<8x128xf32>
    %681 = math.exp %680 : vector<8x128xf32>
    %cst_310 = arith.constant 1.000000e+00 : f32
    %682 = vector.broadcast %cst_310 : f32 to vector<8x128xf32>
    %683 = arith.addf %682, %681 : vector<8x128xf32>
    %684 = arith.divf %682, %683 : vector<8x128xf32>
    %685 = vector.extract_strided_slice %669 {offsets = [0, 128], sizes = [8, 128], strides = [1, 1]} : vector<8x512xf32> to vector<8x128xf32>
    %686 = arith.negf %685 : vector<8x128xf32>
    %687 = math.exp %686 : vector<8x128xf32>
    %cst_311 = arith.constant 1.000000e+00 : f32
    %688 = vector.broadcast %cst_311 : f32 to vector<8x128xf32>
    %689 = arith.addf %688, %687 : vector<8x128xf32>
    %690 = arith.divf %688, %689 : vector<8x128xf32>
    %691 = vector.extract_strided_slice %669 {offsets = [0, 256], sizes = [8, 128], strides = [1, 1]} : vector<8x512xf32> to vector<8x128xf32>
    %692 = math.tanh %691 : vector<8x128xf32>
    %693 = vector.extract_strided_slice %669 {offsets = [0, 384], sizes = [8, 128], strides = [1, 1]} : vector<8x512xf32> to vector<8x128xf32>
    %694 = arith.negf %693 : vector<8x128xf32>
    %695 = math.exp %694 : vector<8x128xf32>
    %cst_312 = arith.constant 1.000000e+00 : f32
    %696 = vector.broadcast %cst_312 : f32 to vector<8x128xf32>
    %697 = arith.addf %696, %695 : vector<8x128xf32>
    %698 = arith.divf %696, %697 : vector<8x128xf32>
    %699 = arith.mulf %690, %678 : vector<8x128xf32>
    %700 = arith.mulf %684, %692 : vector<8x128xf32>
    %701 = arith.addf %699, %700 : vector<8x128xf32>
    %702 = math.tanh %701 : vector<8x128xf32>
    %703 = arith.mulf %698, %702 : vector<8x128xf32>
    %c0_313 = arith.constant 0 : index
    %c0_314 = arith.constant 0 : index
    %704 = vector.load %arg12[%c0_313, %c0_314] : memref<8x128xf32, #tpu.memory_space<vmem>>, vector<8x128xf32>
    %705 = vector.extract_strided_slice %677 {offsets = [0, 0], sizes = [8, 128], strides = [1, 1]} : vector<8x512xf32> to vector<8x128xf32>
    %706 = arith.negf %705 : vector<8x128xf32>
    %707 = math.exp %706 : vector<8x128xf32>
    %cst_315 = arith.constant 1.000000e+00 : f32
    %708 = vector.broadcast %cst_315 : f32 to vector<8x128xf32>
    %709 = arith.addf %708, %707 : vector<8x128xf32>
    %710 = arith.divf %708, %709 : vector<8x128xf32>
    %711 = vector.extract_strided_slice %677 {offsets = [0, 128], sizes = [8, 128], strides = [1, 1]} : vector<8x512xf32> to vector<8x128xf32>
    %712 = arith.negf %711 : vector<8x128xf32>
    %713 = math.exp %712 : vector<8x128xf32>
    %cst_316 = arith.constant 1.000000e+00 : f32
    %714 = vector.broadcast %cst_316 : f32 to vector<8x128xf32>
    %715 = arith.addf %714, %713 : vector<8x128xf32>
    %716 = arith.divf %714, %715 : vector<8x128xf32>
    %717 = vector.extract_strided_slice %677 {offsets = [0, 256], sizes = [8, 128], strides = [1, 1]} : vector<8x512xf32> to vector<8x128xf32>
    %718 = math.tanh %717 : vector<8x128xf32>
    %719 = vector.extract_strided_slice %677 {offsets = [0, 384], sizes = [8, 128], strides = [1, 1]} : vector<8x512xf32> to vector<8x128xf32>
    %720 = arith.negf %719 : vector<8x128xf32>
    %721 = math.exp %720 : vector<8x128xf32>
    %cst_317 = arith.constant 1.000000e+00 : f32
    %722 = vector.broadcast %cst_317 : f32 to vector<8x128xf32>
    %723 = arith.addf %722, %721 : vector<8x128xf32>
    %724 = arith.divf %722, %723 : vector<8x128xf32>
    %725 = arith.mulf %716, %704 : vector<8x128xf32>
    %726 = arith.mulf %710, %718 : vector<8x128xf32>
    %727 = arith.addf %725, %726 : vector<8x128xf32>
    %728 = math.tanh %727 : vector<8x128xf32>
    %729 = arith.mulf %724, %728 : vector<8x128xf32>
    %730 = arith.truncf %703 : vector<8x128xf32> to vector<8x128xbf16>
    %c0_318 = arith.constant 0 : index
    %c0_319 = arith.constant 0 : index
    %731 = vector.load %arg9[%c0_318, %c0_319] : memref<8x128xbf16, #tpu.memory_space<vmem>>, vector<8x128xbf16>
    tpu.vector_store %arg9[%c0_318, %c0_319], %730 {strides = array<i32>} : memref<8x128xbf16, #tpu.memory_space<vmem>>, vector<8x128xbf16>,
    %c0_320 = arith.constant 0 : index
    %c0_321 = arith.constant 0 : index
    %732 = vector.load %arg10[%c0_320, %c0_321] : memref<8x128xf32, #tpu.memory_space<vmem>>, vector<8x128xf32>
    tpu.vector_store %arg10[%c0_320, %c0_321], %701 {strides = array<i32>} : memref<8x128xf32, #tpu.memory_space<vmem>>, vector<8x128xf32>,
    %733 = arith.truncf %729 : vector<8x128xf32> to vector<8x128xbf16>
    %c0_322 = arith.constant 0 : index
    %c0_323 = arith.constant 0 : index
    %734 = vector.load %arg11[%c0_322, %c0_323] : memref<8x128xbf16, #tpu.memory_space<vmem>>, vector<8x128xbf16>
    tpu.vector_store %arg11[%c0_322, %c0_323], %733 {strides = array<i32>} : memref<8x128xbf16, #tpu.memory_space<vmem>>, vector<8x128xbf16>,
    %c0_324 = arith.constant 0 : index
    %c0_325 = arith.constant 0 : index
    %735 = vector.load %arg12[%c0_324, %c0_325] : memref<8x128xf32, #tpu.memory_space<vmem>>, vector<8x128xf32>
    tpu.vector_store %arg12[%c0_324, %c0_325], %727 {strides = array<i32>} : memref<8x128xf32, #tpu.memory_space<vmem>>, vector<8x128xf32>,
    %736 = arith.index_cast %c7_i32_296 : i32 to index
    %c0_326 = arith.constant 0 : index
    %c0_327 = arith.constant 0 : index
    %737 = vector.load %arg5[%736, %c0_326, %c0_327] : memref<8x8x128xf32, #tpu.memory_space<vmem>>, vector<1x8x128xf32>
    %738 = vector.shape_cast %737 : vector<1x8x128xf32> to vector<8x128xf32>
    %739 = vector.shape_cast %703 : vector<8x128xf32> to vector<1x8x128xf32>
    tpu.vector_store %arg5[%736, %c0_326, %c0_327], %739 {strides = array<i32>} : memref<8x8x128xf32, #tpu.memory_space<vmem>>, vector<1x8x128xf32>,
    %c7_i32_328 = arith.constant 7 : i32
    %740 = arith.subi %c7_i32_328, %c7_i32_296 : i32
    %741 = arith.index_cast %740 : i32 to index
    %c0_329 = arith.constant 0 : index
    %c0_330 = arith.constant 0 : index
    %742 = vector.load %arg6[%741, %c0_329, %c0_330] : memref<8x8x128xf32, #tpu.memory_space<vmem>>, vector<1x8x128xf32>
    %743 = vector.shape_cast %742 : vector<1x8x128xf32> to vector<8x128xf32>
    %744 = vector.shape_cast %729 : vector<8x128xf32> to vector<1x8x128xf32>
    tpu.vector_store %arg6[%741, %c0_329, %c0_330], %744 {strides = array<i32>} : memref<8x8x128xf32, #tpu.memory_space<vmem>>, vector<1x8x128xf32>,
    %c8_i32_331 = arith.constant 8 : i32
    %745 = arith.muli %arg0, %c8_i32_331 : i32
    %746 = arith.addi %745, %c7_i32_296 : i32
    %c0_i32_332 = arith.constant 0 : i32
    %747 = arith.subi %c0_i32_332, %arg0 : i32
    %c8_i32_333 = arith.constant 8 : i32
    %748 = arith.muli %747, %c8_i32_333 : i32
    %c7_i32_334 = arith.constant 7 : i32
    %749 = arith.subi %c7_i32_334, %c7_i32_296 : i32
    %750 = arith.addi %748, %749 : i32
    %c7_i32_335 = arith.constant 7 : i32
    %751 = arith.cmpi eq, %746, %c7_i32_335 : i32
    %752 = arith.extui %751 : i1 to i32
    %c0_i32_336 = arith.constant 0 : i32
    %753 = arith.cmpi ne, %752, %c0_i32_336 : i32
    scf.if %753 {
      %c0_340 = arith.constant 0 : index
      %c0_341 = arith.constant 0 : index
      %757 = vector.load %arg7[%c0_340, %c0_341] : memref<8x128xf32, #tpu.memory_space<vmem>>, vector<8x128xf32>
      tpu.vector_store %arg7[%c0_340, %c0_341], %701 {strides = array<i32>} : memref<8x128xf32, #tpu.memory_space<vmem>>, vector<8x128xf32>,
    } else {
    }
    %c7_i32_337 = arith.constant 7 : i32
    %754 = arith.cmpi eq, %750, %c7_i32_337 : i32
    %755 = arith.extui %754 : i1 to i32
    %c0_i32_338 = arith.constant 0 : i32
    %756 = arith.cmpi ne, %755, %c0_i32_338 : i32
    scf.if %756 {
      %c0_340 = arith.constant 0 : index
      %c0_341 = arith.constant 0 : index
      %757 = vector.load %arg8[%c0_340, %c0_341] : memref<8x128xf32, #tpu.memory_space<vmem>>, vector<8x128xf32>
      tpu.vector_store %arg8[%c0_340, %c0_341], %727 {strides = array<i32>} : memref<8x128xf32, #tpu.memory_space<vmem>>, vector<8x128xf32>,
    } else {
    }
    %c8_i32_339 = arith.constant 8 : i32
    return
  }
  func.func @transform_0(%arg0: i32) -> (i32, i32, i32) {
    %c0_i32 = arith.constant 0 : i32
    %c0_i32_0 = arith.constant 0 : i32
    %c0_i32_1 = arith.constant 0 : i32
    return %arg0, %c0_i32, %c0_i32_0 : i32, i32, i32
  }
  func.func @transform_1(%arg0: i32) -> (i32, i32, i32) {
    %c0_i32 = arith.constant 0 : i32
    %0 = arith.subi %c0_i32, %arg0 : i32
    %c0_i32_0 = arith.constant 0 : i32
    %c0_i32_1 = arith.constant 0 : i32
    %c0_i32_2 = arith.constant 0 : i32
    return %0, %c0_i32_0, %c0_i32_1 : i32, i32, i32
  }
  func.func @transform_2(%arg0: i32) -> (i32, i32) {
    %c0_i32 = arith.constant 0 : i32
    %c0_i32_0 = arith.constant 0 : i32
    %c0_i32_1 = arith.constant 0 : i32
    return %c0_i32, %c0_i32_0 : i32, i32
  }
  func.func @transform_3(%arg0: i32) -> (i32, i32) {
    %c0_i32 = arith.constant 0 : i32
    %c0_i32_0 = arith.constant 0 : i32
    %c0_i32_1 = arith.constant 0 : i32
    return %c0_i32, %c0_i32_0 : i32, i32
  }
  func.func @transform_4(%arg0: i32) -> (i32, i32, i32) {
    %c0_i32 = arith.constant 0 : i32
    %c0_i32_0 = arith.constant 0 : i32
    %c0_i32_1 = arith.constant 0 : i32
    return %arg0, %c0_i32, %c0_i32_0 : i32, i32, i32
  }
  func.func @transform_5(%arg0: i32) -> (i32, i32, i32) {
    %c0_i32 = arith.constant 0 : i32
    %0 = arith.subi %c0_i32, %arg0 : i32
    %c0_i32_0 = arith.constant 0 : i32
    %c0_i32_1 = arith.constant 0 : i32
    %c0_i32_2 = arith.constant 0 : i32
    return %0, %c0_i32_0, %c0_i32_1 : i32, i32, i32
  }
  func.func @transform_6(%arg0: i32) -> (i32, i32) {
    %c0_i32 = arith.constant 0 : i32
    %c0_i32_0 = arith.constant 0 : i32
    %c0_i32_1 = arith.constant 0 : i32
    return %c0_i32, %c0_i32_0 : i32, i32
  }
  func.func @transform_7(%arg0: i32) -> (i32, i32) {
    %c0_i32 = arith.constant 0 : i32
    %c0_i32_0 = arith.constant 0 : i32
    %c0_i32_1 = arith.constant 0 : i32
    return %c0_i32, %c0_i32_0 : i32, i32
  }
}

</mosaic_0001>

<llo_original>
// kernel: bidirectional_rnn.2
$region0: #{bidirectional_rnn.2}
  #allocation0 [shape = 'u32[]', space=smem, size = 0x4, offset = 0x4, fixed_abs, tag = 'smem constant byte address 0x4 - core index']
  #allocation1 [shape = 'u32[144,128]{1,0:T(1,128)}', space=vmem, size = 0x12000, scoped, tag = 'internal scratch']
  #allocation2 [shape = 'bf16[8,128]{1,0:T(8,128)(2,1)}', space=vmem, size = 0x800, scoped, tag = 'scratch operand']
  #allocation3 [shape = 'f32[8,128]{1,0:T(8,128)}', space=vmem, size = 0x1000, scoped, tag = 'scratch operand']
  #allocation4 [shape = 'bf16[8,128]{1,0:T(8,128)(2,1)}', space=vmem, size = 0x800, scoped, tag = 'scratch operand']
  #allocation5 [shape = 'f32[8,128]{1,0:T(8,128)}', space=vmem, size = 0x1000, scoped, tag = 'scratch operand']
  %s0 = inlined_call_operand.vmem [shape: bf16[8,8,512], index: 0, kind: input, shape index: {}]
  %s1 = inlined_call_operand.vmem [shape: bf16[8,8,512], index: 1, kind: input, shape index: {}]
  %s2 = inlined_call_operand.vmem [shape: bf16[128,512], index: 2, kind: input, shape index: {}]
  %s3 = inlined_call_operand.vmem [shape: bf16[128,512], index: 3, kind: input, shape index: {}]
  %s4 = inlined_call_operand.vmem [shape: f32[8,8,128], index: 4, kind: output, shape index: {0}]
  %s5 = inlined_call_operand.vmem [shape: f32[8,8,128], index: 5, kind: output, shape index: {1}]
  %s6 = inlined_call_operand.vmem [shape: f32[8,128], index: 6, kind: output, shape index: {2}]
  %s7 = inlined_call_operand.vmem [shape: f32[8,128], index: 7, kind: output, shape index: {3}]
  %8 = xla_tuple %s4, %s5, %s6, %s7
  %s9 = sld [smem:[#allocation0]]
  $region118: #{bidirectional_rnn.2} parent=0
    _
  %s11 = ssub.s32 1, %s9
  %s12 = scalar_select 0, %s11, %s9
  // Predicated region
  $region2: #{bidirectional_rnn.2} parent=0 // pred_check
    _
  $region3: #{bidirectional_rnn.2} parent=0 // pred_check_branch
    %14 = sbr.rel (0) target = $region5
  $region4: #{bidirectional_rnn.2} parent=0 // pred_region
    _
  $region5: #{bidirectional_rnn.2} parent=0 // pred_fallthru
    _
  // Predicated region
  $region6: #{bidirectional_rnn.2} parent=0 // pred_check
    _
  $region7: #{bidirectional_rnn.2} parent=0 // pred_check_branch
    %16 = sbr.rel (0) target = $region9
  $region8: #{bidirectional_rnn.2} parent=0 // pred_region
    %s17 = ssub.s32 0, 0
    %s18 = smul.u32 8, %s17
    %p19 = scmp.lt.s32.totalorder %s18, 7
    %s20 = scalar_select %p19, %s18, 7
    %s21 = smul.addr %s20, 4
    %s22 = smul.addr %s21, 4
    %s23 = scalar_lea.vmem %s1, %s22
    %s24 = ssub.s32 0, 0
    %s25 = smul.u32 8, %s24
  $region9: #{bidirectional_rnn.2} parent=0 // pred_fallthru
    _
  // Predicated region
  $region10: #{bidirectional_rnn.2} parent=0 // pred_check
    _
  $region11: #{bidirectional_rnn.2} parent=0 // pred_check_branch
    %27 = sbr.rel (0) target = $region13
  $region12: #{bidirectional_rnn.2} parent=0 // pred_region
    _
  $region13: #{bidirectional_rnn.2} parent=0 // pred_fallthru
    _
  // Predicated region
  $region14: #{bidirectional_rnn.2} parent=0 // pred_check
    _
  $region15: #{bidirectional_rnn.2} parent=0 // pred_check_branch
    %29 = sbr.rel (0) target = $region17
  $region16: #{bidirectional_rnn.2} parent=0 // pred_region
    _
  $region17: #{bidirectional_rnn.2} parent=0 // pred_fallthru
    _
  %s30 = ssub.s32 0, 0
  %s31 = smul.u32 8, %s30
  %p32 = scmp.lt.s32.totalorder %s31, 7
  %s33 = scalar_select %p32, %s31, 7
  %s34 = smul.addr %s33, 4
  %s35 = smul.addr %s34, 4
  %s36 = scalar_lea.vmem %s1, %s35
  %s37 = ssub.s32 0, 0
  %s38 = smul.u32 8, %s37
  %p39 = scmp.lt.s32.totalorder %s38, 7
  %s40 = scalar_select %p39, %s38, 7
  %s41 = smul.addr %s40, 8
  %s42 = scalar_lea.vmem %s5, %s41
  %s43 = ssub.s32 0, 0
  %s44 = smul.u32 8, %s43
  %p45 = scmp.lt.s32.totalorder %s44, 7
  %s46 = scalar_select %p45, %s44, 7
  %s47 = smul.addr %s46, 4
  %s48 = smul.addr %s47, 4
  %s49 = scalar_lea.vmem %s1, %s48
  %s50 = ssub.s32 0, 0
  %s51 = smul.u32 8, %s50
  %s52 = ssub.s32 0, 0
  %s53 = smul.u32 8, %s52
  %p54 = scmp.lt.s32.totalorder %s53, 7
  %s55 = scalar_select %p54, %s53, 7
  %s56 = smul.addr %s55, 8
  %s57 = scalar_lea.vmem %s5, %s56
  %s58 = ssub.s32 0, 0
  %s59 = smul.u32 8, %s58
  %p61 = scmp.eq.s32.totalorder 0, 0
  // Predicated region
  $region18: #{bidirectional_rnn.2} parent=0 // pred_check
    %p62 = pneg %p61
  $region19: #{bidirectional_rnn.2} parent=0 // pred_check_branch
    %64 = sbr.rel (%p62) target = $region21
  $region20: #{bidirectional_rnn.2} parent=0 // pred_region
    %65 = vst [vmem:[#allocation2] sm:$0xf] 0
    %66 = vst [vmem:[#allocation3] sm:$0xff] 0.0
    %67 = vst [vmem:[#allocation4] sm:$0xf] 0
    %68 = vst [vmem:[#allocation5] sm:$0xff] 0.0
  $region21: #{bidirectional_rnn.2} parent=0 // pred_fallthru
    _
  %v69 = vld [vmem:[%s2] sm:$0xff]
  %v70 = vld [vmem:[%s2 + $0x8] sm:$0xff]
  %v71 = vld [vmem:[%s2 + $0x10] sm:$0xff]
  %v72 = vld [vmem:[%s2 + $0x18] sm:$0xff]
  %v73 = vld [vmem:[%s2 + $0x20] sm:$0xff]
  %v74 = vld [vmem:[%s2 + $0x28] sm:$0xff]
  %v75 = vld [vmem:[%s2 + $0x30] sm:$0xff]
  %v76 = vld [vmem:[%s2 + $0x38] sm:$0xff]
  %v77 = vld [vmem:[%s2 + $0x40] sm:$0xff]
  %v78 = vld [vmem:[%s2 + $0x48] sm:$0xff]
  %v79 = vld [vmem:[%s2 + $0x50] sm:$0xff]
  %v80 = vld [vmem:[%s2 + $0x58] sm:$0xff]
  %v81 = vld [vmem:[%s2 + $0x60] sm:$0xff]
  %v82 = vld [vmem:[%s2 + $0x68] sm:$0xff]
  %v83 = vld [vmem:[%s2 + $0x70] sm:$0xff]
  %v84 = vld [vmem:[%s2 + $0x78] sm:$0xff]
  %v85 = vld [vmem:[%s2 + $0x80] sm:$0xff]
  %v86 = vld [vmem:[%s2 + $0x88] sm:$0xff]
  %v87 = vld [vmem:[%s2 + $0x90] sm:$0xff]
  %v88 = vld [vmem:[%s2 + $0x98] sm:$0xff]
  %v89 = vld [vmem:[%s2 + $0xa0] sm:$0xff]
  %v90 = vld [vmem:[%s2 + $0xa8] sm:$0xff]
  %v91 = vld [vmem:[%s2 + $0xb0] sm:$0xff]
  %v92 = vld [vmem:[%s2 + $0xb8] sm:$0xff]
  %v93 = vld [vmem:[%s2 + $0xc0] sm:$0xff]
  %v94 = vld [vmem:[%s2 + $0xc8] sm:$0xff]
  %v95 = vld [vmem:[%s2 + $0xd0] sm:$0xff]
  %v96 = vld [vmem:[%s2 + $0xd8] sm:$0xff]
  %v97 = vld [vmem:[%s2 + $0xe0] sm:$0xff]
  %v98 = vld [vmem:[%s2 + $0xe8] sm:$0xff]
  %v99 = vld [vmem:[%s2 + $0xf0] sm:$0xff]
  %v100 = vld [vmem:[%s2 + $0xf8] sm:$0xff]
  %v101 = vld [vmem:[%s3] sm:$0xff]
  %v102 = vld [vmem:[%s3 + $0x8] sm:$0xff]
  %v103 = vld [vmem:[%s3 + $0x10] sm:$0xff]
  %v104 = vld [vmem:[%s3 + $0x18] sm:$0xff]
  %v105 = vld [vmem:[%s3 + $0x20] sm:$0xff]
  %v106 = vld [vmem:[%s3 + $0x28] sm:$0xff]
  %v107 = vld [vmem:[%s3 + $0x30] sm:$0xff]
  %v108 = vld [vmem:[%s3 + $0x38] sm:$0xff]
  %v109 = vld [vmem:[%s3 + $0x40] sm:$0xff]
  %v110 = vld [vmem:[%s3 + $0x48] sm:$0xff]
  %v111 = vld [vmem:[%s3 + $0x50] sm:$0xff]
  %v112 = vld [vmem:[%s3 + $0x58] sm:$0xff]
  %v113 = vld [vmem:[%s3 + $0x60] sm:$0xff]
  %v114 = vld [vmem:[%s3 + $0x68] sm:$0xff]
  %v115 = vld [vmem:[%s3 + $0x70] sm:$0xff]
  %v116 = vld [vmem:[%s3 + $0x78] sm:$0xff]
  %v117 = vld [vmem:[%s3 + $0x80] sm:$0xff]
  %v118 = vld [vmem:[%s3 + $0x88] sm:$0xff]
  %v119 = vld [vmem:[%s3 + $0x90] sm:$0xff]
  %v120 = vld [vmem:[%s3 + $0x98] sm:$0xff]
  %v121 = vld [vmem:[%s3 + $0xa0] sm:$0xff]
  %v122 = vld [vmem:[%s3 + $0xa8] sm:$0xff]
  %v123 = vld [vmem:[%s3 + $0xb0] sm:$0xff]
  %v124 = vld [vmem:[%s3 + $0xb8] sm:$0xff]
  %v125 = vld [vmem:[%s3 + $0xc0] sm:$0xff]
  %v126 = vld [vmem:[%s3 + $0xc8] sm:$0xff]
  %v127 = vld [vmem:[%s3 + $0xd0] sm:$0xff]
  %v128 = vld [vmem:[%s3 + $0xd8] sm:$0xff]
  %v129 = vld [vmem:[%s3 + $0xe0] sm:$0xff]
  %v130 = vld [vmem:[%s3 + $0xe8] sm:$0xff]
  %v131 = vld [vmem:[%s3 + $0xf0] sm:$0xff]
  %v132 = vld [vmem:[%s3 + $0xf8] sm:$0xff]
  %v133 = vld [vmem:[%s0] sm:$0xff]
  %v134 = vld [vmem:[%s0 + $0x8] sm:$0xff]
  %v135 = vunpack.c.l.bf16 %v133
  %v136 = vunpack.c.h.bf16 %v133
  %v137 = vunpack.c.l.bf16 %v134
  %v138 = vunpack.c.h.bf16 %v134
  %v139 = vld [vmem:[#allocation2] sm:$0xf]
  %v172 = vunpack.c.l.b16 %v69
  %v173 = vunpack.c.h.b16 %v69
  %v174 = vunpack.c.l.b16 %v70
  %v175 = vunpack.c.h.b16 %v70
  %v176 = vunpack.c.l.b16 %v71
  %v177 = vunpack.c.h.b16 %v71
  %v178 = vunpack.c.l.b16 %v72
  %v179 = vunpack.c.h.b16 %v72
  %v180 = vunpack.c.l.b16 %v73
  %v181 = vunpack.c.h.b16 %v73
  %v182 = vunpack.c.l.b16 %v74
  %v183 = vunpack.c.h.b16 %v74
  %v184 = vunpack.c.l.b16 %v75
  %v185 = vunpack.c.h.b16 %v75
  %v186 = vunpack.c.l.b16 %v76
  %v187 = vunpack.c.h.b16 %v76
  %v188 = vunpack.c.l.b16 %v77
  %v189 = vunpack.c.h.b16 %v77
  %v190 = vunpack.c.l.b16 %v78
  %v191 = vunpack.c.h.b16 %v78
  %v192 = vunpack.c.l.b16 %v79
  %v193 = vunpack.c.h.b16 %v79
  %v194 = vunpack.c.l.b16 %v80
  %v195 = vunpack.c.h.b16 %v80
  %v196 = vunpack.c.l.b16 %v81
  %v197 = vunpack.c.h.b16 %v81
  %v198 = vunpack.c.l.b16 %v82
  %v199 = vunpack.c.h.b16 %v82
  %v200 = vunpack.c.l.b16 %v83
  %v201 = vunpack.c.h.b16 %v83
  %v202 = vunpack.c.l.b16 %v84
  %v203 = vunpack.c.h.b16 %v84
  %v204 = vunpack.c.l.b16 %v85
  %v205 = vunpack.c.h.b16 %v85
  %v206 = vunpack.c.l.b16 %v86
  %v207 = vunpack.c.h.b16 %v86
  %v208 = vunpack.c.l.b16 %v87
  %v209 = vunpack.c.h.b16 %v87
  %v210 = vunpack.c.l.b16 %v88
  %v211 = vunpack.c.h.b16 %v88
  %v212 = vunpack.c.l.b16 %v89
  %v213 = vunpack.c.h.b16 %v89
  %v214 = vunpack.c.l.b16 %v90
  %v215 = vunpack.c.h.b16 %v90
  %v216 = vunpack.c.l.b16 %v91
  %v217 = vunpack.c.h.b16 %v91
  %v218 = vunpack.c.l.b16 %v92
  %v219 = vunpack.c.h.b16 %v92
  %v220 = vunpack.c.l.b16 %v93
  %v221 = vunpack.c.h.b16 %v93
  %v222 = vunpack.c.l.b16 %v94
  %v223 = vunpack.c.h.b16 %v94
  %v224 = vunpack.c.l.b16 %v95
  %v225 = vunpack.c.h.b16 %v95
  %v226 = vunpack.c.l.b16 %v96
  %v227 = vunpack.c.h.b16 %v96
  %v228 = vunpack.c.l.b16 %v97
  %v229 = vunpack.c.h.b16 %v97
  %v230 = vunpack.c.l.b16 %v98
  %v231 = vunpack.c.h.b16 %v98
  %v232 = vunpack.c.l.b16 %v99
  %v233 = vunpack.c.h.b16 %v99
  %v234 = vunpack.c.l.b16 %v100
  %v235 = vunpack.c.h.b16 %v100
  %v236 = vpack.c.b16 %v176, %v172
  %v237 = vpack.c.b16 %v177, %v173
  %v238 = vpack.c.b16 %v178, %v174
  %v239 = vpack.c.b16 %v179, %v175
  %v240 = vpack.c.b16 %v184, %v180
  %v241 = vpack.c.b16 %v185, %v181
  %v242 = vpack.c.b16 %v186, %v182
  %v243 = vpack.c.b16 %v187, %v183
  %v244 = vpack.c.b16 %v192, %v188
  %v245 = vpack.c.b16 %v193, %v189
  %v246 = vpack.c.b16 %v194, %v190
  %v247 = vpack.c.b16 %v195, %v191
  %v248 = vpack.c.b16 %v200, %v196
  %v249 = vpack.c.b16 %v201, %v197
  %v250 = vpack.c.b16 %v202, %v198
  %v251 = vpack.c.b16 %v203, %v199
  %v252 = vpack.c.b16 %v208, %v204
  %v253 = vpack.c.b16 %v209, %v205
  %v254 = vpack.c.b16 %v210, %v206
  %v255 = vpack.c.b16 %v211, %v207
  %v256 = vpack.c.b16 %v216, %v212
  %v257 = vpack.c.b16 %v217, %v213
  %v258 = vpack.c.b16 %v218, %v214
  %v259 = vpack.c.b16 %v219, %v215
  %v260 = vpack.c.b16 %v224, %v220
  %v261 = vpack.c.b16 %v225, %v221
  %v262 = vpack.c.b16 %v226, %v222
  %v263 = vpack.c.b16 %v227, %v223
  %v264 = vpack.c.b16 %v232, %v228
  %v265 = vpack.c.b16 %v233, %v229
  %v266 = vpack.c.b16 %v234, %v230
  %v267 = vpack.c.b16 %v235, %v231
  %300 = vmatprep.subr.bf16.mxu0 %v237
  %301 = vmatpush1.bf16.msra.mxu0 %v236
  %302 = vmatprep.subr.bf16.mxu0 %v241
  %303 = vmatpush1.bf16.msra.mxu0 %v240
  %304 = vmatprep.subr.bf16.mxu0 %v245
  %305 = vmatpush1.bf16.msra.mxu0 %v244
  %306 = vmatprep.subr.bf16.mxu0 %v249
  %307 = vmatpush1.bf16.msra.mxu0 %v248
  %308 = vmatprep.subr.bf16.mxu0 %v253
  %309 = vmatpush1.bf16.msra.mxu0 %v252
  %310 = vmatprep.subr.bf16.mxu0 %v257
  %311 = vmatpush1.bf16.msra.mxu0 %v256
  %312 = vmatprep.subr.bf16.mxu0 %v261
  %313 = vmatpush1.bf16.msra.mxu0 %v260
  %314 = vmatprep.subr.bf16.mxu0 %v265
  %315 = vmatpush1.bf16.msra.mxu0 %v264
  %316 = vmatprep.subr.bf16.mxu0 0
  %317 = vmatpush1.bf16.msra.mxu0 0
  %318 = vmatprep.subr.bf16.mxu0 0
  %319 = vmatpush1.bf16.msra.mxu0 0
  %320 = vmatprep.subr.bf16.mxu0 0
  %321 = vmatpush1.bf16.msra.mxu0 0
  %322 = vmatprep.subr.bf16.mxu0 0
  %323 = vmatpush1.bf16.msra.mxu0 0
  %324 = vmatprep.subr.bf16.mxu0 0
  %325 = vmatpush1.bf16.msra.mxu0 0
  %326 = vmatprep.subr.bf16.mxu0 0
  %327 = vmatpush1.bf16.msra.mxu0 0
  %328 = vmatprep.subr.bf16.mxu0 0
  %329 = vmatpush1.bf16.msra.mxu0 0
  %330 = vmatprep.subr.bf16.mxu0 0
  %331 = vmatpush1.bf16.msra.mxu0 0
  %332 = vmatprep.mubr.bf16.mxu0 0
  %333 = vmatmul.mubr.bf16.gmra.mrb[0].mxu0 %v139
  %v334 = vpop.f32.mrb[0].mxu0
  %v335 = vadd.f32 0.0, %v334
  %v336 = vpop.f32.mrb[0].mxu0
  %v337 = vadd.f32 0.0, %v336
  %v338 = vpop.f32.mrb[0].mxu0
  %v339 = vpop.f32.mrb[0].mxu0
  %340 = vdwg.mxu0
  %341 = vmatprep.subr.bf16.mxu0 %v239
  %342 = vmatpush1.bf16.msra.mxu0 %v238
  %343 = vmatprep.subr.bf16.mxu0 %v243
  %344 = vmatpush1.bf16.msra.mxu0 %v242
  %345 = vmatprep.subr.bf16.mxu0 %v247
  %346 = vmatpush1.bf16.msra.mxu0 %v246
  %347 = vmatprep.subr.bf16.mxu0 %v251
  %348 = vmatpush1.bf16.msra.mxu0 %v250
  %349 = vmatprep.subr.bf16.mxu0 %v255
  %350 = vmatpush1.bf16.msra.mxu0 %v254
  %351 = vmatprep.subr.bf16.mxu0 %v259
  %352 = vmatpush1.bf16.msra.mxu0 %v258
  %353 = vmatprep.subr.bf16.mxu0 %v263
  %354 = vmatpush1.bf16.msra.mxu0 %v262
  %355 = vmatprep.subr.bf16.mxu0 %v267
  %356 = vmatpush1.bf16.msra.mxu0 %v266
  %357 = vmatprep.subr.bf16.mxu0 0
  %358 = vmatpush1.bf16.msra.mxu0 0
  %359 = vmatprep.subr.bf16.mxu0 0
  %360 = vmatpush1.bf16.msra.mxu0 0
  %361 = vmatprep.subr.bf16.mxu0 0
  %362 = vmatpush1.bf16.msra.mxu0 0
  %363 = vmatprep.subr.bf16.mxu0 0
  %364 = vmatpush1.bf16.msra.mxu0 0
  %365 = vmatprep.subr.bf16.mxu0 0
  %366 = vmatpush1.bf16.msra.mxu0 0
  %367 = vmatprep.subr.bf16.mxu0 0
  %368 = vmatpush1.bf16.msra.mxu0 0
  %369 = vmatprep.subr.bf16.mxu0 0
  %370 = vmatpush1.bf16.msra.mxu0 0
  %371 = vmatprep.subr.bf16.mxu0 0
  %372 = vmatpush1.bf16.msra.mxu0 0
  %373 = vmatprep.mubr.bf16.mxu0 0
  %374 = vmatmul.mubr.bf16.gmra.mrb[0].mxu0 %v139
  %v375 = vpop.f32.mrb[0].mxu0
  %v376 = vadd.f32 0.0, %v375
  %v377 = vpop.f32.mrb[0].mxu0
  %v378 = vadd.f32 0.0, %v377
  %v379 = vpop.f32.mrb[0].mxu0
  %v380 = vpop.f32.mrb[0].mxu0
  %381 = vdwg.mxu0
  %v382 = vadd.f32 %v135, %v335
  %v383 = vadd.f32 %v136, %v337
  %v384 = vadd.f32 %v137, %v376
  %v385 = vadd.f32 %v138, %v378
  %s386 = scalar_lea.vmem %s49, 112
  %v387 = vld [vmem:[%s386] sm:$0xff]
  %v388 = vld [vmem:[%s386 + $0x8] sm:$0xff]
  %v389 = vunpack.c.l.bf16 %v387
  %v390 = vunpack.c.h.bf16 %v387
  %v391 = vunpack.c.l.bf16 %v388
  %v392 = vunpack.c.h.bf16 %v388
  %v393 = vld [vmem:[#allocation4] sm:$0xf]
  %v426 = vunpack.c.l.b16 %v101
  %v427 = vunpack.c.h.b16 %v101
  %v428 = vunpack.c.l.b16 %v102
  %v429 = vunpack.c.h.b16 %v102
  %v430 = vunpack.c.l.b16 %v103
  %v431 = vunpack.c.h.b16 %v103
  %v432 = vunpack.c.l.b16 %v104
  %v433 = vunpack.c.h.b16 %v104
  %v434 = vunpack.c.l.b16 %v105
  %v435 = vunpack.c.h.b16 %v105
  %v436 = vunpack.c.l.b16 %v106
  %v437 = vunpack.c.h.b16 %v106
  %v438 = vunpack.c.l.b16 %v107
  %v439 = vunpack.c.h.b16 %v107
  %v440 = vunpack.c.l.b16 %v108
  %v441 = vunpack.c.h.b16 %v108
  %v442 = vunpack.c.l.b16 %v109
  %v443 = vunpack.c.h.b16 %v109
  %v444 = vunpack.c.l.b16 %v110
  %v445 = vunpack.c.h.b16 %v110
  %v446 = vunpack.c.l.b16 %v111
  %v447 = vunpack.c.h.b16 %v111
  %v448 = vunpack.c.l.b16 %v112
  %v449 = vunpack.c.h.b16 %v112
  %v450 = vunpack.c.l.b16 %v113
  %v451 = vunpack.c.h.b16 %v113
  %v452 = vunpack.c.l.b16 %v114
  %v453 = vunpack.c.h.b16 %v114
  %v454 = vunpack.c.l.b16 %v115
  %v455 = vunpack.c.h.b16 %v115
  %v456 = vunpack.c.l.b16 %v116
  %v457 = vunpack.c.h.b16 %v116
  %v458 = vunpack.c.l.b16 %v117
  %v459 = vunpack.c.h.b16 %v117
  %v460 = vunpack.c.l.b16 %v118
  %v461 = vunpack.c.h.b16 %v118
  %v462 = vunpack.c.l.b16 %v119
  %v463 = vunpack.c.h.b16 %v119
  %v464 = vunpack.c.l.b16 %v120
  %v465 = vunpack.c.h.b16 %v120
  %v466 = vunpack.c.l.b16 %v121
  %v467 = vunpack.c.h.b16 %v121
  %v468 = vunpack.c.l.b16 %v122
  %v469 = vunpack.c.h.b16 %v122
  %v470 = vunpack.c.l.b16 %v123
  %v471 = vunpack.c.h.b16 %v123
  %v472 = vunpack.c.l.b16 %v124
  %v473 = vunpack.c.h.b16 %v124
  %v474 = vunpack.c.l.b16 %v125
  %v475 = vunpack.c.h.b16 %v125
  %v476 = vunpack.c.l.b16 %v126
  %v477 = vunpack.c.h.b16 %v126
  %v478 = vunpack.c.l.b16 %v127
  %v479 = vunpack.c.h.b16 %v127
  %v480 = vunpack.c.l.b16 %v128
  %v481 = vunpack.c.h.b16 %v128
  %v482 = vunpack.c.l.b16 %v129
  %v483 = vunpack.c.h.b16 %v129
  %v484 = vunpack.c.l.b16 %v130
  %v485 = vunpack.c.h.b16 %v130
  %v486 = vunpack.c.l.b16 %v131
  %v487 = vunpack.c.h.b16 %v131
  %v488 = vunpack.c.l.b16 %v132
  %v489 = vunpack.c.h.b16 %v132
  %v490 = vpack.c.b16 %v430, %v426
  %v491 = vpack.c.b16 %v431, %v427
  %v492 = vpack.c.b16 %v432, %v428
  %v493 = vpack.c.b16 %v433, %v429
  %v494 = vpack.c.b16 %v438, %v434
  %v495 = vpack.c.b16 %v439, %v435
  %v496 = vpack.c.b16 %v440, %v436
  %v497 = vpack.c.b16 %v441, %v437
  %v498 = vpack.c.b16 %v446, %v442
  %v499 = vpack.c.b16 %v447, %v443
  %v500 = vpack.c.b16 %v448, %v444
  %v501 = vpack.c.b16 %v449, %v445
  %v502 = vpack.c.b16 %v454, %v450
  %v503 = vpack.c.b16 %v455, %v451
  %v504 = vpack.c.b16 %v456, %v452
  %v505 = vpack.c.b16 %v457, %v453
  %v506 = vpack.c.b16 %v462, %v458
  %v507 = vpack.c.b16 %v463, %v459
  %v508 = vpack.c.b16 %v464, %v460
  %v509 = vpack.c.b16 %v465, %v461
  %v510 = vpack.c.b16 %v470, %v466
  %v511 = vpack.c.b16 %v471, %v467
  %v512 = vpack.c.b16 %v472, %v468
  %v513 = vpack.c.b16 %v473, %v469
  %v514 = vpack.c.b16 %v478, %v474
  %v515 = vpack.c.b16 %v479, %v475
  %v516 = vpack.c.b16 %v480, %v476
  %v517 = vpack.c.b16 %v481, %v477
  %v518 = vpack.c.b16 %v486, %v482
  %v519 = vpack.c.b16 %v487, %v483
  %v520 = vpack.c.b16 %v488, %v484
  %v521 = vpack.c.b16 %v489, %v485
  %554 = vmatprep.subr.bf16.mxu0 %v491
  %555 = vmatpush1.bf16.msra.mxu0 %v490
  %556 = vmatprep.subr.bf16.mxu0 %v495
  %557 = vmatpush1.bf16.msra.mxu0 %v494
  %558 = vmatprep.subr.bf16.mxu0 %v499
  %559 = vmatpush1.bf16.msra.mxu0 %v498
  %560 = vmatprep.subr.bf16.mxu0 %v503
  %561 = vmatpush1.bf16.msra.mxu0 %v502
  %562 = vmatprep.subr.bf16.mxu0 %v507
  %563 = vmatpush1.bf16.msra.mxu0 %v506
  %564 = vmatprep.subr.bf16.mxu0 %v511
  %565 = vmatpush1.bf16.msra.mxu0 %v510
  %566 = vmatprep.subr.bf16.mxu0 %v515
  %567 = vmatpush1.bf16.msra.mxu0 %v514
  %568 = vmatprep.subr.bf16.mxu0 %v519
  %569 = vmatpush1.bf16.msra.mxu0 %v518
  %570 = vmatprep.subr.bf16.mxu0 0
  %571 = vmatpush1.bf16.msra.mxu0 0
  %572 = vmatprep.subr.bf16.mxu0 0
  %573 = vmatpush1.bf16.msra.mxu0 0
  %574 = vmatprep.subr.bf16.mxu0 0
  %575 = vmatpush1.bf16.msra.mxu0 0
  %576 = vmatprep.subr.bf16.mxu0 0
  %577 = vmatpush1.bf16.msra.mxu0 0
  %578 = vmatprep.subr.bf16.mxu0 0
  %579 = vmatpush1.bf16.msra.mxu0 0
  %580 = vmatprep.subr.bf16.mxu0 0
  %581 = vmatpush1.bf16.msra.mxu0 0
  %582 = vmatprep.subr.bf16.mxu0 0
  %583 = vmatpush1.bf16.msra.mxu0 0
  %584 = vmatprep.subr.bf16.mxu0 0
  %585 = vmatpush1.bf16.msra.mxu0 0
  %586 = vmatprep.mubr.bf16.mxu0 0
  %587 = vmatmul.mubr.bf16.gmra.mrb[0].mxu0 %v393
  %v588 = vpop.f32.mrb[0].mxu0
  %v589 = vadd.f32 0.0, %v588
  %v590 = vpop.f32.mrb[0].mxu0
  %v591 = vadd.f32 0.0, %v590
  %v592 = vpop.f32.mrb[0].mxu0
  %v593 = vpop.f32.mrb[0].mxu0
  %594 = vdwg.mxu0
  %595 = vmatprep.subr.bf16.mxu0 %v493
  %596 = vmatpush1.bf16.msra.mxu0 %v492
  %597 = vmatprep.subr.bf16.mxu0 %v497
  %598 = vmatpush1.bf16.msra.mxu0 %v496
  %599 = vmatprep.subr.bf16.mxu0 %v501
  %600 = vmatpush1.bf16.msra.mxu0 %v500
  %601 = vmatprep.subr.bf16.mxu0 %v505
  %602 = vmatpush1.bf16.msra.mxu0 %v504
  %603 = vmatprep.subr.bf16.mxu0 %v509
  %604 = vmatpush1.bf16.msra.mxu0 %v508
  %605 = vmatprep.subr.bf16.mxu0 %v513
  %606 = vmatpush1.bf16.msra.mxu0 %v512
  %607 = vmatprep.subr.bf16.mxu0 %v517
  %608 = vmatpush1.bf16.msra.mxu0 %v516
  %609 = vmatprep.subr.bf16.mxu0 %v521
  %610 = vmatpush1.bf16.msra.mxu0 %v520
  %611 = vmatprep.subr.bf16.mxu0 0
  %612 = vmatpush1.bf16.msra.mxu0 0
  %613 = vmatprep.subr.bf16.mxu0 0
  %614 = vmatpush1.bf16.msra.mxu0 0
  %615 = vmatprep.subr.bf16.mxu0 0
  %616 = vmatpush1.bf16.msra.mxu0 0
  %617 = vmatprep.subr.bf16.mxu0 0
  %618 = vmatpush1.bf16.msra.mxu0 0
  %619 = vmatprep.subr.bf16.mxu0 0
  %620 = vmatpush1.bf16.msra.mxu0 0
  %621 = vmatprep.subr.bf16.mxu0 0
  %622 = vmatpush1.bf16.msra.mxu0 0
  %623 = vmatprep.subr.bf16.mxu0 0
  %624 = vmatpush1.bf16.msra.mxu0 0
  %625 = vmatprep.subr.bf16.mxu0 0
  %626 = vmatpush1.bf16.msra.mxu0 0
  %627 = vmatprep.mubr.bf16.mxu0 0
  %628 = vmatmul.mubr.bf16.gmra.mrb[0].mxu0 %v393
  %v629 = vpop.f32.mrb[0].mxu0
  %v630 = vadd.f32 0.0, %v629
  %v631 = vpop.f32.mrb[0].mxu0
  %v632 = vadd.f32 0.0, %v631
  %v633 = vpop.f32.mrb[0].mxu0
  %v634 = vpop.f32.mrb[0].mxu0
  %635 = vdwg.mxu0
  %v636 = vadd.f32 %v389, %v589
  %v637 = vadd.f32 %v390, %v591
  %v638 = vadd.f32 %v391, %v630
  %v639 = vadd.f32 %v392, %v632
  %v640 = vld [vmem:[#allocation3] sm:$0xff]
  %v641 = vxor.u32 %v382, 2147483648
  %v642 = vmul.f32 %v641, 1.442695
  %v643 = vpow.pop %v642
  %v644 = vadd.f32 %v643, 1.0
  %v645 = vrcp.pop %v644
  %v646 = vmul.f32 1.0, %v645
  %v647 = vxor.u32 %v383, 2147483648
  %v648 = vmul.f32 %v647, 1.442695
  %v649 = vpow.pop %v648
  %v650 = vadd.f32 %v649, 1.0
  %v651 = vrcp.pop %v650
  %v652 = vmul.f32 1.0, %v651
  %v653 = vtanh.pop %v384
  %v654 = vxor.u32 %v385, 2147483648
  %v655 = vmul.f32 %v654, 1.442695
  %v656 = vpow.pop %v655
  %v657 = vadd.f32 %v656, 1.0
  %v658 = vrcp.pop %v657
  %v659 = vmul.f32 1.0, %v658
  %v660 = vmul.f32 %v652, %v640
  %v661 = vmul.f32 %v646, %v653
  %v662 = vadd.f32 %v660, %v661
  %v663 = vtanh.pop %v662
  %v664 = vmul.f32 %v659, %v663
  %v665 = vld [vmem:[#allocation5] sm:$0xff]
  %v666 = vxor.u32 %v636, 2147483648
  %v667 = vmul.f32 %v666, 1.442695
  %v668 = vpow.pop %v667
  %v669 = vadd.f32 %v668, 1.0
  %v670 = vrcp.pop %v669
  %v671 = vmul.f32 1.0, %v670
  %v672 = vxor.u32 %v637, 2147483648
  %v673 = vmul.f32 %v672, 1.442695
  %v674 = vpow.pop %v673
  %v675 = vadd.f32 %v674, 1.0
  %v676 = vrcp.pop %v675
  %v677 = vmul.f32 1.0, %v676
  %v678 = vtanh.pop %v638
  %v679 = vxor.u32 %v639, 2147483648
  %v680 = vmul.f32 %v679, 1.442695
  %v681 = vpow.pop %v680
  %v682 = vadd.f32 %v681, 1.0
  %v683 = vrcp.pop %v682
  %v684 = vmul.f32 1.0, %v683
  %v685 = vmul.f32 %v677, %v665
  %v686 = vmul.f32 %v671, %v678
  %v687 = vadd.f32 %v685, %v686
  %v688 = vtanh.pop %v687
  %v689 = vmul.f32 %v684, %v688
  %v690 = vpack.c.bf16 %v664, %v664
  %691 = vst [vmem:[#allocation2] sm:$0xf] %v690
  %692 = vst [vmem:[#allocation3] sm:$0xff] %v662
  %v693 = vpack.c.bf16 %v689, %v689
  %694 = vst [vmem:[#allocation4] sm:$0xf] %v693
  %695 = vst [vmem:[#allocation5] sm:$0xff] %v687
  %696 = vst [vmem:[%s4] sm:$0xff] %v664
  %s697 = scalar_lea.vmem %s57, 56
  %698 = vst [vmem:[%s697] sm:$0xff] %v689
  %s699 = smul.u32 0, 8
  %s700 = ssub.s32 0, 0
  %s701 = smul.u32 %s700, 8
  %s702 = sadd.s32 %s701, 7
  %p703 = scmp.eq.s32.totalorder %s699, 7
  // Predicated region
  $region22: #{bidirectional_rnn.2} parent=0 // pred_check
    %p704 = pneg %p703
  $region23: #{bidirectional_rnn.2} parent=0 // pred_check_branch
    %706 = sbr.rel (%p704) target = $region25
  $region24: #{bidirectional_rnn.2} parent=0 // pred_region
    %707 = vst [vmem:[%s6] sm:$0xff] %v662
  $region25: #{bidirectional_rnn.2} parent=0 // pred_fallthru
    _
  %p708 = scmp.eq.s32.totalorder %s702, 7
  // Predicated region
  $region26: #{bidirectional_rnn.2} parent=0 // pred_check
    %p709 = pneg %p708
  $region27: #{bidirectional_rnn.2} parent=0 // pred_check_branch
    %711 = sbr.rel (%p709) target = $region29
  $region28: #{bidirectional_rnn.2} parent=0 // pred_region
    %712 = vst [vmem:[%s7] sm:$0xff] %v687
  $region29: #{bidirectional_rnn.2} parent=0 // pred_fallthru
    _
  %s713 = scalar_lea.vmem %s0, 16
  %v714 = vld [vmem:[%s713] sm:$0xff]
  %v715 = vld [vmem:[%s713 + $0x8] sm:$0xff]
  %v716 = vunpack.c.l.bf16 %v714
  %v717 = vunpack.c.h.bf16 %v714
  %v718 = vunpack.c.l.bf16 %v715
  %v719 = vunpack.c.h.bf16 %v715
  %v720 = vld [vmem:[#allocation2] sm:$0xf]
  %721 = vmatprep.subr.bf16.mxu0 %v237
  %722 = vmatpush1.bf16.msra.mxu0 %v236
  %723 = vmatprep.subr.bf16.mxu0 %v241
  %724 = vmatpush1.bf16.msra.mxu0 %v240
  %725 = vmatprep.subr.bf16.mxu0 %v245
  %726 = vmatpush1.bf16.msra.mxu0 %v244
  %727 = vmatprep.subr.bf16.mxu0 %v249
  %728 = vmatpush1.bf16.msra.mxu0 %v248
  %729 = vmatprep.subr.bf16.mxu0 %v253
  %730 = vmatpush1.bf16.msra.mxu0 %v252
  %731 = vmatprep.subr.bf16.mxu0 %v257
  %732 = vmatpush1.bf16.msra.mxu0 %v256
  %733 = vmatprep.subr.bf16.mxu0 %v261
  %734 = vmatpush1.bf16.msra.mxu0 %v260
  %735 = vmatprep.subr.bf16.mxu0 %v265
  %736 = vmatpush1.bf16.msra.mxu0 %v264
  %737 = vmatprep.subr.bf16.mxu0 0
  %738 = vmatpush1.bf16.msra.mxu0 0
  %739 = vmatprep.subr.bf16.mxu0 0
  %740 = vmatpush1.bf16.msra.mxu0 0
  %741 = vmatprep.subr.bf16.mxu0 0
  %742 = vmatpush1.bf16.msra.mxu0 0
  %743 = vmatprep.subr.bf16.mxu0 0
  %744 = vmatpush1.bf16.msra.mxu0 0
  %745 = vmatprep.subr.bf16.mxu0 0
  %746 = vmatpush1.bf16.msra.mxu0 0
  %747 = vmatprep.subr.bf16.mxu0 0
  %748 = vmatpush1.bf16.msra.mxu0 0
  %749 = vmatprep.subr.bf16.mxu0 0
  %750 = vmatpush1.bf16.msra.mxu0 0
  %751 = vmatprep.subr.bf16.mxu0 0
  %752 = vmatpush1.bf16.msra.mxu0 0
  %753 = vmatprep.mubr.bf16.mxu0 0
  %754 = vmatmul.mubr.bf16.gmra.mrb[0].mxu0 %v720
  %v755 = vpop.f32.mrb[0].mxu0
  %v756 = vadd.f32 0.0, %v755
  %v757 = vpop.f32.mrb[0].mxu0
  %v758 = vadd.f32 0.0, %v757
  %v759 = vpop.f32.mrb[0].mxu0
  %v760 = vpop.f32.mrb[0].mxu0
  %761 = vdwg.mxu0
  %762 = vmatprep.subr.bf16.mxu0 %v239
  %763 = vmatpush1.bf16.msra.mxu0 %v238
  %764 = vmatprep.subr.bf16.mxu0 %v243
  %765 = vmatpush1.bf16.msra.mxu0 %v242
  %766 = vmatprep.subr.bf16.mxu0 %v247
  %767 = vmatpush1.bf16.msra.mxu0 %v246
  %768 = vmatprep.subr.bf16.mxu0 %v251
  %769 = vmatpush1.bf16.msra.mxu0 %v250
  %770 = vmatprep.subr.bf16.mxu0 %v255
  %771 = vmatpush1.bf16.msra.mxu0 %v254
  %772 = vmatprep.subr.bf16.mxu0 %v259
  %773 = vmatpush1.bf16.msra.mxu0 %v258
  %774 = vmatprep.subr.bf16.mxu0 %v263
  %775 = vmatpush1.bf16.msra.mxu0 %v262
  %776 = vmatprep.subr.bf16.mxu0 %v267
  %777 = vmatpush1.bf16.msra.mxu0 %v266
  %778 = vmatprep.subr.bf16.mxu0 0
  %779 = vmatpush1.bf16.msra.mxu0 0
  %780 = vmatprep.subr.bf16.mxu0 0
  %781 = vmatpush1.bf16.msra.mxu0 0
  %782 = vmatprep.subr.bf16.mxu0 0
  %783 = vmatpush1.bf16.msra.mxu0 0
  %784 = vmatprep.subr.bf16.mxu0 0
  %785 = vmatpush1.bf16.msra.mxu0 0
  %786 = vmatprep.subr.bf16.mxu0 0
  %787 = vmatpush1.bf16.msra.mxu0 0
  %788 = vmatprep.subr.bf16.mxu0 0
  %789 = vmatpush1.bf16.msra.mxu0 0
  %790 = vmatprep.subr.bf16.mxu0 0
  %791 = vmatpush1.bf16.msra.mxu0 0
  %792 = vmatprep.subr.bf16.mxu0 0
  %793 = vmatpush1.bf16.msra.mxu0 0
  %794 = vmatprep.mubr.bf16.mxu0 0
  %795 = vmatmul.mubr.bf16.gmra.mrb[0].mxu0 %v720
  %v796 = vpop.f32.mrb[0].mxu0
  %v797 = vadd.f32 0.0, %v796
  %v798 = vpop.f32.mrb[0].mxu0
  %v799 = vadd.f32 0.0, %v798
  %v800 = vpop.f32.mrb[0].mxu0
  %v801 = vpop.f32.mrb[0].mxu0
  %802 = vdwg.mxu0
  %v803 = vadd.f32 %v716, %v756
  %v804 = vadd.f32 %v717, %v758
  %v805 = vadd.f32 %v718, %v797
  %v806 = vadd.f32 %v719, %v799
  %s807 = scalar_lea.vmem %s49, 96
  %v808 = vld [vmem:[%s807] sm:$0xff]
  %v809 = vld [vmem:[%s807 + $0x8] sm:$0xff]
  %v810 = vunpack.c.l.bf16 %v808
  %v811 = vunpack.c.h.bf16 %v808
  %v812 = vunpack.c.l.bf16 %v809
  %v813 = vunpack.c.h.bf16 %v809
  %v814 = vld [vmem:[#allocation4] sm:$0xf]
  %815 = vmatprep.subr.bf16.mxu0 %v491
  %816 = vmatpush1.bf16.msra.mxu0 %v490
  %817 = vmatprep.subr.bf16.mxu0 %v495
  %818 = vmatpush1.bf16.msra.mxu0 %v494
  %819 = vmatprep.subr.bf16.mxu0 %v499
  %820 = vmatpush1.bf16.msra.mxu0 %v498
  %821 = vmatprep.subr.bf16.mxu0 %v503
  %822 = vmatpush1.bf16.msra.mxu0 %v502
  %823 = vmatprep.subr.bf16.mxu0 %v507
  %824 = vmatpush1.bf16.msra.mxu0 %v506
  %825 = vmatprep.subr.bf16.mxu0 %v511
  %826 = vmatpush1.bf16.msra.mxu0 %v510
  %827 = vmatprep.subr.bf16.mxu0 %v515
  %828 = vmatpush1.bf16.msra.mxu0 %v514
  %829 = vmatprep.subr.bf16.mxu0 %v519
  %830 = vmatpush1.bf16.msra.mxu0 %v518
  %831 = vmatprep.subr.bf16.mxu0 0
  %832 = vmatpush1.bf16.msra.mxu0 0
  %833 = vmatprep.subr.bf16.mxu0 0
  %834 = vmatpush1.bf16.msra.mxu0 0
  %835 = vmatprep.subr.bf16.mxu0 0
  %836 = vmatpush1.bf16.msra.mxu0 0
  %837 = vmatprep.subr.bf16.mxu0 0
  %838 = vmatpush1.bf16.msra.mxu0 0
  %839 = vmatprep.subr.bf16.mxu0 0
  %840 = vmatpush1.bf16.msra.mxu0 0
  %841 = vmatprep.subr.bf16.mxu0 0
  %842 = vmatpush1.bf16.msra.mxu0 0
  %843 = vmatprep.subr.bf16.mxu0 0
  %844 = vmatpush1.bf16.msra.mxu0 0
  %845 = vmatprep.subr.bf16.mxu0 0
  %846 = vmatpush1.bf16.msra.mxu0 0
  %847 = vmatprep.mubr.bf16.mxu0 0
  %848 = vmatmul.mubr.bf16.gmra.mrb[0].mxu0 %v814
  %v849 = vpop.f32.mrb[0].mxu0
  %v850 = vadd.f32 0.0, %v849
  %v851 = vpop.f32.mrb[0].mxu0
  %v852 = vadd.f32 0.0, %v851
  %v853 = vpop.f32.mrb[0].mxu0
  %v854 = vpop.f32.mrb[0].mxu0
  %855 = vdwg.mxu0
  %856 = vmatprep.subr.bf16.mxu0 %v493
  %857 = vmatpush1.bf16.msra.mxu0 %v492
  %858 = vmatprep.subr.bf16.mxu0 %v497
  %859 = vmatpush1.bf16.msra.mxu0 %v496
  %860 = vmatprep.subr.bf16.mxu0 %v501
  %861 = vmatpush1.bf16.msra.mxu0 %v500
  %862 = vmatprep.subr.bf16.mxu0 %v505
  %863 = vmatpush1.bf16.msra.mxu0 %v504
  %864 = vmatprep.subr.bf16.mxu0 %v509
  %865 = vmatpush1.bf16.msra.mxu0 %v508
  %866 = vmatprep.subr.bf16.mxu0 %v513
  %867 = vmatpush1.bf16.msra.mxu0 %v512
  %868 = vmatprep.subr.bf16.mxu0 %v517
  %869 = vmatpush1.bf16.msra.mxu0 %v516
  %870 = vmatprep.subr.bf16.mxu0 %v521
  %871 = vmatpush1.bf16.msra.mxu0 %v520
  %872 = vmatprep.subr.bf16.mxu0 0
  %873 = vmatpush1.bf16.msra.mxu0 0
  %874 = vmatprep.subr.bf16.mxu0 0
  %875 = vmatpush1.bf16.msra.mxu0 0
  %876 = vmatprep.subr.bf16.mxu0 0
  %877 = vmatpush1.bf16.msra.mxu0 0
  %878 = vmatprep.subr.bf16.mxu0 0
  %879 = vmatpush1.bf16.msra.mxu0 0
  %880 = vmatprep.subr.bf16.mxu0 0
  %881 = vmatpush1.bf16.msra.mxu0 0
  %882 = vmatprep.subr.bf16.mxu0 0
  %883 = vmatpush1.bf16.msra.mxu0 0
  %884 = vmatprep.subr.bf16.mxu0 0
  %885 = vmatpush1.bf16.msra.mxu0 0
  %886 = vmatprep.subr.bf16.mxu0 0
  %887 = vmatpush1.bf16.msra.mxu0 0
  %888 = vmatprep.mubr.bf16.mxu0 0
  %889 = vmatmul.mubr.bf16.gmra.mrb[0].mxu0 %v814
  %v890 = vpop.f32.mrb[0].mxu0
  %v891 = vadd.f32 0.0, %v890
  %v892 = vpop.f32.mrb[0].mxu0
  %v893 = vadd.f32 0.0, %v892
  %v894 = vpop.f32.mrb[0].mxu0
  %v895 = vpop.f32.mrb[0].mxu0
  %896 = vdwg.mxu0
  %v897 = vadd.f32 %v810, %v850
  %v898 = vadd.f32 %v811, %v852
  %v899 = vadd.f32 %v812, %v891
  %v900 = vadd.f32 %v813, %v893
  %v901 = vld [vmem:[#allocation3] sm:$0xff]
  %v902 = vxor.u32 %v803, 2147483648
  %v903 = vmul.f32 %v902, 1.442695
  %v904 = vpow.pop %v903
  %v905 = vadd.f32 %v904, 1.0
  %v906 = vrcp.pop %v905
  %v907 = vmul.f32 1.0, %v906
  %v908 = vxor.u32 %v804, 2147483648
  %v909 = vmul.f32 %v908, 1.442695
  %v910 = vpow.pop %v909
  %v911 = vadd.f32 %v910, 1.0
  %v912 = vrcp.pop %v911
  %v913 = vmul.f32 1.0, %v912
  %v914 = vtanh.pop %v805
  %v915 = vxor.u32 %v806, 2147483648
  %v916 = vmul.f32 %v915, 1.442695
  %v917 = vpow.pop %v916
  %v918 = vadd.f32 %v917, 1.0
  %v919 = vrcp.pop %v918
  %v920 = vmul.f32 1.0, %v919
  %v921 = vmul.f32 %v913, %v901
  %v922 = vmul.f32 %v907, %v914
  %v923 = vadd.f32 %v921, %v922
  %v924 = vtanh.pop %v923
  %v925 = vmul.f32 %v920, %v924
  %v926 = vld [vmem:[#allocation5] sm:$0xff]
  %v927 = vxor.u32 %v897, 2147483648
  %v928 = vmul.f32 %v927, 1.442695
  %v929 = vpow.pop %v928
  %v930 = vadd.f32 %v929, 1.0
  %v931 = vrcp.pop %v930
  %v932 = vmul.f32 1.0, %v931
  %v933 = vxor.u32 %v898, 2147483648
  %v934 = vmul.f32 %v933, 1.442695
  %v935 = vpow.pop %v934
  %v936 = vadd.f32 %v935, 1.0
  %v937 = vrcp.pop %v936
  %v938 = vmul.f32 1.0, %v937
  %v939 = vtanh.pop %v899
  %v940 = vxor.u32 %v900, 2147483648
  %v941 = vmul.f32 %v940, 1.442695
  %v942 = vpow.pop %v941
  %v943 = vadd.f32 %v942, 1.0
  %v944 = vrcp.pop %v943
  %v945 = vmul.f32 1.0, %v944
  %v946 = vmul.f32 %v938, %v926
  %v947 = vmul.f32 %v932, %v939
  %v948 = vadd.f32 %v946, %v947
  %v949 = vtanh.pop %v948
  %v950 = vmul.f32 %v945, %v949
  %v951 = vpack.c.bf16 %v925, %v925
  %952 = vst [vmem:[#allocation2] sm:$0xf] %v951
  %953 = vst [vmem:[#allocation3] sm:$0xff] %v923
  %v954 = vpack.c.bf16 %v950, %v950
  %955 = vst [vmem:[#allocation4] sm:$0xf] %v954
  %956 = vst [vmem:[#allocation5] sm:$0xff] %v948
  %s957 = scalar_lea.vmem %s4, 8
  %958 = vst [vmem:[%s957] sm:$0xff] %v925
  %s959 = scalar_lea.vmem %s57, 48
  %960 = vst [vmem:[%s959] sm:$0xff] %v950
  %s961 = sadd.s32 %s699, 1
  %s962 = sadd.s32 %s701, 6
  %p963 = scmp.eq.s32.totalorder %s961, 7
  // Predicated region
  $region30: #{bidirectional_rnn.2} parent=0 // pred_check
    %p964 = pneg %p963
  $region31: #{bidirectional_rnn.2} parent=0 // pred_check_branch
    %966 = sbr.rel (%p964) target = $region33
  $region32: #{bidirectional_rnn.2} parent=0 // pred_region
    %967 = vst [vmem:[%s6] sm:$0xff] %v923
  $region33: #{bidirectional_rnn.2} parent=0 // pred_fallthru
    _
  %p968 = scmp.eq.s32.totalorder %s962, 7
  // Predicated region
  $region34: #{bidirectional_rnn.2} parent=0 // pred_check
    %p969 = pneg %p968
  $region35: #{bidirectional_rnn.2} parent=0 // pred_check_branch
    %971 = sbr.rel (%p969) target = $region37
  $region36: #{bidirectional_rnn.2} parent=0 // pred_region
    %972 = vst [vmem:[%s7] sm:$0xff] %v948
  $region37: #{bidirectional_rnn.2} parent=0 // pred_fallthru
    _
  %s973 = scalar_lea.vmem %s0, 32
  %v974 = vld [vmem:[%s973] sm:$0xff]
  %v975 = vld [vmem:[%s973 + $0x8] sm:$0xff]
  %v976 = vunpack.c.l.bf16 %v974
  %v977 = vunpack.c.h.bf16 %v974
  %v978 = vunpack.c.l.bf16 %v975
  %v979 = vunpack.c.h.bf16 %v975
  %v980 = vld [vmem:[#allocation2] sm:$0xf]
  %981 = vmatprep.subr.bf16.mxu0 %v237
  %982 = vmatpush1.bf16.msra.mxu0 %v236
  %983 = vmatprep.subr.bf16.mxu0 %v241
  %984 = vmatpush1.bf16.msra.mxu0 %v240
  %985 = vmatprep.subr.bf16.mxu0 %v245
  %986 = vmatpush1.bf16.msra.mxu0 %v244
  %987 = vmatprep.subr.bf16.mxu0 %v249
  %988 = vmatpush1.bf16.msra.mxu0 %v248
  %989 = vmatprep.subr.bf16.mxu0 %v253
  %990 = vmatpush1.bf16.msra.mxu0 %v252
  %991 = vmatprep.subr.bf16.mxu0 %v257
  %992 = vmatpush1.bf16.msra.mxu0 %v256
  %993 = vmatprep.subr.bf16.mxu0 %v261
  %994 = vmatpush1.bf16.msra.mxu0 %v260
  %995 = vmatprep.subr.bf16.mxu0 %v265
  %996 = vmatpush1.bf16.msra.mxu0 %v264
  %997 = vmatprep.subr.bf16.mxu0 0
  %998 = vmatpush1.bf16.msra.mxu0 0
  %999 = vmatprep.subr.bf16.mxu0 0
  %1000 = vmatpush1.bf16.msra.mxu0 0
  %1001 = vmatprep.subr.bf16.mxu0 0
  %1002 = vmatpush1.bf16.msra.mxu0 0
  %1003 = vmatprep.subr.bf16.mxu0 0
  %1004 = vmatpush1.bf16.msra.mxu0 0
  %1005 = vmatprep.subr.bf16.mxu0 0
  %1006 = vmatpush1.bf16.msra.mxu0 0
  %1007 = vmatprep.subr.bf16.mxu0 0
  %1008 = vmatpush1.bf16.msra.mxu0 0
  %1009 = vmatprep.subr.bf16.mxu0 0
  %1010 = vmatpush1.bf16.msra.mxu0 0
  %1011 = vmatprep.subr.bf16.mxu0 0
  %1012 = vmatpush1.bf16.msra.mxu0 0
  %1013 = vmatprep.mubr.bf16.mxu0 0
  %1014 = vmatmul.mubr.bf16.gmra.mrb[0].mxu0 %v980
  %v1015 = vpop.f32.mrb[0].mxu0
  %v1016 = vadd.f32 0.0, %v1015
  %v1017 = vpop.f32.mrb[0].mxu0
  %v1018 = vadd.f32 0.0, %v1017
  %v1019 = vpop.f32.mrb[0].mxu0
  %v1020 = vpop.f32.mrb[0].mxu0
  %1021 = vdwg.mxu0
  %1022 = vmatprep.subr.bf16.mxu0 %v239
  %1023 = vmatpush1.bf16.msra.mxu0 %v238
  %1024 = vmatprep.subr.bf16.mxu0 %v243
  %1025 = vmatpush1.bf16.msra.mxu0 %v242
  %1026 = vmatprep.subr.bf16.mxu0 %v247
  %1027 = vmatpush1.bf16.msra.mxu0 %v246
  %1028 = vmatprep.subr.bf16.mxu0 %v251
  %1029 = vmatpush1.bf16.msra.mxu0 %v250
  %1030 = vmatprep.subr.bf16.mxu0 %v255
  %1031 = vmatpush1.bf16.msra.mxu0 %v254
  %1032 = vmatprep.subr.bf16.mxu0 %v259
  %1033 = vmatpush1.bf16.msra.mxu0 %v258
  %1034 = vmatprep.subr.bf16.mxu0 %v263
  %1035 = vmatpush1.bf16.msra.mxu0 %v262
  %1036 = vmatprep.subr.bf16.mxu0 %v267
  %1037 = vmatpush1.bf16.msra.mxu0 %v266
  %1038 = vmatprep.subr.bf16.mxu0 0
  %1039 = vmatpush1.bf16.msra.mxu0 0
  %1040 = vmatprep.subr.bf16.mxu0 0
  %1041 = vmatpush1.bf16.msra.mxu0 0
  %1042 = vmatprep.subr.bf16.mxu0 0
  %1043 = vmatpush1.bf16.msra.mxu0 0
  %1044 = vmatprep.subr.bf16.mxu0 0
  %1045 = vmatpush1.bf16.msra.mxu0 0
  %1046 = vmatprep.subr.bf16.mxu0 0
  %1047 = vmatpush1.bf16.msra.mxu0 0
  %1048 = vmatprep.subr.bf16.mxu0 0
  %1049 = vmatpush1.bf16.msra.mxu0 0
  %1050 = vmatprep.subr.bf16.mxu0 0
  %1051 = vmatpush1.bf16.msra.mxu0 0
  %1052 = vmatprep.subr.bf16.mxu0 0
  %1053 = vmatpush1.bf16.msra.mxu0 0
  %1054 = vmatprep.mubr.bf16.mxu0 0
  %1055 = vmatmul.mubr.bf16.gmra.mrb[0].mxu0 %v980
  %v1056 = vpop.f32.mrb[0].mxu0
  %v1057 = vadd.f32 0.0, %v1056
  %v1058 = vpop.f32.mrb[0].mxu0
  %v1059 = vadd.f32 0.0, %v1058
  %v1060 = vpop.f32.mrb[0].mxu0
  %v1061 = vpop.f32.mrb[0].mxu0
  %1062 = vdwg.mxu0
  %v1063 = vadd.f32 %v976, %v1016
  %v1064 = vadd.f32 %v977, %v1018
  %v1065 = vadd.f32 %v978, %v1057
  %v1066 = vadd.f32 %v979, %v1059
  %s1067 = scalar_lea.vmem %s49, 80
  %v1068 = vld [vmem:[%s1067] sm:$0xff]
  %v1069 = vld [vmem:[%s1067 + $0x8] sm:$0xff]
  %v1070 = vunpack.c.l.bf16 %v1068
  %v1071 = vunpack.c.h.bf16 %v1068
  %v1072 = vunpack.c.l.bf16 %v1069
  %v1073 = vunpack.c.h.bf16 %v1069
  %v1074 = vld [vmem:[#allocation4] sm:$0xf]
  %1075 = vmatprep.subr.bf16.mxu0 %v491
  %1076 = vmatpush1.bf16.msra.mxu0 %v490
  %1077 = vmatprep.subr.bf16.mxu0 %v495
  %1078 = vmatpush1.bf16.msra.mxu0 %v494
  %1079 = vmatprep.subr.bf16.mxu0 %v499
  %1080 = vmatpush1.bf16.msra.mxu0 %v498
  %1081 = vmatprep.subr.bf16.mxu0 %v503
  %1082 = vmatpush1.bf16.msra.mxu0 %v502
  %1083 = vmatprep.subr.bf16.mxu0 %v507
  %1084 = vmatpush1.bf16.msra.mxu0 %v506
  %1085 = vmatprep.subr.bf16.mxu0 %v511
  %1086 = vmatpush1.bf16.msra.mxu0 %v510
  %1087 = vmatprep.subr.bf16.mxu0 %v515
  %1088 = vmatpush1.bf16.msra.mxu0 %v514
  %1089 = vmatprep.subr.bf16.mxu0 %v519
  %1090 = vmatpush1.bf16.msra.mxu0 %v518
  %1091 = vmatprep.subr.bf16.mxu0 0
  %1092 = vmatpush1.bf16.msra.mxu0 0
  %1093 = vmatprep.subr.bf16.mxu0 0
  %1094 = vmatpush1.bf16.msra.mxu0 0
  %1095 = vmatprep.subr.bf16.mxu0 0
  %1096 = vmatpush1.bf16.msra.mxu0 0
  %1097 = vmatprep.subr.bf16.mxu0 0
  %1098 = vmatpush1.bf16.msra.mxu0 0
  %1099 = vmatprep.subr.bf16.mxu0 0
  %1100 = vmatpush1.bf16.msra.mxu0 0
  %1101 = vmatprep.subr.bf16.mxu0 0
  %1102 = vmatpush1.bf16.msra.mxu0 0
  %1103 = vmatprep.subr.bf16.mxu0 0
  %1104 = vmatpush1.bf16.msra.mxu0 0
  %1105 = vmatprep.subr.bf16.mxu0 0
  %1106 = vmatpush1.bf16.msra.mxu0 0
  %1107 = vmatprep.mubr.bf16.mxu0 0
  %1108 = vmatmul.mubr.bf16.gmra.mrb[0].mxu0 %v1074
  %v1109 = vpop.f32.mrb[0].mxu0
  %v1110 = vadd.f32 0.0, %v1109
  %v1111 = vpop.f32.mrb[0].mxu0
  %v1112 = vadd.f32 0.0, %v1111
  %v1113 = vpop.f32.mrb[0].mxu0
  %v1114 = vpop.f32.mrb[0].mxu0
  %1115 = vdwg.mxu0
  %1116 = vmatprep.subr.bf16.mxu0 %v493
  %1117 = vmatpush1.bf16.msra.mxu0 %v492
  %1118 = vmatprep.subr.bf16.mxu0 %v497
  %1119 = vmatpush1.bf16.msra.mxu0 %v496
  %1120 = vmatprep.subr.bf16.mxu0 %v501
  %1121 = vmatpush1.bf16.msra.mxu0 %v500
  %1122 = vmatprep.subr.bf16.mxu0 %v505
  %1123 = vmatpush1.bf16.msra.mxu0 %v504
  %1124 = vmatprep.subr.bf16.mxu0 %v509
  %1125 = vmatpush1.bf16.msra.mxu0 %v508
  %1126 = vmatprep.subr.bf16.mxu0 %v513
  %1127 = vmatpush1.bf16.msra.mxu0 %v512
  %1128 = vmatprep.subr.bf16.mxu0 %v517
  %1129 = vmatpush1.bf16.msra.mxu0 %v516
  %1130 = vmatprep.subr.bf16.mxu0 %v521
  %1131 = vmatpush1.bf16.msra.mxu0 %v520
  %1132 = vmatprep.subr.bf16.mxu0 0
  %1133 = vmatpush1.bf16.msra.mxu0 0
  %1134 = vmatprep.subr.bf16.mxu0 0
  %1135 = vmatpush1.bf16.msra.mxu0 0
  %1136 = vmatprep.subr.bf16.mxu0 0
  %1137 = vmatpush1.bf16.msra.mxu0 0
  %1138 = vmatprep.subr.bf16.mxu0 0
  %1139 = vmatpush1.bf16.msra.mxu0 0
  %1140 = vmatprep.subr.bf16.mxu0 0
  %1141 = vmatpush1.bf16.msra.mxu0 0
  %1142 = vmatprep.subr.bf16.mxu0 0
  %1143 = vmatpush1.bf16.msra.mxu0 0
  %1144 = vmatprep.subr.bf16.mxu0 0
  %1145 = vmatpush1.bf16.msra.mxu0 0
  %1146 = vmatprep.subr.bf16.mxu0 0
  %1147 = vmatpush1.bf16.msra.mxu0 0
  %1148 = vmatprep.mubr.bf16.mxu0 0
  %1149 = vmatmul.mubr.bf16.gmra.mrb[0].mxu0 %v1074
  %v1150 = vpop.f32.mrb[0].mxu0
  %v1151 = vadd.f32 0.0, %v1150
  %v1152 = vpop.f32.mrb[0].mxu0
  %v1153 = vadd.f32 0.0, %v1152
  %v1154 = vpop.f32.mrb[0].mxu0
  %v1155 = vpop.f32.mrb[0].mxu0
  %1156 = vdwg.mxu0
  %v1157 = vadd.f32 %v1070, %v1110
  %v1158 = vadd.f32 %v1071, %v1112
  %v1159 = vadd.f32 %v1072, %v1151
  %v1160 = vadd.f32 %v1073, %v1153
  %v1161 = vld [vmem:[#allocation3] sm:$0xff]
  %v1162 = vxor.u32 %v1063, 2147483648
  %v1163 = vmul.f32 %v1162, 1.442695
  %v1164 = vpow.pop %v1163
  %v1165 = vadd.f32 %v1164, 1.0
  %v1166 = vrcp.pop %v1165
  %v1167 = vmul.f32 1.0, %v1166
  %v1168 = vxor.u32 %v1064, 2147483648
  %v1169 = vmul.f32 %v1168, 1.442695
  %v1170 = vpow.pop %v1169
  %v1171 = vadd.f32 %v1170, 1.0
  %v1172 = vrcp.pop %v1171
  %v1173 = vmul.f32 1.0, %v1172
  %v1174 = vtanh.pop %v1065
  %v1175 = vxor.u32 %v1066, 2147483648
  %v1176 = vmul.f32 %v1175, 1.442695
  %v1177 = vpow.pop %v1176
  %v1178 = vadd.f32 %v1177, 1.0
  %v1179 = vrcp.pop %v1178
  %v1180 = vmul.f32 1.0, %v1179
  %v1181 = vmul.f32 %v1173, %v1161
  %v1182 = vmul.f32 %v1167, %v1174
  %v1183 = vadd.f32 %v1181, %v1182
  %v1184 = vtanh.pop %v1183
  %v1185 = vmul.f32 %v1180, %v1184
  %v1186 = vld [vmem:[#allocation5] sm:$0xff]
  %v1187 = vxor.u32 %v1157, 2147483648
  %v1188 = vmul.f32 %v1187, 1.442695
  %v1189 = vpow.pop %v1188
  %v1190 = vadd.f32 %v1189, 1.0
  %v1191 = vrcp.pop %v1190
  %v1192 = vmul.f32 1.0, %v1191
  %v1193 = vxor.u32 %v1158, 2147483648
  %v1194 = vmul.f32 %v1193, 1.442695
  %v1195 = vpow.pop %v1194
  %v1196 = vadd.f32 %v1195, 1.0
  %v1197 = vrcp.pop %v1196
  %v1198 = vmul.f32 1.0, %v1197
  %v1199 = vtanh.pop %v1159
  %v1200 = vxor.u32 %v1160, 2147483648
  %v1201 = vmul.f32 %v1200, 1.442695
  %v1202 = vpow.pop %v1201
  %v1203 = vadd.f32 %v1202, 1.0
  %v1204 = vrcp.pop %v1203
  %v1205 = vmul.f32 1.0, %v1204
  %v1206 = vmul.f32 %v1198, %v1186
  %v1207 = vmul.f32 %v1192, %v1199
  %v1208 = vadd.f32 %v1206, %v1207
  %v1209 = vtanh.pop %v1208
  %v1210 = vmul.f32 %v1205, %v1209
  %v1211 = vpack.c.bf16 %v1185, %v1185
  %1212 = vst [vmem:[#allocation2] sm:$0xf] %v1211
  %1213 = vst [vmem:[#allocation3] sm:$0xff] %v1183
  %v1214 = vpack.c.bf16 %v1210, %v1210
  %1215 = vst [vmem:[#allocation4] sm:$0xf] %v1214
  %1216 = vst [vmem:[#allocation5] sm:$0xff] %v1208
  %s1217 = scalar_lea.vmem %s4, 16
  %1218 = vst [vmem:[%s1217] sm:$0xff] %v1185
  %s1219 = scalar_lea.vmem %s57, 40
  %1220 = vst [vmem:[%s1219] sm:$0xff] %v1210
  %s1221 = sadd.s32 %s699, 2
  %s1222 = sadd.s32 %s701, 5
  %p1223 = scmp.eq.s32.totalorder %s1221, 7
  // Predicated region
  $region38: #{bidirectional_rnn.2} parent=0 // pred_check
    %p1224 = pneg %p1223
  $region39: #{bidirectional_rnn.2} parent=0 // pred_check_branch
    %1226 = sbr.rel (%p1224) target = $region41
  $region40: #{bidirectional_rnn.2} parent=0 // pred_region
    %1227 = vst [vmem:[%s6] sm:$0xff] %v1183
  $region41: #{bidirectional_rnn.2} parent=0 // pred_fallthru
    _
  %p1228 = scmp.eq.s32.totalorder %s1222, 7
  // Predicated region
  $region42: #{bidirectional_rnn.2} parent=0 // pred_check
    %p1229 = pneg %p1228
  $region43: #{bidirectional_rnn.2} parent=0 // pred_check_branch
    %1231 = sbr.rel (%p1229) target = $region45
  $region44: #{bidirectional_rnn.2} parent=0 // pred_region
    %1232 = vst [vmem:[%s7] sm:$0xff] %v1208
  $region45: #{bidirectional_rnn.2} parent=0 // pred_fallthru
    _
  %s1233 = scalar_lea.vmem %s0, 48
  %v1234 = vld [vmem:[%s1233] sm:$0xff]
  %v1235 = vld [vmem:[%s1233 + $0x8] sm:$0xff]
  %v1236 = vunpack.c.l.bf16 %v1234
  %v1237 = vunpack.c.h.bf16 %v1234
  %v1238 = vunpack.c.l.bf16 %v1235
  %v1239 = vunpack.c.h.bf16 %v1235
  %v1240 = vld [vmem:[#allocation2] sm:$0xf]
  %1241 = vmatprep.subr.bf16.mxu0 %v237
  %1242 = vmatpush1.bf16.msra.mxu0 %v236
  %1243 = vmatprep.subr.bf16.mxu0 %v241
  %1244 = vmatpush1.bf16.msra.mxu0 %v240
  %1245 = vmatprep.subr.bf16.mxu0 %v245
  %1246 = vmatpush1.bf16.msra.mxu0 %v244
  %1247 = vmatprep.subr.bf16.mxu0 %v249
  %1248 = vmatpush1.bf16.msra.mxu0 %v248
  %1249 = vmatprep.subr.bf16.mxu0 %v253
  %1250 = vmatpush1.bf16.msra.mxu0 %v252
  %1251 = vmatprep.subr.bf16.mxu0 %v257
  %1252 = vmatpush1.bf16.msra.mxu0 %v256
  %1253 = vmatprep.subr.bf16.mxu0 %v261
  %1254 = vmatpush1.bf16.msra.mxu0 %v260
  %1255 = vmatprep.subr.bf16.mxu0 %v265
  %1256 = vmatpush1.bf16.msra.mxu0 %v264
  %1257 = vmatprep.subr.bf16.mxu0 0
  %1258 = vmatpush1.bf16.msra.mxu0 0
  %1259 = vmatprep.subr.bf16.mxu0 0
  %1260 = vmatpush1.bf16.msra.mxu0 0
  %1261 = vmatprep.subr.bf16.mxu0 0
  %1262 = vmatpush1.bf16.msra.mxu0 0
  %1263 = vmatprep.subr.bf16.mxu0 0
  %1264 = vmatpush1.bf16.msra.mxu0 0
  %1265 = vmatprep.subr.bf16.mxu0 0
  %1266 = vmatpush1.bf16.msra.mxu0 0
  %1267 = vmatprep.subr.bf16.mxu0 0
  %1268 = vmatpush1.bf16.msra.mxu0 0
  %1269 = vmatprep.subr.bf16.mxu0 0
  %1270 = vmatpush1.bf16.msra.mxu0 0
  %1271 = vmatprep.subr.bf16.mxu0 0
  %1272 = vmatpush1.bf16.msra.mxu0 0
  %1273 = vmatprep.mubr.bf16.mxu0 0
  %1274 = vmatmul.mubr.bf16.gmra.mrb[0].mxu0 %v1240
  %v1275 = vpop.f32.mrb[0].mxu0
  %v1276 = vadd.f32 0.0, %v1275
  %v1277 = vpop.f32.mrb[0].mxu0
  %v1278 = vadd.f32 0.0, %v1277
  %v1279 = vpop.f32.mrb[0].mxu0
  %v1280 = vpop.f32.mrb[0].mxu0
  %1281 = vdwg.mxu0
  %1282 = vmatprep.subr.bf16.mxu0 %v239
  %1283 = vmatpush1.bf16.msra.mxu0 %v238
  %1284 = vmatprep.subr.bf16.mxu0 %v243
  %1285 = vmatpush1.bf16.msra.mxu0 %v242
  %1286 = vmatprep.subr.bf16.mxu0 %v247
  %1287 = vmatpush1.bf16.msra.mxu0 %v246
  %1288 = vmatprep.subr.bf16.mxu0 %v251
  %1289 = vmatpush1.bf16.msra.mxu0 %v250
  %1290 = vmatprep.subr.bf16.mxu0 %v255
  %1291 = vmatpush1.bf16.msra.mxu0 %v254
  %1292 = vmatprep.subr.bf16.mxu0 %v259
  %1293 = vmatpush1.bf16.msra.mxu0 %v258
  %1294 = vmatprep.subr.bf16.mxu0 %v263
  %1295 = vmatpush1.bf16.msra.mxu0 %v262
  %1296 = vmatprep.subr.bf16.mxu0 %v267
  %1297 = vmatpush1.bf16.msra.mxu0 %v266
  %1298 = vmatprep.subr.bf16.mxu0 0
  %1299 = vmatpush1.bf16.msra.mxu0 0
  %1300 = vmatprep.subr.bf16.mxu0 0
  %1301 = vmatpush1.bf16.msra.mxu0 0
  %1302 = vmatprep.subr.bf16.mxu0 0
  %1303 = vmatpush1.bf16.msra.mxu0 0
  %1304 = vmatprep.subr.bf16.mxu0 0
  %1305 = vmatpush1.bf16.msra.mxu0 0
  %1306 = vmatprep.subr.bf16.mxu0 0
  %1307 = vmatpush1.bf16.msra.mxu0 0
  %1308 = vmatprep.subr.bf16.mxu0 0
  %1309 = vmatpush1.bf16.msra.mxu0 0
  %1310 = vmatprep.subr.bf16.mxu0 0
  %1311 = vmatpush1.bf16.msra.mxu0 0
  %1312 = vmatprep.subr.bf16.mxu0 0
  %1313 = vmatpush1.bf16.msra.mxu0 0
  %1314 = vmatprep.mubr.bf16.mxu0 0
  %1315 = vmatmul.mubr.bf16.gmra.mrb[0].mxu0 %v1240
  %v1316 = vpop.f32.mrb[0].mxu0
  %v1317 = vadd.f32 0.0, %v1316
  %v1318 = vpop.f32.mrb[0].mxu0
  %v1319 = vadd.f32 0.0, %v1318
  %v1320 = vpop.f32.mrb[0].mxu0
  %v1321 = vpop.f32.mrb[0].mxu0
  %1322 = vdwg.mxu0
  %v1323 = vadd.f32 %v1236, %v1276
  %v1324 = vadd.f32 %v1237, %v1278
  %v1325 = vadd.f32 %v1238, %v1317
  %v1326 = vadd.f32 %v1239, %v1319
  %s1327 = scalar_lea.vmem %s49, 64
  %v1328 = vld [vmem:[%s1327] sm:$0xff]
  %v1329 = vld [vmem:[%s1327 + $0x8] sm:$0xff]
  %v1330 = vunpack.c.l.bf16 %v1328
  %v1331 = vunpack.c.h.bf16 %v1328
  %v1332 = vunpack.c.l.bf16 %v1329
  %v1333 = vunpack.c.h.bf16 %v1329
  %v1334 = vld [vmem:[#allocation4] sm:$0xf]
  %1335 = vmatprep.subr.bf16.mxu0 %v491
  %1336 = vmatpush1.bf16.msra.mxu0 %v490
  %1337 = vmatprep.subr.bf16.mxu0 %v495
  %1338 = vmatpush1.bf16.msra.mxu0 %v494
  %1339 = vmatprep.subr.bf16.mxu0 %v499
  %1340 = vmatpush1.bf16.msra.mxu0 %v498
  %1341 = vmatprep.subr.bf16.mxu0 %v503
  %1342 = vmatpush1.bf16.msra.mxu0 %v502
  %1343 = vmatprep.subr.bf16.mxu0 %v507
  %1344 = vmatpush1.bf16.msra.mxu0 %v506
  %1345 = vmatprep.subr.bf16.mxu0 %v511
  %1346 = vmatpush1.bf16.msra.mxu0 %v510
  %1347 = vmatprep.subr.bf16.mxu0 %v515
  %1348 = vmatpush1.bf16.msra.mxu0 %v514
  %1349 = vmatprep.subr.bf16.mxu0 %v519
  %1350 = vmatpush1.bf16.msra.mxu0 %v518
  %1351 = vmatprep.subr.bf16.mxu0 0
  %1352 = vmatpush1.bf16.msra.mxu0 0
  %1353 = vmatprep.subr.bf16.mxu0 0
  %1354 = vmatpush1.bf16.msra.mxu0 0
  %1355 = vmatprep.subr.bf16.mxu0 0
  %1356 = vmatpush1.bf16.msra.mxu0 0
  %1357 = vmatprep.subr.bf16.mxu0 0
  %1358 = vmatpush1.bf16.msra.mxu0 0
  %1359 = vmatprep.subr.bf16.mxu0 0
  %1360 = vmatpush1.bf16.msra.mxu0 0
  %1361 = vmatprep.subr.bf16.mxu0 0
  %1362 = vmatpush1.bf16.msra.mxu0 0
  %1363 = vmatprep.subr.bf16.mxu0 0
  %1364 = vmatpush1.bf16.msra.mxu0 0
  %1365 = vmatprep.subr.bf16.mxu0 0
  %1366 = vmatpush1.bf16.msra.mxu0 0
  %1367 = vmatprep.mubr.bf16.mxu0 0
  %1368 = vmatmul.mubr.bf16.gmra.mrb[0].mxu0 %v1334
  %v1369 = vpop.f32.mrb[0].mxu0
  %v1370 = vadd.f32 0.0, %v1369
  %v1371 = vpop.f32.mrb[0].mxu0
  %v1372 = vadd.f32 0.0, %v1371
  %v1373 = vpop.f32.mrb[0].mxu0
  %v1374 = vpop.f32.mrb[0].mxu0
  %1375 = vdwg.mxu0
  %1376 = vmatprep.subr.bf16.mxu0 %v493
  %1377 = vmatpush1.bf16.msra.mxu0 %v492
  %1378 = vmatprep.subr.bf16.mxu0 %v497
  %1379 = vmatpush1.bf16.msra.mxu0 %v496
  %1380 = vmatprep.subr.bf16.mxu0 %v501
  %1381 = vmatpush1.bf16.msra.mxu0 %v500
  %1382 = vmatprep.subr.bf16.mxu0 %v505
  %1383 = vmatpush1.bf16.msra.mxu0 %v504
  %1384 = vmatprep.subr.bf16.mxu0 %v509
  %1385 = vmatpush1.bf16.msra.mxu0 %v508
  %1386 = vmatprep.subr.bf16.mxu0 %v513
  %1387 = vmatpush1.bf16.msra.mxu0 %v512
  %1388 = vmatprep.subr.bf16.mxu0 %v517
  %1389 = vmatpush1.bf16.msra.mxu0 %v516
  %1390 = vmatprep.subr.bf16.mxu0 %v521
  %1391 = vmatpush1.bf16.msra.mxu0 %v520
  %1392 = vmatprep.subr.bf16.mxu0 0
  %1393 = vmatpush1.bf16.msra.mxu0 0
  %1394 = vmatprep.subr.bf16.mxu0 0
  %1395 = vmatpush1.bf16.msra.mxu0 0
  %1396 = vmatprep.subr.bf16.mxu0 0
  %1397 = vmatpush1.bf16.msra.mxu0 0
  %1398 = vmatprep.subr.bf16.mxu0 0
  %1399 = vmatpush1.bf16.msra.mxu0 0
  %1400 = vmatprep.subr.bf16.mxu0 0
  %1401 = vmatpush1.bf16.msra.mxu0 0
  %1402 = vmatprep.subr.bf16.mxu0 0
  %1403 = vmatpush1.bf16.msra.mxu0 0
  %1404 = vmatprep.subr.bf16.mxu0 0
  %1405 = vmatpush1.bf16.msra.mxu0 0
  %1406 = vmatprep.subr.bf16.mxu0 0
  %1407 = vmatpush1.bf16.msra.mxu0 0
  %1408 = vmatprep.mubr.bf16.mxu0 0
  %1409 = vmatmul.mubr.bf16.gmra.mrb[0].mxu0 %v1334
  %v1410 = vpop.f32.mrb[0].mxu0
  %v1411 = vadd.f32 0.0, %v1410
  %v1412 = vpop.f32.mrb[0].mxu0
  %v1413 = vadd.f32 0.0, %v1412
  %v1414 = vpop.f32.mrb[0].mxu0
  %v1415 = vpop.f32.mrb[0].mxu0
  %1416 = vdwg.mxu0
  %v1417 = vadd.f32 %v1330, %v1370
  %v1418 = vadd.f32 %v1331, %v1372
  %v1419 = vadd.f32 %v1332, %v1411
  %v1420 = vadd.f32 %v1333, %v1413
  %v1421 = vld [vmem:[#allocation3] sm:$0xff]
  %v1422 = vxor.u32 %v1323, 2147483648
  %v1423 = vmul.f32 %v1422, 1.442695
  %v1424 = vpow.pop %v1423
  %v1425 = vadd.f32 %v1424, 1.0
  %v1426 = vrcp.pop %v1425
  %v1427 = vmul.f32 1.0, %v1426
  %v1428 = vxor.u32 %v1324, 2147483648
  %v1429 = vmul.f32 %v1428, 1.442695
  %v1430 = vpow.pop %v1429
  %v1431 = vadd.f32 %v1430, 1.0
  %v1432 = vrcp.pop %v1431
  %v1433 = vmul.f32 1.0, %v1432
  %v1434 = vtanh.pop %v1325
  %v1435 = vxor.u32 %v1326, 2147483648
  %v1436 = vmul.f32 %v1435, 1.442695
  %v1437 = vpow.pop %v1436
  %v1438 = vadd.f32 %v1437, 1.0
  %v1439 = vrcp.pop %v1438
  %v1440 = vmul.f32 1.0, %v1439
  %v1441 = vmul.f32 %v1433, %v1421
  %v1442 = vmul.f32 %v1427, %v1434
  %v1443 = vadd.f32 %v1441, %v1442
  %v1444 = vtanh.pop %v1443
  %v1445 = vmul.f32 %v1440, %v1444
  %v1446 = vld [vmem:[#allocation5] sm:$0xff]
  %v1447 = vxor.u32 %v1417, 2147483648
  %v1448 = vmul.f32 %v1447, 1.442695
  %v1449 = vpow.pop %v1448
  %v1450 = vadd.f32 %v1449, 1.0
  %v1451 = vrcp.pop %v1450
  %v1452 = vmul.f32 1.0, %v1451
  %v1453 = vxor.u32 %v1418, 2147483648
  %v1454 = vmul.f32 %v1453, 1.442695
  %v1455 = vpow.pop %v1454
  %v1456 = vadd.f32 %v1455, 1.0
  %v1457 = vrcp.pop %v1456
  %v1458 = vmul.f32 1.0, %v1457
  %v1459 = vtanh.pop %v1419
  %v1460 = vxor.u32 %v1420, 2147483648
  %v1461 = vmul.f32 %v1460, 1.442695
  %v1462 = vpow.pop %v1461
  %v1463 = vadd.f32 %v1462, 1.0
  %v1464 = vrcp.pop %v1463
  %v1465 = vmul.f32 1.0, %v1464
  %v1466 = vmul.f32 %v1458, %v1446
  %v1467 = vmul.f32 %v1452, %v1459
  %v1468 = vadd.f32 %v1466, %v1467
  %v1469 = vtanh.pop %v1468
  %v1470 = vmul.f32 %v1465, %v1469
  %v1471 = vpack.c.bf16 %v1445, %v1445
  %1472 = vst [vmem:[#allocation2] sm:$0xf] %v1471
  %1473 = vst [vmem:[#allocation3] sm:$0xff] %v1443
  %v1474 = vpack.c.bf16 %v1470, %v1470
  %1475 = vst [vmem:[#allocation4] sm:$0xf] %v1474
  %1476 = vst [vmem:[#allocation5] sm:$0xff] %v1468
  %s1477 = scalar_lea.vmem %s4, 24
  %1478 = vst [vmem:[%s1477] sm:$0xff] %v1445
  %s1479 = scalar_lea.vmem %s57, 32
  %1480 = vst [vmem:[%s1479] sm:$0xff] %v1470
  %s1481 = sadd.s32 %s699, 3
  %s1482 = sadd.s32 %s701, 4
  %p1483 = scmp.eq.s32.totalorder %s1481, 7
  // Predicated region
  $region46: #{bidirectional_rnn.2} parent=0 // pred_check
    %p1484 = pneg %p1483
  $region47: #{bidirectional_rnn.2} parent=0 // pred_check_branch
    %1486 = sbr.rel (%p1484) target = $region49
  $region48: #{bidirectional_rnn.2} parent=0 // pred_region
    %1487 = vst [vmem:[%s6] sm:$0xff] %v1443
  $region49: #{bidirectional_rnn.2} parent=0 // pred_fallthru
    _
  %p1488 = scmp.eq.s32.totalorder %s1482, 7
  // Predicated region
  $region50: #{bidirectional_rnn.2} parent=0 // pred_check
    %p1489 = pneg %p1488
  $region51: #{bidirectional_rnn.2} parent=0 // pred_check_branch
    %1491 = sbr.rel (%p1489) target = $region53
  $region52: #{bidirectional_rnn.2} parent=0 // pred_region
    %1492 = vst [vmem:[%s7] sm:$0xff] %v1468
  $region53: #{bidirectional_rnn.2} parent=0 // pred_fallthru
    _
  %s1493 = scalar_lea.vmem %s0, 64
  %v1494 = vld [vmem:[%s1493] sm:$0xff]
  %v1495 = vld [vmem:[%s1493 + $0x8] sm:$0xff]
  %v1496 = vunpack.c.l.bf16 %v1494
  %v1497 = vunpack.c.h.bf16 %v1494
  %v1498 = vunpack.c.l.bf16 %v1495
  %v1499 = vunpack.c.h.bf16 %v1495
  %v1500 = vld [vmem:[#allocation2] sm:$0xf]
  %1501 = vmatprep.subr.bf16.mxu0 %v237
  %1502 = vmatpush1.bf16.msra.mxu0 %v236
  %1503 = vmatprep.subr.bf16.mxu0 %v241
  %1504 = vmatpush1.bf16.msra.mxu0 %v240
  %1505 = vmatprep.subr.bf16.mxu0 %v245
  %1506 = vmatpush1.bf16.msra.mxu0 %v244
  %1507 = vmatprep.subr.bf16.mxu0 %v249
  %1508 = vmatpush1.bf16.msra.mxu0 %v248
  %1509 = vmatprep.subr.bf16.mxu0 %v253
  %1510 = vmatpush1.bf16.msra.mxu0 %v252
  %1511 = vmatprep.subr.bf16.mxu0 %v257
  %1512 = vmatpush1.bf16.msra.mxu0 %v256
  %1513 = vmatprep.subr.bf16.mxu0 %v261
  %1514 = vmatpush1.bf16.msra.mxu0 %v260
  %1515 = vmatprep.subr.bf16.mxu0 %v265
  %1516 = vmatpush1.bf16.msra.mxu0 %v264
  %1517 = vmatprep.subr.bf16.mxu0 0
  %1518 = vmatpush1.bf16.msra.mxu0 0
  %1519 = vmatprep.subr.bf16.mxu0 0
  %1520 = vmatpush1.bf16.msra.mxu0 0
  %1521 = vmatprep.subr.bf16.mxu0 0
  %1522 = vmatpush1.bf16.msra.mxu0 0
  %1523 = vmatprep.subr.bf16.mxu0 0
  %1524 = vmatpush1.bf16.msra.mxu0 0
  %1525 = vmatprep.subr.bf16.mxu0 0
  %1526 = vmatpush1.bf16.msra.mxu0 0
  %1527 = vmatprep.subr.bf16.mxu0 0
  %1528 = vmatpush1.bf16.msra.mxu0 0
  %1529 = vmatprep.subr.bf16.mxu0 0
  %1530 = vmatpush1.bf16.msra.mxu0 0
  %1531 = vmatprep.subr.bf16.mxu0 0
  %1532 = vmatpush1.bf16.msra.mxu0 0
  %1533 = vmatprep.mubr.bf16.mxu0 0
  %1534 = vmatmul.mubr.bf16.gmra.mrb[0].mxu0 %v1500
  %v1535 = vpop.f32.mrb[0].mxu0
  %v1536 = vadd.f32 0.0, %v1535
  %v1537 = vpop.f32.mrb[0].mxu0
  %v1538 = vadd.f32 0.0, %v1537
  %v1539 = vpop.f32.mrb[0].mxu0
  %v1540 = vpop.f32.mrb[0].mxu0
  %1541 = vdwg.mxu0
  %1542 = vmatprep.subr.bf16.mxu0 %v239
  %1543 = vmatpush1.bf16.msra.mxu0 %v238
  %1544 = vmatprep.subr.bf16.mxu0 %v243
  %1545 = vmatpush1.bf16.msra.mxu0 %v242
  %1546 = vmatprep.subr.bf16.mxu0 %v247
  %1547 = vmatpush1.bf16.msra.mxu0 %v246
  %1548 = vmatprep.subr.bf16.mxu0 %v251
  %1549 = vmatpush1.bf16.msra.mxu0 %v250
  %1550 = vmatprep.subr.bf16.mxu0 %v255
  %1551 = vmatpush1.bf16.msra.mxu0 %v254
  %1552 = vmatprep.subr.bf16.mxu0 %v259
  %1553 = vmatpush1.bf16.msra.mxu0 %v258
  %1554 = vmatprep.subr.bf16.mxu0 %v263
  %1555 = vmatpush1.bf16.msra.mxu0 %v262
  %1556 = vmatprep.subr.bf16.mxu0 %v267
  %1557 = vmatpush1.bf16.msra.mxu0 %v266
  %1558 = vmatprep.subr.bf16.mxu0 0
  %1559 = vmatpush1.bf16.msra.mxu0 0
  %1560 = vmatprep.subr.bf16.mxu0 0
  %1561 = vmatpush1.bf16.msra.mxu0 0
  %1562 = vmatprep.subr.bf16.mxu0 0
  %1563 = vmatpush1.bf16.msra.mxu0 0
  %1564 = vmatprep.subr.bf16.mxu0 0
  %1565 = vmatpush1.bf16.msra.mxu0 0
  %1566 = vmatprep.subr.bf16.mxu0 0
  %1567 = vmatpush1.bf16.msra.mxu0 0
  %1568 = vmatprep.subr.bf16.mxu0 0
  %1569 = vmatpush1.bf16.msra.mxu0 0
  %1570 = vmatprep.subr.bf16.mxu0 0
  %1571 = vmatpush1.bf16.msra.mxu0 0
  %1572 = vmatprep.subr.bf16.mxu0 0
  %1573 = vmatpush1.bf16.msra.mxu0 0
  %1574 = vmatprep.mubr.bf16.mxu0 0
  %1575 = vmatmul.mubr.bf16.gmra.mrb[0].mxu0 %v1500
  %v1576 = vpop.f32.mrb[0].mxu0
  %v1577 = vadd.f32 0.0, %v1576
  %v1578 = vpop.f32.mrb[0].mxu0
  %v1579 = vadd.f32 0.0, %v1578
  %v1580 = vpop.f32.mrb[0].mxu0
  %v1581 = vpop.f32.mrb[0].mxu0
  %1582 = vdwg.mxu0
  %v1583 = vadd.f32 %v1496, %v1536
  %v1584 = vadd.f32 %v1497, %v1538
  %v1585 = vadd.f32 %v1498, %v1577
  %v1586 = vadd.f32 %v1499, %v1579
  %s1587 = scalar_lea.vmem %s49, 48
  %v1588 = vld [vmem:[%s1587] sm:$0xff]
  %v1589 = vld [vmem:[%s1587 + $0x8] sm:$0xff]
  %v1590 = vunpack.c.l.bf16 %v1588
  %v1591 = vunpack.c.h.bf16 %v1588
  %v1592 = vunpack.c.l.bf16 %v1589
  %v1593 = vunpack.c.h.bf16 %v1589
  %v1594 = vld [vmem:[#allocation4] sm:$0xf]
  %1595 = vmatprep.subr.bf16.mxu0 %v491
  %1596 = vmatpush1.bf16.msra.mxu0 %v490
  %1597 = vmatprep.subr.bf16.mxu0 %v495
  %1598 = vmatpush1.bf16.msra.mxu0 %v494
  %1599 = vmatprep.subr.bf16.mxu0 %v499
  %1600 = vmatpush1.bf16.msra.mxu0 %v498
  %1601 = vmatprep.subr.bf16.mxu0 %v503
  %1602 = vmatpush1.bf16.msra.mxu0 %v502
  %1603 = vmatprep.subr.bf16.mxu0 %v507
  %1604 = vmatpush1.bf16.msra.mxu0 %v506
  %1605 = vmatprep.subr.bf16.mxu0 %v511
  %1606 = vmatpush1.bf16.msra.mxu0 %v510
  %1607 = vmatprep.subr.bf16.mxu0 %v515
  %1608 = vmatpush1.bf16.msra.mxu0 %v514
  %1609 = vmatprep.subr.bf16.mxu0 %v519
  %1610 = vmatpush1.bf16.msra.mxu0 %v518
  %1611 = vmatprep.subr.bf16.mxu0 0
  %1612 = vmatpush1.bf16.msra.mxu0 0
  %1613 = vmatprep.subr.bf16.mxu0 0
  %1614 = vmatpush1.bf16.msra.mxu0 0
  %1615 = vmatprep.subr.bf16.mxu0 0
  %1616 = vmatpush1.bf16.msra.mxu0 0
  %1617 = vmatprep.subr.bf16.mxu0 0
  %1618 = vmatpush1.bf16.msra.mxu0 0
  %1619 = vmatprep.subr.bf16.mxu0 0
  %1620 = vmatpush1.bf16.msra.mxu0 0
  %1621 = vmatprep.subr.bf16.mxu0 0
  %1622 = vmatpush1.bf16.msra.mxu0 0
  %1623 = vmatprep.subr.bf16.mxu0 0
  %1624 = vmatpush1.bf16.msra.mxu0 0
  %1625 = vmatprep.subr.bf16.mxu0 0
  %1626 = vmatpush1.bf16.msra.mxu0 0
  %1627 = vmatprep.mubr.bf16.mxu0 0
  %1628 = vmatmul.mubr.bf16.gmra.mrb[0].mxu0 %v1594
  %v1629 = vpop.f32.mrb[0].mxu0
  %v1630 = vadd.f32 0.0, %v1629
  %v1631 = vpop.f32.mrb[0].mxu0
  %v1632 = vadd.f32 0.0, %v1631
  %v1633 = vpop.f32.mrb[0].mxu0
  %v1634 = vpop.f32.mrb[0].mxu0
  %1635 = vdwg.mxu0
  %1636 = vmatprep.subr.bf16.mxu0 %v493
  %1637 = vmatpush1.bf16.msra.mxu0 %v492
  %1638 = vmatprep.subr.bf16.mxu0 %v497
  %1639 = vmatpush1.bf16.msra.mxu0 %v496
  %1640 = vmatprep.subr.bf16.mxu0 %v501
  %1641 = vmatpush1.bf16.msra.mxu0 %v500
  %1642 = vmatprep.subr.bf16.mxu0 %v505
  %1643 = vmatpush1.bf16.msra.mxu0 %v504
  %1644 = vmatprep.subr.bf16.mxu0 %v509
  %1645 = vmatpush1.bf16.msra.mxu0 %v508
  %1646 = vmatprep.subr.bf16.mxu0 %v513
  %1647 = vmatpush1.bf16.msra.mxu0 %v512
  %1648 = vmatprep.subr.bf16.mxu0 %v517
  %1649 = vmatpush1.bf16.msra.mxu0 %v516
  %1650 = vmatprep.subr.bf16.mxu0 %v521
  %1651 = vmatpush1.bf16.msra.mxu0 %v520
  %1652 = vmatprep.subr.bf16.mxu0 0
  %1653 = vmatpush1.bf16.msra.mxu0 0
  %1654 = vmatprep.subr.bf16.mxu0 0
  %1655 = vmatpush1.bf16.msra.mxu0 0
  %1656 = vmatprep.subr.bf16.mxu0 0
  %1657 = vmatpush1.bf16.msra.mxu0 0
  %1658 = vmatprep.subr.bf16.mxu0 0
  %1659 = vmatpush1.bf16.msra.mxu0 0
  %1660 = vmatprep.subr.bf16.mxu0 0
  %1661 = vmatpush1.bf16.msra.mxu0 0
  %1662 = vmatprep.subr.bf16.mxu0 0
  %1663 = vmatpush1.bf16.msra.mxu0 0
  %1664 = vmatprep.subr.bf16.mxu0 0
  %1665 = vmatpush1.bf16.msra.mxu0 0
  %1666 = vmatprep.subr.bf16.mxu0 0
  %1667 = vmatpush1.bf16.msra.mxu0 0
  %1668 = vmatprep.mubr.bf16.mxu0 0
  %1669 = vmatmul.mubr.bf16.gmra.mrb[0].mxu0 %v1594
  %v1670 = vpop.f32.mrb[0].mxu0
  %v1671 = vadd.f32 0.0, %v1670
  %v1672 = vpop.f32.mrb[0].mxu0
  %v1673 = vadd.f32 0.0, %v1672
  %v1674 = vpop.f32.mrb[0].mxu0
  %v1675 = vpop.f32.mrb[0].mxu0
  %1676 = vdwg.mxu0
  %v1677 = vadd.f32 %v1590, %v1630
  %v1678 = vadd.f32 %v1591, %v1632
  %v1679 = vadd.f32 %v1592, %v1671
  %v1680 = vadd.f32 %v1593, %v1673
  %v1681 = vld [vmem:[#allocation3] sm:$0xff]
  %v1682 = vxor.u32 %v1583, 2147483648
  %v1683 = vmul.f32 %v1682, 1.442695
  %v1684 = vpow.pop %v1683
  %v1685 = vadd.f32 %v1684, 1.0
  %v1686 = vrcp.pop %v1685
  %v1687 = vmul.f32 1.0, %v1686
  %v1688 = vxor.u32 %v1584, 2147483648
  %v1689 = vmul.f32 %v1688, 1.442695
  %v1690 = vpow.pop %v1689
  %v1691 = vadd.f32 %v1690, 1.0
  %v1692 = vrcp.pop %v1691
  %v1693 = vmul.f32 1.0, %v1692
  %v1694 = vtanh.pop %v1585
  %v1695 = vxor.u32 %v1586, 2147483648
  %v1696 = vmul.f32 %v1695, 1.442695
  %v1697 = vpow.pop %v1696
  %v1698 = vadd.f32 %v1697, 1.0
  %v1699 = vrcp.pop %v1698
  %v1700 = vmul.f32 1.0, %v1699
  %v1701 = vmul.f32 %v1693, %v1681
  %v1702 = vmul.f32 %v1687, %v1694
  %v1703 = vadd.f32 %v1701, %v1702
  %v1704 = vtanh.pop %v1703
  %v1705 = vmul.f32 %v1700, %v1704
  %v1706 = vld [vmem:[#allocation5] sm:$0xff]
  %v1707 = vxor.u32 %v1677, 2147483648
  %v1708 = vmul.f32 %v1707, 1.442695
  %v1709 = vpow.pop %v1708
  %v1710 = vadd.f32 %v1709, 1.0
  %v1711 = vrcp.pop %v1710
  %v1712 = vmul.f32 1.0, %v1711
  %v1713 = vxor.u32 %v1678, 2147483648
  %v1714 = vmul.f32 %v1713, 1.442695
  %v1715 = vpow.pop %v1714
  %v1716 = vadd.f32 %v1715, 1.0
  %v1717 = vrcp.pop %v1716
  %v1718 = vmul.f32 1.0, %v1717
  %v1719 = vtanh.pop %v1679
  %v1720 = vxor.u32 %v1680, 2147483648
  %v1721 = vmul.f32 %v1720, 1.442695
  %v1722 = vpow.pop %v1721
  %v1723 = vadd.f32 %v1722, 1.0
  %v1724 = vrcp.pop %v1723
  %v1725 = vmul.f32 1.0, %v1724
  %v1726 = vmul.f32 %v1718, %v1706
  %v1727 = vmul.f32 %v1712, %v1719
  %v1728 = vadd.f32 %v1726, %v1727
  %v1729 = vtanh.pop %v1728
  %v1730 = vmul.f32 %v1725, %v1729
  %v1731 = vpack.c.bf16 %v1705, %v1705
  %1732 = vst [vmem:[#allocation2] sm:$0xf] %v1731
  %1733 = vst [vmem:[#allocation3] sm:$0xff] %v1703
  %v1734 = vpack.c.bf16 %v1730, %v1730
  %1735 = vst [vmem:[#allocation4] sm:$0xf] %v1734
  %1736 = vst [vmem:[#allocation5] sm:$0xff] %v1728
  %s1737 = scalar_lea.vmem %s4, 32
  %1738 = vst [vmem:[%s1737] sm:$0xff] %v1705
  %s1739 = scalar_lea.vmem %s57, 24
  %1740 = vst [vmem:[%s1739] sm:$0xff] %v1730
  %s1741 = sadd.s32 %s699, 4
  %s1742 = sadd.s32 %s701, 3
  %p1743 = scmp.eq.s32.totalorder %s1741, 7
  // Predicated region
  $region54: #{bidirectional_rnn.2} parent=0 // pred_check
    %p1744 = pneg %p1743
  $region55: #{bidirectional_rnn.2} parent=0 // pred_check_branch
    %1746 = sbr.rel (%p1744) target = $region57
  $region56: #{bidirectional_rnn.2} parent=0 // pred_region
    %1747 = vst [vmem:[%s6] sm:$0xff] %v1703
  $region57: #{bidirectional_rnn.2} parent=0 // pred_fallthru
    _
  %p1748 = scmp.eq.s32.totalorder %s1742, 7
  // Predicated region
  $region58: #{bidirectional_rnn.2} parent=0 // pred_check
    %p1749 = pneg %p1748
  $region59: #{bidirectional_rnn.2} parent=0 // pred_check_branch
    %1751 = sbr.rel (%p1749) target = $region61
  $region60: #{bidirectional_rnn.2} parent=0 // pred_region
    %1752 = vst [vmem:[%s7] sm:$0xff] %v1728
  $region61: #{bidirectional_rnn.2} parent=0 // pred_fallthru
    _
  %s1753 = scalar_lea.vmem %s0, 80
  %v1754 = vld [vmem:[%s1753] sm:$0xff]
  %v1755 = vld [vmem:[%s1753 + $0x8] sm:$0xff]
  %v1756 = vunpack.c.l.bf16 %v1754
  %v1757 = vunpack.c.h.bf16 %v1754
  %v1758 = vunpack.c.l.bf16 %v1755
  %v1759 = vunpack.c.h.bf16 %v1755
  %v1760 = vld [vmem:[#allocation2] sm:$0xf]
  %1761 = vmatprep.subr.bf16.mxu0 %v237
  %1762 = vmatpush1.bf16.msra.mxu0 %v236
  %1763 = vmatprep.subr.bf16.mxu0 %v241
  %1764 = vmatpush1.bf16.msra.mxu0 %v240
  %1765 = vmatprep.subr.bf16.mxu0 %v245
  %1766 = vmatpush1.bf16.msra.mxu0 %v244
  %1767 = vmatprep.subr.bf16.mxu0 %v249
  %1768 = vmatpush1.bf16.msra.mxu0 %v248
  %1769 = vmatprep.subr.bf16.mxu0 %v253
  %1770 = vmatpush1.bf16.msra.mxu0 %v252
  %1771 = vmatprep.subr.bf16.mxu0 %v257
  %1772 = vmatpush1.bf16.msra.mxu0 %v256
  %1773 = vmatprep.subr.bf16.mxu0 %v261
  %1774 = vmatpush1.bf16.msra.mxu0 %v260
  %1775 = vmatprep.subr.bf16.mxu0 %v265
  %1776 = vmatpush1.bf16.msra.mxu0 %v264
  %1777 = vmatprep.subr.bf16.mxu0 0
  %1778 = vmatpush1.bf16.msra.mxu0 0
  %1779 = vmatprep.subr.bf16.mxu0 0
  %1780 = vmatpush1.bf16.msra.mxu0 0
  %1781 = vmatprep.subr.bf16.mxu0 0
  %1782 = vmatpush1.bf16.msra.mxu0 0
  %1783 = vmatprep.subr.bf16.mxu0 0
  %1784 = vmatpush1.bf16.msra.mxu0 0
  %1785 = vmatprep.subr.bf16.mxu0 0
  %1786 = vmatpush1.bf16.msra.mxu0 0
  %1787 = vmatprep.subr.bf16.mxu0 0
  %1788 = vmatpush1.bf16.msra.mxu0 0
  %1789 = vmatprep.subr.bf16.mxu0 0
  %1790 = vmatpush1.bf16.msra.mxu0 0
  %1791 = vmatprep.subr.bf16.mxu0 0
  %1792 = vmatpush1.bf16.msra.mxu0 0
  %1793 = vmatprep.mubr.bf16.mxu0 0
  %1794 = vmatmul.mubr.bf16.gmra.mrb[0].mxu0 %v1760
  %v1795 = vpop.f32.mrb[0].mxu0
  %v1796 = vadd.f32 0.0, %v1795
  %v1797 = vpop.f32.mrb[0].mxu0
  %v1798 = vadd.f32 0.0, %v1797
  %v1799 = vpop.f32.mrb[0].mxu0
  %v1800 = vpop.f32.mrb[0].mxu0
  %1801 = vdwg.mxu0
  %1802 = vmatprep.subr.bf16.mxu0 %v239
  %1803 = vmatpush1.bf16.msra.mxu0 %v238
  %1804 = vmatprep.subr.bf16.mxu0 %v243
  %1805 = vmatpush1.bf16.msra.mxu0 %v242
  %1806 = vmatprep.subr.bf16.mxu0 %v247
  %1807 = vmatpush1.bf16.msra.mxu0 %v246
  %1808 = vmatprep.subr.bf16.mxu0 %v251
  %1809 = vmatpush1.bf16.msra.mxu0 %v250
  %1810 = vmatprep.subr.bf16.mxu0 %v255
  %1811 = vmatpush1.bf16.msra.mxu0 %v254
  %1812 = vmatprep.subr.bf16.mxu0 %v259
  %1813 = vmatpush1.bf16.msra.mxu0 %v258
  %1814 = vmatprep.subr.bf16.mxu0 %v263
  %1815 = vmatpush1.bf16.msra.mxu0 %v262
  %1816 = vmatprep.subr.bf16.mxu0 %v267
  %1817 = vmatpush1.bf16.msra.mxu0 %v266
  %1818 = vmatprep.subr.bf16.mxu0 0
  %1819 = vmatpush1.bf16.msra.mxu0 0
  %1820 = vmatprep.subr.bf16.mxu0 0
  %1821 = vmatpush1.bf16.msra.mxu0 0
  %1822 = vmatprep.subr.bf16.mxu0 0
  %1823 = vmatpush1.bf16.msra.mxu0 0
  %1824 = vmatprep.subr.bf16.mxu0 0
  %1825 = vmatpush1.bf16.msra.mxu0 0
  %1826 = vmatprep.subr.bf16.mxu0 0
  %1827 = vmatpush1.bf16.msra.mxu0 0
  %1828 = vmatprep.subr.bf16.mxu0 0
  %1829 = vmatpush1.bf16.msra.mxu0 0
  %1830 = vmatprep.subr.bf16.mxu0 0
  %1831 = vmatpush1.bf16.msra.mxu0 0
  %1832 = vmatprep.subr.bf16.mxu0 0
  %1833 = vmatpush1.bf16.msra.mxu0 0
  %1834 = vmatprep.mubr.bf16.mxu0 0
  %1835 = vmatmul.mubr.bf16.gmra.mrb[0].mxu0 %v1760
  %v1836 = vpop.f32.mrb[0].mxu0
  %v1837 = vadd.f32 0.0, %v1836
  %v1838 = vpop.f32.mrb[0].mxu0
  %v1839 = vadd.f32 0.0, %v1838
  %v1840 = vpop.f32.mrb[0].mxu0
  %v1841 = vpop.f32.mrb[0].mxu0
  %1842 = vdwg.mxu0
  %v1843 = vadd.f32 %v1756, %v1796
  %v1844 = vadd.f32 %v1757, %v1798
  %v1845 = vadd.f32 %v1758, %v1837
  %v1846 = vadd.f32 %v1759, %v1839
  %s1847 = scalar_lea.vmem %s49, 32
  %v1848 = vld [vmem:[%s1847] sm:$0xff]
  %v1849 = vld [vmem:[%s1847 + $0x8] sm:$0xff]
  %v1850 = vunpack.c.l.bf16 %v1848
  %v1851 = vunpack.c.h.bf16 %v1848
  %v1852 = vunpack.c.l.bf16 %v1849
  %v1853 = vunpack.c.h.bf16 %v1849
  %v1854 = vld [vmem:[#allocation4] sm:$0xf]
  %1855 = vmatprep.subr.bf16.mxu0 %v491
  %1856 = vmatpush1.bf16.msra.mxu0 %v490
  %1857 = vmatprep.subr.bf16.mxu0 %v495
  %1858 = vmatpush1.bf16.msra.mxu0 %v494
  %1859 = vmatprep.subr.bf16.mxu0 %v499
  %1860 = vmatpush1.bf16.msra.mxu0 %v498
  %1861 = vmatprep.subr.bf16.mxu0 %v503
  %1862 = vmatpush1.bf16.msra.mxu0 %v502
  %1863 = vmatprep.subr.bf16.mxu0 %v507
  %1864 = vmatpush1.bf16.msra.mxu0 %v506
  %1865 = vmatprep.subr.bf16.mxu0 %v511
  %1866 = vmatpush1.bf16.msra.mxu0 %v510
  %1867 = vmatprep.subr.bf16.mxu0 %v515
  %1868 = vmatpush1.bf16.msra.mxu0 %v514
  %1869 = vmatprep.subr.bf16.mxu0 %v519
  %1870 = vmatpush1.bf16.msra.mxu0 %v518
  %1871 = vmatprep.subr.bf16.mxu0 0
  %1872 = vmatpush1.bf16.msra.mxu0 0
  %1873 = vmatprep.subr.bf16.mxu0 0
  %1874 = vmatpush1.bf16.msra.mxu0 0
  %1875 = vmatprep.subr.bf16.mxu0 0
  %1876 = vmatpush1.bf16.msra.mxu0 0
  %1877 = vmatprep.subr.bf16.mxu0 0
  %1878 = vmatpush1.bf16.msra.mxu0 0
  %1879 = vmatprep.subr.bf16.mxu0 0
  %1880 = vmatpush1.bf16.msra.mxu0 0
  %1881 = vmatprep.subr.bf16.mxu0 0
  %1882 = vmatpush1.bf16.msra.mxu0 0
  %1883 = vmatprep.subr.bf16.mxu0 0
  %1884 = vmatpush1.bf16.msra.mxu0 0
  %1885 = vmatprep.subr.bf16.mxu0 0
  %1886 = vmatpush1.bf16.msra.mxu0 0
  %1887 = vmatprep.mubr.bf16.mxu0 0
  %1888 = vmatmul.mubr.bf16.gmra.mrb[0].mxu0 %v1854
  %v1889 = vpop.f32.mrb[0].mxu0
  %v1890 = vadd.f32 0.0, %v1889
  %v1891 = vpop.f32.mrb[0].mxu0
  %v1892 = vadd.f32 0.0, %v1891
  %v1893 = vpop.f32.mrb[0].mxu0
  %v1894 = vpop.f32.mrb[0].mxu0
  %1895 = vdwg.mxu0
  %1896 = vmatprep.subr.bf16.mxu0 %v493
  %1897 = vmatpush1.bf16.msra.mxu0 %v492
  %1898 = vmatprep.subr.bf16.mxu0 %v497
  %1899 = vmatpush1.bf16.msra.mxu0 %v496
  %1900 = vmatprep.subr.bf16.mxu0 %v501
  %1901 = vmatpush1.bf16.msra.mxu0 %v500
  %1902 = vmatprep.subr.bf16.mxu0 %v505
  %1903 = vmatpush1.bf16.msra.mxu0 %v504
  %1904 = vmatprep.subr.bf16.mxu0 %v509
  %1905 = vmatpush1.bf16.msra.mxu0 %v508
  %1906 = vmatprep.subr.bf16.mxu0 %v513
  %1907 = vmatpush1.bf16.msra.mxu0 %v512
  %1908 = vmatprep.subr.bf16.mxu0 %v517
  %1909 = vmatpush1.bf16.msra.mxu0 %v516
  %1910 = vmatprep.subr.bf16.mxu0 %v521
  %1911 = vmatpush1.bf16.msra.mxu0 %v520
  %1912 = vmatprep.subr.bf16.mxu0 0
  %1913 = vmatpush1.bf16.msra.mxu0 0
  %1914 = vmatprep.subr.bf16.mxu0 0
  %1915 = vmatpush1.bf16.msra.mxu0 0
  %1916 = vmatprep.subr.bf16.mxu0 0
  %1917 = vmatpush1.bf16.msra.mxu0 0
  %1918 = vmatprep.subr.bf16.mxu0 0
  %1919 = vmatpush1.bf16.msra.mxu0 0
  %1920 = vmatprep.subr.bf16.mxu0 0
  %1921 = vmatpush1.bf16.msra.mxu0 0
  %1922 = vmatprep.subr.bf16.mxu0 0
  %1923 = vmatpush1.bf16.msra.mxu0 0
  %1924 = vmatprep.subr.bf16.mxu0 0
  %1925 = vmatpush1.bf16.msra.mxu0 0
  %1926 = vmatprep.subr.bf16.mxu0 0
  %1927 = vmatpush1.bf16.msra.mxu0 0
  %1928 = vmatprep.mubr.bf16.mxu0 0
  %1929 = vmatmul.mubr.bf16.gmra.mrb[0].mxu0 %v1854
  %v1930 = vpop.f32.mrb[0].mxu0
  %v1931 = vadd.f32 0.0, %v1930
  %v1932 = vpop.f32.mrb[0].mxu0
  %v1933 = vadd.f32 0.0, %v1932
  %v1934 = vpop.f32.mrb[0].mxu0
  %v1935 = vpop.f32.mrb[0].mxu0
  %1936 = vdwg.mxu0
  %v1937 = vadd.f32 %v1850, %v1890
  %v1938 = vadd.f32 %v1851, %v1892
  %v1939 = vadd.f32 %v1852, %v1931
  %v1940 = vadd.f32 %v1853, %v1933
  %v1941 = vld [vmem:[#allocation3] sm:$0xff]
  %v1942 = vxor.u32 %v1843, 2147483648
  %v1943 = vmul.f32 %v1942, 1.442695
  %v1944 = vpow.pop %v1943
  %v1945 = vadd.f32 %v1944, 1.0
  %v1946 = vrcp.pop %v1945
  %v1947 = vmul.f32 1.0, %v1946
  %v1948 = vxor.u32 %v1844, 2147483648
  %v1949 = vmul.f32 %v1948, 1.442695
  %v1950 = vpow.pop %v1949
  %v1951 = vadd.f32 %v1950, 1.0
  %v1952 = vrcp.pop %v1951
  %v1953 = vmul.f32 1.0, %v1952
  %v1954 = vtanh.pop %v1845
  %v1955 = vxor.u32 %v1846, 2147483648
  %v1956 = vmul.f32 %v1955, 1.442695
  %v1957 = vpow.pop %v1956
  %v1958 = vadd.f32 %v1957, 1.0
  %v1959 = vrcp.pop %v1958
  %v1960 = vmul.f32 1.0, %v1959
  %v1961 = vmul.f32 %v1953, %v1941
  %v1962 = vmul.f32 %v1947, %v1954
  %v1963 = vadd.f32 %v1961, %v1962
  %v1964 = vtanh.pop %v1963
  %v1965 = vmul.f32 %v1960, %v1964
  %v1966 = vld [vmem:[#allocation5] sm:$0xff]
  %v1967 = vxor.u32 %v1937, 2147483648
  %v1968 = vmul.f32 %v1967, 1.442695
  %v1969 = vpow.pop %v1968
  %v1970 = vadd.f32 %v1969, 1.0
  %v1971 = vrcp.pop %v1970
  %v1972 = vmul.f32 1.0, %v1971
  %v1973 = vxor.u32 %v1938, 2147483648
  %v1974 = vmul.f32 %v1973, 1.442695
  %v1975 = vpow.pop %v1974
  %v1976 = vadd.f32 %v1975, 1.0
  %v1977 = vrcp.pop %v1976
  %v1978 = vmul.f32 1.0, %v1977
  %v1979 = vtanh.pop %v1939
  %v1980 = vxor.u32 %v1940, 2147483648
  %v1981 = vmul.f32 %v1980, 1.442695
  %v1982 = vpow.pop %v1981
  %v1983 = vadd.f32 %v1982, 1.0
  %v1984 = vrcp.pop %v1983
  %v1985 = vmul.f32 1.0, %v1984
  %v1986 = vmul.f32 %v1978, %v1966
  %v1987 = vmul.f32 %v1972, %v1979
  %v1988 = vadd.f32 %v1986, %v1987
  %v1989 = vtanh.pop %v1988
  %v1990 = vmul.f32 %v1985, %v1989
  %v1991 = vpack.c.bf16 %v1965, %v1965
  %1992 = vst [vmem:[#allocation2] sm:$0xf] %v1991
  %1993 = vst [vmem:[#allocation3] sm:$0xff] %v1963
  %v1994 = vpack.c.bf16 %v1990, %v1990
  %1995 = vst [vmem:[#allocation4] sm:$0xf] %v1994
  %1996 = vst [vmem:[#allocation5] sm:$0xff] %v1988
  %s1997 = scalar_lea.vmem %s4, 40
  %1998 = vst [vmem:[%s1997] sm:$0xff] %v1965
  %s1999 = scalar_lea.vmem %s57, 16
  %2000 = vst [vmem:[%s1999] sm:$0xff] %v1990
  %s2001 = sadd.s32 %s699, 5
  %s2002 = sadd.s32 %s701, 2
  %p2003 = scmp.eq.s32.totalorder %s2001, 7
  // Predicated region
  $region62: #{bidirectional_rnn.2} parent=0 // pred_check
    %p2004 = pneg %p2003
  $region63: #{bidirectional_rnn.2} parent=0 // pred_check_branch
    %2006 = sbr.rel (%p2004) target = $region65
  $region64: #{bidirectional_rnn.2} parent=0 // pred_region
    %2007 = vst [vmem:[%s6] sm:$0xff] %v1963
  $region65: #{bidirectional_rnn.2} parent=0 // pred_fallthru
    _
  %p2008 = scmp.eq.s32.totalorder %s2002, 7
  // Predicated region
  $region66: #{bidirectional_rnn.2} parent=0 // pred_check
    %p2009 = pneg %p2008
  $region67: #{bidirectional_rnn.2} parent=0 // pred_check_branch
    %2011 = sbr.rel (%p2009) target = $region69
  $region68: #{bidirectional_rnn.2} parent=0 // pred_region
    %2012 = vst [vmem:[%s7] sm:$0xff] %v1988
  $region69: #{bidirectional_rnn.2} parent=0 // pred_fallthru
    _
  %s2013 = scalar_lea.vmem %s0, 96
  %v2014 = vld [vmem:[%s2013] sm:$0xff]
  %v2015 = vld [vmem:[%s2013 + $0x8] sm:$0xff]
  %v2016 = vunpack.c.l.bf16 %v2014
  %v2017 = vunpack.c.h.bf16 %v2014
  %v2018 = vunpack.c.l.bf16 %v2015
  %v2019 = vunpack.c.h.bf16 %v2015
  %v2020 = vld [vmem:[#allocation2] sm:$0xf]
  %2021 = vmatprep.subr.bf16.mxu0 %v237
  %2022 = vmatpush1.bf16.msra.mxu0 %v236
  %2023 = vmatprep.subr.bf16.mxu0 %v241
  %2024 = vmatpush1.bf16.msra.mxu0 %v240
  %2025 = vmatprep.subr.bf16.mxu0 %v245
  %2026 = vmatpush1.bf16.msra.mxu0 %v244
  %2027 = vmatprep.subr.bf16.mxu0 %v249
  %2028 = vmatpush1.bf16.msra.mxu0 %v248
  %2029 = vmatprep.subr.bf16.mxu0 %v253
  %2030 = vmatpush1.bf16.msra.mxu0 %v252
  %2031 = vmatprep.subr.bf16.mxu0 %v257
  %2032 = vmatpush1.bf16.msra.mxu0 %v256
  %2033 = vmatprep.subr.bf16.mxu0 %v261
  %2034 = vmatpush1.bf16.msra.mxu0 %v260
  %2035 = vmatprep.subr.bf16.mxu0 %v265
  %2036 = vmatpush1.bf16.msra.mxu0 %v264
  %2037 = vmatprep.subr.bf16.mxu0 0
  %2038 = vmatpush1.bf16.msra.mxu0 0
  %2039 = vmatprep.subr.bf16.mxu0 0
  %2040 = vmatpush1.bf16.msra.mxu0 0
  %2041 = vmatprep.subr.bf16.mxu0 0
  %2042 = vmatpush1.bf16.msra.mxu0 0
  %2043 = vmatprep.subr.bf16.mxu0 0
  %2044 = vmatpush1.bf16.msra.mxu0 0
  %2045 = vmatprep.subr.bf16.mxu0 0
  %2046 = vmatpush1.bf16.msra.mxu0 0
  %2047 = vmatprep.subr.bf16.mxu0 0
  %2048 = vmatpush1.bf16.msra.mxu0 0
  %2049 = vmatprep.subr.bf16.mxu0 0
  %2050 = vmatpush1.bf16.msra.mxu0 0
  %2051 = vmatprep.subr.bf16.mxu0 0
  %2052 = vmatpush1.bf16.msra.mxu0 0
  %2053 = vmatprep.mubr.bf16.mxu0 0
  %2054 = vmatmul.mubr.bf16.gmra.mrb[0].mxu0 %v2020
  %v2055 = vpop.f32.mrb[0].mxu0
  %v2056 = vadd.f32 0.0, %v2055
  %v2057 = vpop.f32.mrb[0].mxu0
  %v2058 = vadd.f32 0.0, %v2057
  %v2059 = vpop.f32.mrb[0].mxu0
  %v2060 = vpop.f32.mrb[0].mxu0
  %2061 = vdwg.mxu0
  %2062 = vmatprep.subr.bf16.mxu0 %v239
  %2063 = vmatpush1.bf16.msra.mxu0 %v238
  %2064 = vmatprep.subr.bf16.mxu0 %v243
  %2065 = vmatpush1.bf16.msra.mxu0 %v242
  %2066 = vmatprep.subr.bf16.mxu0 %v247
  %2067 = vmatpush1.bf16.msra.mxu0 %v246
  %2068 = vmatprep.subr.bf16.mxu0 %v251
  %2069 = vmatpush1.bf16.msra.mxu0 %v250
  %2070 = vmatprep.subr.bf16.mxu0 %v255
  %2071 = vmatpush1.bf16.msra.mxu0 %v254
  %2072 = vmatprep.subr.bf16.mxu0 %v259
  %2073 = vmatpush1.bf16.msra.mxu0 %v258
  %2074 = vmatprep.subr.bf16.mxu0 %v263
  %2075 = vmatpush1.bf16.msra.mxu0 %v262
  %2076 = vmatprep.subr.bf16.mxu0 %v267
  %2077 = vmatpush1.bf16.msra.mxu0 %v266
  %2078 = vmatprep.subr.bf16.mxu0 0
  %2079 = vmatpush1.bf16.msra.mxu0 0
  %2080 = vmatprep.subr.bf16.mxu0 0
  %2081 = vmatpush1.bf16.msra.mxu0 0
  %2082 = vmatprep.subr.bf16.mxu0 0
  %2083 = vmatpush1.bf16.msra.mxu0 0
  %2084 = vmatprep.subr.bf16.mxu0 0
  %2085 = vmatpush1.bf16.msra.mxu0 0
  %2086 = vmatprep.subr.bf16.mxu0 0
  %2087 = vmatpush1.bf16.msra.mxu0 0
  %2088 = vmatprep.subr.bf16.mxu0 0
  %2089 = vmatpush1.bf16.msra.mxu0 0
  %2090 = vmatprep.subr.bf16.mxu0 0
  %2091 = vmatpush1.bf16.msra.mxu0 0
  %2092 = vmatprep.subr.bf16.mxu0 0
  %2093 = vmatpush1.bf16.msra.mxu0 0
  %2094 = vmatprep.mubr.bf16.mxu0 0
  %2095 = vmatmul.mubr.bf16.gmra.mrb[0].mxu0 %v2020
  %v2096 = vpop.f32.mrb[0].mxu0
  %v2097 = vadd.f32 0.0, %v2096
  %v2098 = vpop.f32.mrb[0].mxu0
  %v2099 = vadd.f32 0.0, %v2098
  %v2100 = vpop.f32.mrb[0].mxu0
  %v2101 = vpop.f32.mrb[0].mxu0
  %2102 = vdwg.mxu0
  %v2103 = vadd.f32 %v2016, %v2056
  %v2104 = vadd.f32 %v2017, %v2058
  %v2105 = vadd.f32 %v2018, %v2097
  %v2106 = vadd.f32 %v2019, %v2099
  %s2107 = scalar_lea.vmem %s49, 16
  %v2108 = vld [vmem:[%s2107] sm:$0xff]
  %v2109 = vld [vmem:[%s2107 + $0x8] sm:$0xff]
  %v2110 = vunpack.c.l.bf16 %v2108
  %v2111 = vunpack.c.h.bf16 %v2108
  %v2112 = vunpack.c.l.bf16 %v2109
  %v2113 = vunpack.c.h.bf16 %v2109
  %v2114 = vld [vmem:[#allocation4] sm:$0xf]
  %2115 = vmatprep.subr.bf16.mxu0 %v491
  %2116 = vmatpush1.bf16.msra.mxu0 %v490
  %2117 = vmatprep.subr.bf16.mxu0 %v495
  %2118 = vmatpush1.bf16.msra.mxu0 %v494
  %2119 = vmatprep.subr.bf16.mxu0 %v499
  %2120 = vmatpush1.bf16.msra.mxu0 %v498
  %2121 = vmatprep.subr.bf16.mxu0 %v503
  %2122 = vmatpush1.bf16.msra.mxu0 %v502
  %2123 = vmatprep.subr.bf16.mxu0 %v507
  %2124 = vmatpush1.bf16.msra.mxu0 %v506
  %2125 = vmatprep.subr.bf16.mxu0 %v511
  %2126 = vmatpush1.bf16.msra.mxu0 %v510
  %2127 = vmatprep.subr.bf16.mxu0 %v515
  %2128 = vmatpush1.bf16.msra.mxu0 %v514
  %2129 = vmatprep.subr.bf16.mxu0 %v519
  %2130 = vmatpush1.bf16.msra.mxu0 %v518
  %2131 = vmatprep.subr.bf16.mxu0 0
  %2132 = vmatpush1.bf16.msra.mxu0 0
  %2133 = vmatprep.subr.bf16.mxu0 0
  %2134 = vmatpush1.bf16.msra.mxu0 0
  %2135 = vmatprep.subr.bf16.mxu0 0
  %2136 = vmatpush1.bf16.msra.mxu0 0
  %2137 = vmatprep.subr.bf16.mxu0 0
  %2138 = vmatpush1.bf16.msra.mxu0 0
  %2139 = vmatprep.subr.bf16.mxu0 0
  %2140 = vmatpush1.bf16.msra.mxu0 0
  %2141 = vmatprep.subr.bf16.mxu0 0
  %2142 = vmatpush1.bf16.msra.mxu0 0
  %2143 = vmatprep.subr.bf16.mxu0 0
  %2144 = vmatpush1.bf16.msra.mxu0 0
  %2145 = vmatprep.subr.bf16.mxu0 0
  %2146 = vmatpush1.bf16.msra.mxu0 0
  %2147 = vmatprep.mubr.bf16.mxu0 0
  %2148 = vmatmul.mubr.bf16.gmra.mrb[0].mxu0 %v2114
  %v2149 = vpop.f32.mrb[0].mxu0
  %v2150 = vadd.f32 0.0, %v2149
  %v2151 = vpop.f32.mrb[0].mxu0
  %v2152 = vadd.f32 0.0, %v2151
  %v2153 = vpop.f32.mrb[0].mxu0
  %v2154 = vpop.f32.mrb[0].mxu0
  %2155 = vdwg.mxu0
  %2156 = vmatprep.subr.bf16.mxu0 %v493
  %2157 = vmatpush1.bf16.msra.mxu0 %v492
  %2158 = vmatprep.subr.bf16.mxu0 %v497
  %2159 = vmatpush1.bf16.msra.mxu0 %v496
  %2160 = vmatprep.subr.bf16.mxu0 %v501
  %2161 = vmatpush1.bf16.msra.mxu0 %v500
  %2162 = vmatprep.subr.bf16.mxu0 %v505
  %2163 = vmatpush1.bf16.msra.mxu0 %v504
  %2164 = vmatprep.subr.bf16.mxu0 %v509
  %2165 = vmatpush1.bf16.msra.mxu0 %v508
  %2166 = vmatprep.subr.bf16.mxu0 %v513
  %2167 = vmatpush1.bf16.msra.mxu0 %v512
  %2168 = vmatprep.subr.bf16.mxu0 %v517
  %2169 = vmatpush1.bf16.msra.mxu0 %v516
  %2170 = vmatprep.subr.bf16.mxu0 %v521
  %2171 = vmatpush1.bf16.msra.mxu0 %v520
  %2172 = vmatprep.subr.bf16.mxu0 0
  %2173 = vmatpush1.bf16.msra.mxu0 0
  %2174 = vmatprep.subr.bf16.mxu0 0
  %2175 = vmatpush1.bf16.msra.mxu0 0
  %2176 = vmatprep.subr.bf16.mxu0 0
  %2177 = vmatpush1.bf16.msra.mxu0 0
  %2178 = vmatprep.subr.bf16.mxu0 0
  %2179 = vmatpush1.bf16.msra.mxu0 0
  %2180 = vmatprep.subr.bf16.mxu0 0
  %2181 = vmatpush1.bf16.msra.mxu0 0
  %2182 = vmatprep.subr.bf16.mxu0 0
  %2183 = vmatpush1.bf16.msra.mxu0 0
  %2184 = vmatprep.subr.bf16.mxu0 0
  %2185 = vmatpush1.bf16.msra.mxu0 0
  %2186 = vmatprep.subr.bf16.mxu0 0
  %2187 = vmatpush1.bf16.msra.mxu0 0
  %2188 = vmatprep.mubr.bf16.mxu0 0
  %2189 = vmatmul.mubr.bf16.gmra.mrb[0].mxu0 %v2114
  %v2190 = vpop.f32.mrb[0].mxu0
  %v2191 = vadd.f32 0.0, %v2190
  %v2192 = vpop.f32.mrb[0].mxu0
  %v2193 = vadd.f32 0.0, %v2192
  %v2194 = vpop.f32.mrb[0].mxu0
  %v2195 = vpop.f32.mrb[0].mxu0
  %2196 = vdwg.mxu0
  %v2197 = vadd.f32 %v2110, %v2150
  %v2198 = vadd.f32 %v2111, %v2152
  %v2199 = vadd.f32 %v2112, %v2191
  %v2200 = vadd.f32 %v2113, %v2193
  %v2201 = vld [vmem:[#allocation3] sm:$0xff]
  %v2202 = vxor.u32 %v2103, 2147483648
  %v2203 = vmul.f32 %v2202, 1.442695
  %v2204 = vpow.pop %v2203
  %v2205 = vadd.f32 %v2204, 1.0
  %v2206 = vrcp.pop %v2205
  %v2207 = vmul.f32 1.0, %v2206
  %v2208 = vxor.u32 %v2104, 2147483648
  %v2209 = vmul.f32 %v2208, 1.442695
  %v2210 = vpow.pop %v2209
  %v2211 = vadd.f32 %v2210, 1.0
  %v2212 = vrcp.pop %v2211
  %v2213 = vmul.f32 1.0, %v2212
  %v2214 = vtanh.pop %v2105
  %v2215 = vxor.u32 %v2106, 2147483648
  %v2216 = vmul.f32 %v2215, 1.442695
  %v2217 = vpow.pop %v2216
  %v2218 = vadd.f32 %v2217, 1.0
  %v2219 = vrcp.pop %v2218
  %v2220 = vmul.f32 1.0, %v2219
  %v2221 = vmul.f32 %v2213, %v2201
  %v2222 = vmul.f32 %v2207, %v2214
  %v2223 = vadd.f32 %v2221, %v2222
  %v2224 = vtanh.pop %v2223
  %v2225 = vmul.f32 %v2220, %v2224
  %v2226 = vld [vmem:[#allocation5] sm:$0xff]
  %v2227 = vxor.u32 %v2197, 2147483648
  %v2228 = vmul.f32 %v2227, 1.442695
  %v2229 = vpow.pop %v2228
  %v2230 = vadd.f32 %v2229, 1.0
  %v2231 = vrcp.pop %v2230
  %v2232 = vmul.f32 1.0, %v2231
  %v2233 = vxor.u32 %v2198, 2147483648
  %v2234 = vmul.f32 %v2233, 1.442695
  %v2235 = vpow.pop %v2234
  %v2236 = vadd.f32 %v2235, 1.0
  %v2237 = vrcp.pop %v2236
  %v2238 = vmul.f32 1.0, %v2237
  %v2239 = vtanh.pop %v2199
  %v2240 = vxor.u32 %v2200, 2147483648
  %v2241 = vmul.f32 %v2240, 1.442695
  %v2242 = vpow.pop %v2241
  %v2243 = vadd.f32 %v2242, 1.0
  %v2244 = vrcp.pop %v2243
  %v2245 = vmul.f32 1.0, %v2244
  %v2246 = vmul.f32 %v2238, %v2226
  %v2247 = vmul.f32 %v2232, %v2239
  %v2248 = vadd.f32 %v2246, %v2247
  %v2249 = vtanh.pop %v2248
  %v2250 = vmul.f32 %v2245, %v2249
  %v2251 = vpack.c.bf16 %v2225, %v2225
  %2252 = vst [vmem:[#allocation2] sm:$0xf] %v2251
  %2253 = vst [vmem:[#allocation3] sm:$0xff] %v2223
  %v2254 = vpack.c.bf16 %v2250, %v2250
  %2255 = vst [vmem:[#allocation4] sm:$0xf] %v2254
  %2256 = vst [vmem:[#allocation5] sm:$0xff] %v2248
  %s2257 = scalar_lea.vmem %s4, 48
  %2258 = vst [vmem:[%s2257] sm:$0xff] %v2225
  %s2259 = scalar_lea.vmem %s57, 8
  %2260 = vst [vmem:[%s2259] sm:$0xff] %v2250
  %s2261 = sadd.s32 %s699, 6
  %s2262 = sadd.s32 %s701, 1
  %p2263 = scmp.eq.s32.totalorder %s2261, 7
  // Predicated region
  $region70: #{bidirectional_rnn.2} parent=0 // pred_check
    %p2264 = pneg %p2263
  $region71: #{bidirectional_rnn.2} parent=0 // pred_check_branch
    %2266 = sbr.rel (%p2264) target = $region73
  $region72: #{bidirectional_rnn.2} parent=0 // pred_region
    %2267 = vst [vmem:[%s6] sm:$0xff] %v2223
  $region73: #{bidirectional_rnn.2} parent=0 // pred_fallthru
    _
  %p2268 = scmp.eq.s32.totalorder %s2262, 7
  // Predicated region
  $region74: #{bidirectional_rnn.2} parent=0 // pred_check
    %p2269 = pneg %p2268
  $region75: #{bidirectional_rnn.2} parent=0 // pred_check_branch
    %2271 = sbr.rel (%p2269) target = $region77
  $region76: #{bidirectional_rnn.2} parent=0 // pred_region
    %2272 = vst [vmem:[%s7] sm:$0xff] %v2248
  $region77: #{bidirectional_rnn.2} parent=0 // pred_fallthru
    _
  %s2273 = scalar_lea.vmem %s0, 112
  %v2274 = vld [vmem:[%s2273] sm:$0xff]
  %v2275 = vld [vmem:[%s2273 + $0x8] sm:$0xff]
  %v2276 = vunpack.c.l.bf16 %v2274
  %v2277 = vunpack.c.h.bf16 %v2274
  %v2278 = vunpack.c.l.bf16 %v2275
  %v2279 = vunpack.c.h.bf16 %v2275
  %v2280 = vld [vmem:[#allocation2] sm:$0xf]
  %2281 = vmatprep.subr.bf16.mxu0 %v237
  %2282 = vmatpush1.bf16.msra.mxu0 %v236
  %2283 = vmatprep.subr.bf16.mxu0 %v241
  %2284 = vmatpush1.bf16.msra.mxu0 %v240
  %2285 = vmatprep.subr.bf16.mxu0 %v245
  %2286 = vmatpush1.bf16.msra.mxu0 %v244
  %2287 = vmatprep.subr.bf16.mxu0 %v249
  %2288 = vmatpush1.bf16.msra.mxu0 %v248
  %2289 = vmatprep.subr.bf16.mxu0 %v253
  %2290 = vmatpush1.bf16.msra.mxu0 %v252
  %2291 = vmatprep.subr.bf16.mxu0 %v257
  %2292 = vmatpush1.bf16.msra.mxu0 %v256
  %2293 = vmatprep.subr.bf16.mxu0 %v261
  %2294 = vmatpush1.bf16.msra.mxu0 %v260
  %2295 = vmatprep.subr.bf16.mxu0 %v265
  %2296 = vmatpush1.bf16.msra.mxu0 %v264
  %2297 = vmatprep.subr.bf16.mxu0 0
  %2298 = vmatpush1.bf16.msra.mxu0 0
  %2299 = vmatprep.subr.bf16.mxu0 0
  %2300 = vmatpush1.bf16.msra.mxu0 0
  %2301 = vmatprep.subr.bf16.mxu0 0
  %2302 = vmatpush1.bf16.msra.mxu0 0
  %2303 = vmatprep.subr.bf16.mxu0 0
  %2304 = vmatpush1.bf16.msra.mxu0 0
  %2305 = vmatprep.subr.bf16.mxu0 0
  %2306 = vmatpush1.bf16.msra.mxu0 0
  %2307 = vmatprep.subr.bf16.mxu0 0
  %2308 = vmatpush1.bf16.msra.mxu0 0
  %2309 = vmatprep.subr.bf16.mxu0 0
  %2310 = vmatpush1.bf16.msra.mxu0 0
  %2311 = vmatprep.subr.bf16.mxu0 0
  %2312 = vmatpush1.bf16.msra.mxu0 0
  %2313 = vmatprep.mubr.bf16.mxu0 0
  %2314 = vmatmul.mubr.bf16.gmra.mrb[0].mxu0 %v2280
  %v2315 = vpop.f32.mrb[0].mxu0
  %v2316 = vadd.f32 0.0, %v2315
  %v2317 = vpop.f32.mrb[0].mxu0
  %v2318 = vadd.f32 0.0, %v2317
  %v2319 = vpop.f32.mrb[0].mxu0
  %v2320 = vpop.f32.mrb[0].mxu0
  %2321 = vdwg.mxu0
  %2322 = vmatprep.subr.bf16.mxu0 %v239
  %2323 = vmatpush1.bf16.msra.mxu0 %v238
  %2324 = vmatprep.subr.bf16.mxu0 %v243
  %2325 = vmatpush1.bf16.msra.mxu0 %v242
  %2326 = vmatprep.subr.bf16.mxu0 %v247
  %2327 = vmatpush1.bf16.msra.mxu0 %v246
  %2328 = vmatprep.subr.bf16.mxu0 %v251
  %2329 = vmatpush1.bf16.msra.mxu0 %v250
  %2330 = vmatprep.subr.bf16.mxu0 %v255
  %2331 = vmatpush1.bf16.msra.mxu0 %v254
  %2332 = vmatprep.subr.bf16.mxu0 %v259
  %2333 = vmatpush1.bf16.msra.mxu0 %v258
  %2334 = vmatprep.subr.bf16.mxu0 %v263
  %2335 = vmatpush1.bf16.msra.mxu0 %v262
  %2336 = vmatprep.subr.bf16.mxu0 %v267
  %2337 = vmatpush1.bf16.msra.mxu0 %v266
  %2338 = vmatprep.subr.bf16.mxu0 0
  %2339 = vmatpush1.bf16.msra.mxu0 0
  %2340 = vmatprep.subr.bf16.mxu0 0
  %2341 = vmatpush1.bf16.msra.mxu0 0
  %2342 = vmatprep.subr.bf16.mxu0 0
  %2343 = vmatpush1.bf16.msra.mxu0 0
  %2344 = vmatprep.subr.bf16.mxu0 0
  %2345 = vmatpush1.bf16.msra.mxu0 0
  %2346 = vmatprep.subr.bf16.mxu0 0
  %2347 = vmatpush1.bf16.msra.mxu0 0
  %2348 = vmatprep.subr.bf16.mxu0 0
  %2349 = vmatpush1.bf16.msra.mxu0 0
  %2350 = vmatprep.subr.bf16.mxu0 0
  %2351 = vmatpush1.bf16.msra.mxu0 0
  %2352 = vmatprep.subr.bf16.mxu0 0
  %2353 = vmatpush1.bf16.msra.mxu0 0
  %2354 = vmatprep.mubr.bf16.mxu0 0
  %2355 = vmatmul.mubr.bf16.gmra.mrb[0].mxu0 %v2280
  %v2356 = vpop.f32.mrb[0].mxu0
  %v2357 = vadd.f32 0.0, %v2356
  %v2358 = vpop.f32.mrb[0].mxu0
  %v2359 = vadd.f32 0.0, %v2358
  %v2360 = vpop.f32.mrb[0].mxu0
  %v2361 = vpop.f32.mrb[0].mxu0
  %2362 = vdwg.mxu0
  %v2363 = vadd.f32 %v2276, %v2316
  %v2364 = vadd.f32 %v2277, %v2318
  %v2365 = vadd.f32 %v2278, %v2357
  %v2366 = vadd.f32 %v2279, %v2359
  %v2367 = vld [vmem:[%s49] sm:$0xff]
  %v2368 = vld [vmem:[%s49 + $0x8] sm:$0xff]
  %v2369 = vunpack.c.l.bf16 %v2367
  %v2370 = vunpack.c.h.bf16 %v2367
  %v2371 = vunpack.c.l.bf16 %v2368
  %v2372 = vunpack.c.h.bf16 %v2368
  %v2373 = vld [vmem:[#allocation4] sm:$0xf]
  %2374 = vmatprep.subr.bf16.mxu0 %v491
  %2375 = vmatpush1.bf16.msra.mxu0 %v490
  %2376 = vmatprep.subr.bf16.mxu0 %v495
  %2377 = vmatpush1.bf16.msra.mxu0 %v494
  %2378 = vmatprep.subr.bf16.mxu0 %v499
  %2379 = vmatpush1.bf16.msra.mxu0 %v498
  %2380 = vmatprep.subr.bf16.mxu0 %v503
  %2381 = vmatpush1.bf16.msra.mxu0 %v502
  %2382 = vmatprep.subr.bf16.mxu0 %v507
  %2383 = vmatpush1.bf16.msra.mxu0 %v506
  %2384 = vmatprep.subr.bf16.mxu0 %v511
  %2385 = vmatpush1.bf16.msra.mxu0 %v510
  %2386 = vmatprep.subr.bf16.mxu0 %v515
  %2387 = vmatpush1.bf16.msra.mxu0 %v514
  %2388 = vmatprep.subr.bf16.mxu0 %v519
  %2389 = vmatpush1.bf16.msra.mxu0 %v518
  %2390 = vmatprep.subr.bf16.mxu0 0
  %2391 = vmatpush1.bf16.msra.mxu0 0
  %2392 = vmatprep.subr.bf16.mxu0 0
  %2393 = vmatpush1.bf16.msra.mxu0 0
  %2394 = vmatprep.subr.bf16.mxu0 0
  %2395 = vmatpush1.bf16.msra.mxu0 0
  %2396 = vmatprep.subr.bf16.mxu0 0
  %2397 = vmatpush1.bf16.msra.mxu0 0
  %2398 = vmatprep.subr.bf16.mxu0 0
  %2399 = vmatpush1.bf16.msra.mxu0 0
  %2400 = vmatprep.subr.bf16.mxu0 0
  %2401 = vmatpush1.bf16.msra.mxu0 0
  %2402 = vmatprep.subr.bf16.mxu0 0
  %2403 = vmatpush1.bf16.msra.mxu0 0
  %2404 = vmatprep.subr.bf16.mxu0 0
  %2405 = vmatpush1.bf16.msra.mxu0 0
  %2406 = vmatprep.mubr.bf16.mxu0 0
  %2407 = vmatmul.mubr.bf16.gmra.mrb[0].mxu0 %v2373
  %v2408 = vpop.f32.mrb[0].mxu0
  %v2409 = vadd.f32 0.0, %v2408
  %v2410 = vpop.f32.mrb[0].mxu0
  %v2411 = vadd.f32 0.0, %v2410
  %v2412 = vpop.f32.mrb[0].mxu0
  %v2413 = vpop.f32.mrb[0].mxu0
  %2414 = vdwg.mxu0
  %2415 = vmatprep.subr.bf16.mxu0 %v493
  %2416 = vmatpush1.bf16.msra.mxu0 %v492
  %2417 = vmatprep.subr.bf16.mxu0 %v497
  %2418 = vmatpush1.bf16.msra.mxu0 %v496
  %2419 = vmatprep.subr.bf16.mxu0 %v501
  %2420 = vmatpush1.bf16.msra.mxu0 %v500
  %2421 = vmatprep.subr.bf16.mxu0 %v505
  %2422 = vmatpush1.bf16.msra.mxu0 %v504
  %2423 = vmatprep.subr.bf16.mxu0 %v509
  %2424 = vmatpush1.bf16.msra.mxu0 %v508
  %2425 = vmatprep.subr.bf16.mxu0 %v513
  %2426 = vmatpush1.bf16.msra.mxu0 %v512
  %2427 = vmatprep.subr.bf16.mxu0 %v517
  %2428 = vmatpush1.bf16.msra.mxu0 %v516
  %2429 = vmatprep.subr.bf16.mxu0 %v521
  %2430 = vmatpush1.bf16.msra.mxu0 %v520
  %2431 = vmatprep.subr.bf16.mxu0 0
  %2432 = vmatpush1.bf16.msra.mxu0 0
  %2433 = vmatprep.subr.bf16.mxu0 0
  %2434 = vmatpush1.bf16.msra.mxu0 0
  %2435 = vmatprep.subr.bf16.mxu0 0
  %2436 = vmatpush1.bf16.msra.mxu0 0
  %2437 = vmatprep.subr.bf16.mxu0 0
  %2438 = vmatpush1.bf16.msra.mxu0 0
  %2439 = vmatprep.subr.bf16.mxu0 0
  %2440 = vmatpush1.bf16.msra.mxu0 0
  %2441 = vmatprep.subr.bf16.mxu0 0
  %2442 = vmatpush1.bf16.msra.mxu0 0
  %2443 = vmatprep.subr.bf16.mxu0 0
  %2444 = vmatpush1.bf16.msra.mxu0 0
  %2445 = vmatprep.subr.bf16.mxu0 0
  %2446 = vmatpush1.bf16.msra.mxu0 0
  %2447 = vmatprep.mubr.bf16.mxu0 0
  %2448 = vmatmul.mubr.bf16.gmra.mrb[0].mxu0 %v2373
  %v2449 = vpop.f32.mrb[0].mxu0
  %v2450 = vadd.f32 0.0, %v2449
  %v2451 = vpop.f32.mrb[0].mxu0
  %v2452 = vadd.f32 0.0, %v2451
  %v2453 = vpop.f32.mrb[0].mxu0
  %v2454 = vpop.f32.mrb[0].mxu0
  %2455 = vdwg.mxu0
  %v2456 = vadd.f32 %v2369, %v2409
  %v2457 = vadd.f32 %v2370, %v2411
  %v2458 = vadd.f32 %v2371, %v2450
  %v2459 = vadd.f32 %v2372, %v2452
  %v2460 = vld [vmem:[#allocation3] sm:$0xff]
  %v2461 = vxor.u32 %v2363, 2147483648
  %v2462 = vmul.f32 %v2461, 1.442695
  %v2463 = vpow.pop %v2462
  %v2464 = vadd.f32 %v2463, 1.0
  %v2465 = vrcp.pop %v2464
  %v2466 = vmul.f32 1.0, %v2465
  %v2467 = vxor.u32 %v2364, 2147483648
  %v2468 = vmul.f32 %v2467, 1.442695
  %v2469 = vpow.pop %v2468
  %v2470 = vadd.f32 %v2469, 1.0
  %v2471 = vrcp.pop %v2470
  %v2472 = vmul.f32 1.0, %v2471
  %v2473 = vtanh.pop %v2365
  %v2474 = vxor.u32 %v2366, 2147483648
  %v2475 = vmul.f32 %v2474, 1.442695
  %v2476 = vpow.pop %v2475
  %v2477 = vadd.f32 %v2476, 1.0
  %v2478 = vrcp.pop %v2477
  %v2479 = vmul.f32 1.0, %v2478
  %v2480 = vmul.f32 %v2472, %v2460
  %v2481 = vmul.f32 %v2466, %v2473
  %v2482 = vadd.f32 %v2480, %v2481
  %v2483 = vtanh.pop %v2482
  %v2484 = vmul.f32 %v2479, %v2483
  %v2485 = vld [vmem:[#allocation5] sm:$0xff]
  %v2486 = vxor.u32 %v2456, 2147483648
  %v2487 = vmul.f32 %v2486, 1.442695
  %v2488 = vpow.pop %v2487
  %v2489 = vadd.f32 %v2488, 1.0
  %v2490 = vrcp.pop %v2489
  %v2491 = vmul.f32 1.0, %v2490
  %v2492 = vxor.u32 %v2457, 2147483648
  %v2493 = vmul.f32 %v2492, 1.442695
  %v2494 = vpow.pop %v2493
  %v2495 = vadd.f32 %v2494, 1.0
  %v2496 = vrcp.pop %v2495
  %v2497 = vmul.f32 1.0, %v2496
  %v2498 = vtanh.pop %v2458
  %v2499 = vxor.u32 %v2459, 2147483648
  %v2500 = vmul.f32 %v2499, 1.442695
  %v2501 = vpow.pop %v2500
  %v2502 = vadd.f32 %v2501, 1.0
  %v2503 = vrcp.pop %v2502
  %v2504 = vmul.f32 1.0, %v2503
  %v2505 = vmul.f32 %v2497, %v2485
  %v2506 = vmul.f32 %v2491, %v2498
  %v2507 = vadd.f32 %v2505, %v2506
  %v2508 = vtanh.pop %v2507
  %v2509 = vmul.f32 %v2504, %v2508
  %v2510 = vpack.c.bf16 %v2484, %v2484
  %2511 = vst [vmem:[#allocation2] sm:$0xf] %v2510
  %2512 = vst [vmem:[#allocation3] sm:$0xff] %v2482
  %v2513 = vpack.c.bf16 %v2509, %v2509
  %2514 = vst [vmem:[#allocation4] sm:$0xf] %v2513
  %2515 = vst [vmem:[#allocation5] sm:$0xff] %v2507
  %s2516 = scalar_lea.vmem %s4, 56
  %2517 = vst [vmem:[%s2516] sm:$0xff] %v2484
  %2518 = vst [vmem:[%s57] sm:$0xff] %v2509
  %s2519 = sadd.s32 %s699, 7
  %p2520 = scmp.eq.s32.totalorder %s2519, 7
  // Predicated region
  $region78: #{bidirectional_rnn.2} parent=0 // pred_check
    %p2521 = pneg %p2520
  $region79: #{bidirectional_rnn.2} parent=0 // pred_check_branch
    %2523 = sbr.rel (%p2521) target = $region81
  $region80: #{bidirectional_rnn.2} parent=0 // pred_region
    %2524 = vst [vmem:[%s6] sm:$0xff] %v2482
  $region81: #{bidirectional_rnn.2} parent=0 // pred_fallthru
    _
  %p2525 = scmp.eq.s32.totalorder %s701, 7
  // Predicated region
  $region82: #{bidirectional_rnn.2} parent=0 // pred_check
    %p2526 = pneg %p2525
  $region83: #{bidirectional_rnn.2} parent=0 // pred_check_branch
    %2528 = sbr.rel (%p2526) target = $region85
  $region84: #{bidirectional_rnn.2} parent=0 // pred_region
    %2529 = vst [vmem:[%s7] sm:$0xff] %v2507
  $region85: #{bidirectional_rnn.2} parent=0 // pred_fallthru
    _
  %s2530 = ssub.s32 0, 0
  %s2531 = smul.u32 8, %s2530
  %p2532 = scmp.lt.s32.totalorder %s2531, 7
  %s2533 = scalar_select %p2532, %s2531, 7
  %s2534 = smul.addr %s2533, 8
  %s2535 = scalar_lea.vmem %s5, %s2534
  // Predicated region
  $region86: #{bidirectional_rnn.2} parent=0 // pred_check
    _
  $region87: #{bidirectional_rnn.2} parent=0 // pred_check_branch
    %2537 = sbr.rel (0) target = $region89
  $region88: #{bidirectional_rnn.2} parent=0 // pred_region
    _
  $region89: #{bidirectional_rnn.2} parent=0 // pred_fallthru
    _
  // Predicated region
  $region90: #{bidirectional_rnn.2} parent=0 // pred_check
    _
  $region91: #{bidirectional_rnn.2} parent=0 // pred_check_branch
    %2539 = sbr.rel (0) target = $region93
  $region92: #{bidirectional_rnn.2} parent=0 // pred_region
    %s2540 = ssub.s32 0, 0
    %s2541 = smul.u32 8, %s2540
  $region93: #{bidirectional_rnn.2} parent=0 // pred_fallthru
    _
  // Predicated region
  $region94: #{bidirectional_rnn.2} parent=0 // pred_check
    _
  $region95: #{bidirectional_rnn.2} parent=0 // pred_check_branch
    %2543 = sbr.rel (0) target = $region97
  $region96: #{bidirectional_rnn.2} parent=0 // pred_region
    _
  $region97: #{bidirectional_rnn.2} parent=0 // pred_fallthru
    _
  // Predicated region
  $region98: #{bidirectional_rnn.2} parent=0 // pred_check
    _
  $region99: #{bidirectional_rnn.2} parent=0 // pred_check_branch
    %2545 = sbr.rel (0) target = $region101
  $region100: #{bidirectional_rnn.2} parent=0 // pred_region
    _
  $region101: #{bidirectional_rnn.2} parent=0 // pred_fallthru
    _
  // Predicated region
  $region102: #{bidirectional_rnn.2} parent=0 // pred_check
    _
  $region103: #{bidirectional_rnn.2} parent=0 // pred_check_branch
    %2547 = sbr.rel (0) target = $region105
  $region104: #{bidirectional_rnn.2} parent=0 // pred_region
    _
  $region105: #{bidirectional_rnn.2} parent=0 // pred_fallthru
    _
  // Predicated region
  $region106: #{bidirectional_rnn.2} parent=0 // pred_check
    _
  $region107: #{bidirectional_rnn.2} parent=0 // pred_check_branch
    %2549 = sbr.rel (0) target = $region109
  $region108: #{bidirectional_rnn.2} parent=0 // pred_region
    %s2550 = ssub.s32 0, 0
    %s2551 = smul.u32 8, %s2550
    %p2552 = scmp.lt.s32.totalorder %s2551, 7
    %s2553 = scalar_select %p2552, %s2551, 7
    %s2554 = smul.addr %s2553, 8
    %s2555 = scalar_lea.vmem %s5, %s2554
  $region109: #{bidirectional_rnn.2} parent=0 // pred_fallthru
    _
  // Predicated region
  $region110: #{bidirectional_rnn.2} parent=0 // pred_check
    _
  $region111: #{bidirectional_rnn.2} parent=0 // pred_check_branch
    %2557 = sbr.rel (0) target = $region113
  $region112: #{bidirectional_rnn.2} parent=0 // pred_region
    _
  $region113: #{bidirectional_rnn.2} parent=0 // pred_fallthru
    _
  // Predicated region
  $region114: #{bidirectional_rnn.2} parent=0 // pred_check
    _
  $region115: #{bidirectional_rnn.2} parent=0 // pred_check_branch
    %2559 = sbr.rel (0) target = $region117
  $region116: #{bidirectional_rnn.2} parent=0 // pred_region
    _
  $region117: #{bidirectional_rnn.2} parent=0 // pred_fallthru
    _

</llo_original>
